<compile_context>
chip_gen: v7x
topology: tpu7x:2x2x1
jax: 0.10.0
libtpu: 0.0.40
codegen_flags: <defaults>
</compile_context>

<pallas_src>
import math

import jax
import jax.numpy as jnp
from jax.experimental import pallas as pl
from jax.experimental.pallas import tpu as pltpu


# ----------------------------------------------------------------------------
# Fused kernel
# ----------------------------------------------------------------------------
def _layernorm(x, g, b, eps=1e-5):
    mu = jnp.mean(x, axis=-1, keepdims=True)
    var = jnp.mean((x - mu) ** 2, axis=-1, keepdims=True)
    return (x - mu) * jax.lax.rsqrt(var + eps) * g + b


def _make_fused_kernel(cfg):
    d = cfg["d_model"]
    n_heads = cfg["n_heads"]
    nb = cfg["num_blocks"]
    dh = d // n_heads
    scale = 1.0 / math.sqrt(dh)
    bf16 = jnp.bfloat16
    f32 = jnp.float32

    def kernel(vp_ref, tp_ref, pos_ref, base_ref,
               vew_ref, veb_ref, tew_ref, teb_ref, png_ref, pnb_ref,
               wqkv_ref, bqkv_ref, wo_ref, bo_ref,
               l1g_ref, l1b_ref, w1_ref, b1_ref, w2_ref, b2_ref,
               l2g_ref, l2b_ref,
               outw_ref, outb_ref, endw_ref, endb_ref,
               o_ref):
        # ---- value + time-feature embedding, positional add, pre-norm -------
        # TODO(synk): temporal_embedding source unavailable; segment linear +
        #             mean-pooled time-feature linear assumed.
        vp = vp_ref[0].astype(bf16)                                  # (P, seg)
        tp = tp_ref[0].astype(bf16)                                  # (P, Ft)
        emb = jnp.dot(vp, vew_ref[...], preferred_element_type=f32) + veb_ref[...]
        temb = jnp.dot(tp, tew_ref[...], preferred_element_type=f32) + teb_ref[...]
        x = emb + temb + pos_ref[0]                                  # (P, d) f32
        x = _layernorm(x, png_ref[...], pnb_ref[...])

        # ---- encoder blocks (all weights VMEM-resident) ----------------------
        # TODO(synk): `syns` graph attention over edge_index / `factor` router
        #             not implemented (Encoder source missing).
        enc = [x]
        for blk in range(nb):
            xb = x.astype(bf16)
            qkv = (jnp.dot(xb, wqkv_ref[blk], preferred_element_type=f32)
                   + bqkv_ref[blk])                                   # (P, 3d)
            q = qkv[:, :d]
            k = qkv[:, d:2 * d]
            v = qkv[:, 2 * d:]

            head_outs = []
            for hh in range(n_heads):
                lo, hi = hh * dh, (hh + 1) * dh
                qh, kh, vh = q[:, lo:hi], k[:, lo:hi], v[:, lo:hi]
                # scores = qh @ kh.T (tiny; f32, softmax in f32)
                s = jax.lax.dot_general(
                    qh, kh, (((1,), (1,)), ((), ())),
                    preferred_element_type=f32) * scale               # (P, P)
                s = s - jnp.max(s, axis=-1, keepdims=True)
                e = jnp.exp(s)
                p_attn = e / jnp.sum(e, axis=-1, keepdims=True)
                head_outs.append(
                    jnp.dot(p_attn, vh, preferred_element_type=f32))  # (P, dh)
            attn = jnp.concatenate(head_outs, axis=-1)                # (P, d)

            o = (jnp.dot(attn.astype(bf16), wo_ref[blk],
                         preferred_element_type=f32) + bo_ref[blk])
            y = _layernorm(x + o, l1g_ref[blk], l1b_ref[blk])

            # FFN (ReLU assumed for the unknown Encoder FFN)
            h = (jnp.dot(y.astype(bf16), w1_ref[blk],
                         preferred_element_type=f32) + b1_ref[blk])
            h = jnp.maximum(h, 0.0)
            f = (jnp.dot(h.astype(bf16), w2_ref[blk],
                         preferred_element_type=f32) + b2_ref[blk])
            x = _layernorm(y + f, l2g_ref[blk], l2b_ref[blk])
            enc.append(x)

        # ---- stacked output heads + end projection + base --------------------
        enc_cat = jnp.concatenate(enc, axis=0).astype(bf16)   # ((nb+1)*P, d)
        out_pre = (jnp.dot(outw_ref[...], enc_cat,
                           preferred_element_type=f32) + outb_ref[...])  # (out_len, d)
        res = jnp.dot(out_pre.astype(bf16), endw_ref[...],
                      preferred_element_type=f32)                          # (out_len, 1)
        res = res + endb_ref[...] + base_ref[0]
        o_ref[0] = res.astype(o_ref.dtype)

    return kernel


# ----------------------------------------------------------------------------
# Forward (one pallas_call; everything else is one-time tiny JAX glue)
# ----------------------------------------------------------------------------
def ltb_forward(params, x_seq, cfg):
    b, nn, in_len, _ = x_seq.shape
    seg_len, stride = cfg["seg_len"], cfg["stride"]
    out_len, d = cfg["out_len"], cfg["d_model"]

    value = x_seq[..., 0]                            # (B, Nn, L)
    time_seq = x_seq[..., 1:]                        # (B, Nn, L, Ft)
    value = jnp.transpose(value, (0, 2, 1))          # (B, L, Nn)  == permute(0,2,1)

    # base = x_seq.mean(dim=1, keepdim=True).permute(0,2,1).unsqueeze(-1)
    base = jnp.mean(value, axis=1)                   # (B, Nn)

    pad_len = 0
    if (in_len - seg_len) % stride != 0:
        pad_len = stride - (in_len - seg_len) % stride
        value = jnp.concatenate(
            [jnp.broadcast_to(value[:, -1:, :], (b, pad_len, nn)), value], axis=1)
        ftp = time_seq.shape[-1]
        time_seq = jnp.concatenate(
            [jnp.broadcast_to(time_seq[:, :, -1:, :], (b, nn, pad_len, ftp)), time_seq],
            axis=2)
    lp = in_len + pad_len
    pn = (lp - seg_len) // stride + 1
    ft = time_seq.shape[-1]
    g = b * nn                                       # grid extent (even -> v7x TCs)

    # patch extraction / per-group packing (one-time glue, tiny)
    idx = (jnp.arange(pn) * stride)[:, None] + jnp.arange(seg_len)[None, :]
    vp = value[:, idx, :]                            # (B, P, seg, Nn)
    vp = jnp.transpose(vp, (0, 3, 1, 2)).reshape(g, pn, seg_len)
    tp = jnp.mean(time_seq[:, :, idx, :], axis=3).reshape(g, pn, ft)
    pos = jnp.broadcast_to(params["pos_emb"], (b, nn, pn, d)).reshape(g, pn, d)
    base_g = base.reshape(g, 1, 1)

    kernel = _make_fused_kernel(cfg)

    def _gspec(tail):
        nt = len(tail)
        return pl.BlockSpec((1,) + tuple(tail), lambda i, _n=nt: (i,) + (0,) * _n)

    def _wspec(arr):
        nd = arr.ndim
        return pl.BlockSpec(arr.shape, lambda i, _n=nd: (0,) * _n)

    weights = (
        params["val_emb_w"], params["val_emb_b"],
        params["time_emb_w"], params["time_emb_b"],
        params["pre_norm_g"], params["pre_norm_b"],
        params["wqkv"], params["bqkv"], params["wo"], params["bo"],
        params["ln1_g"], params["ln1_b"],
        params["w1"], params["b1"], params["w2"], params["b2"],
        params["ln2_g"], params["ln2_b"],
        params["out_wT"], params["out_bsum"],
        params["end_w"], params["end_b"],
    )

    in_specs = [
        _gspec((pn, seg_len)),
        _gspec((pn, ft)),
        _gspec((pn, d)),
        _gspec((1, 1)),
    ] + [_wspec(w) for w in weights]

    out = pl.pallas_call(
        kernel,
        out_shape=jax.ShapeDtypeStruct((g, out_len, 1), jnp.float32),
        grid=(g,),
        in_specs=in_specs,
        out_specs=_gspec((out_len, 1)),
        compiler_params=pltpu.CompilerParams(dimension_semantics=("parallel",)),
    )(vp, tp, pos, base_g, *weights)

    return out.reshape(b, nn, out_len, 1)


# ----------------------------------------------------------------------------
# Deterministic parameter init (fused / stacked / bf16-weight layout)
# ----------------------------------------------------------------------------
def init_params(key, num_nodes, patch_num, cfg, time_feats):
    d, dff = cfg["d_model"], cfg["d_ff"]
    nb = cfg["num_blocks"]
    seg_len, out_len = cfg["seg_len"], cfg["out_len"]
    keys = iter(jax.random.split(key, 64))

    def nrm(shape, dtype=jnp.bfloat16, scale=0.02):
        return (scale * jax.random.normal(next(keys), shape, jnp.float32)).astype(dtype)

    return dict(
        # temporal embedding (value segments + time features)
        val_emb_w=nrm((seg_len, d)),
        val_emb_b=jnp.zeros((1, d), jnp.float32),
        time_emb_w=nrm((time_feats, d)),
        time_emb_b=jnp.zeros((1, d), jnp.float32),
        pos_emb=nrm((1, num_nodes, patch_num, d), jnp.float32),
        pre_norm_g=jnp.ones((1, d), jnp.float32),
        pre_norm_b=jnp.zeros((1, d), jnp.float32),
        # encoder blocks stacked along a leading num_blocks axis, QKV fused
        wqkv=nrm((nb, d, 3 * d)),
        bqkv=jnp.zeros((nb, 1, 3 * d), jnp.float32),
        wo=nrm((nb, d, d)),
        bo=jnp.zeros((nb, 1, d), jnp.float32),
        ln1_g=jnp.ones((nb, 1, d), jnp.float32),
        ln1_b=jnp.zeros((nb, 1, d), jnp.float32),
        w1=nrm((nb, d, dff)),
        b1=jnp.zeros((nb, 1, dff), jnp.float32),
        w2=nrm((nb, dff, d)),
        b2=jnp.zeros((nb, 1, d), jnp.float32),
        ln2_g=jnp.ones((nb, 1, d), jnp.float32),
        ln2_b=jnp.zeros((nb, 1, d), jnp.float32),
        # (num_blocks+1) output heads, pre-transposed and concatenated along P
        out_wT=nrm((out_len, (nb + 1) * patch_num)),
        out_bsum=jnp.zeros((out_len, 1), jnp.float32),
        # end head
        end_w=nrm((d, 1)),
        end_b=jnp.zeros((1, 1), jnp.float32),
    )


# ----------------------------------------------------------------------------
if __name__ == "__main__":
    cfg = dict(in_len=12, out_len=12, seg_len=4, stride=1,
               d_model=32, d_ff=64, n_heads=4, num_blocks=2)

    # synthetic graph: num_nodes = edge_index.max() + 1 = 4
    edge_index = jnp.array([[0, 1, 2, 3, 0], [1, 2, 3, 0, 2]], dtype=jnp.int32)
    num_nodes = int(edge_index.max()) + 1

    B, time_feats = 2, 3
    pad_len = 0
    if (cfg["in_len"] - cfg["seg_len"]) % cfg["stride"] != 0:
        pad_len = cfg["stride"] - (cfg["in_len"] - cfg["seg_len"]) % cfg["stride"]
    patch_num = (cfg["in_len"] + pad_len - cfg["seg_len"]) // cfg["stride"] + 1

    key = jax.random.PRNGKey(0)
    k_in, k_par = jax.random.split(key)
    x_seq = jax.random.normal(k_in, (B, num_nodes, cfg["in_len"], 1 + time_feats),
                              dtype=jnp.float32)
    params = init_params(k_par, num_nodes, patch_num, cfg, time_feats)

    fwd = jax.jit(lambda p, x: ltb_forward(p, x, cfg))
    out = fwd(params, x_seq)
    out = jax.block_until_ready(out)
    assert out.shape == (B, num_nodes, cfg["out_len"], 1), out.shape
    assert bool(jnp.all(jnp.isfinite(out)))
    print("KERNEL_OK")
</pallas_src>

<mosaic_0001>
module attributes {stable_mosaic.version = 11 : i64} {
  func.func @kernel(%arg0: i32, %arg1: memref<1x9x4xf32, #tpu.memory_space<vmem>>, %arg2: memref<1x9x3xf32, #tpu.memory_space<vmem>>, %arg3: memref<1x9x32xf32, #tpu.memory_space<vmem>>, %arg4: memref<1x1x1xf32, #tpu.memory_space<vmem>>, %arg5: memref<4x32xbf16, #tpu.memory_space<vmem>>, %arg6: memref<1x32xf32, #tpu.memory_space<vmem>>, %arg7: memref<3x32xbf16, #tpu.memory_space<vmem>>, %arg8: memref<1x32xf32, #tpu.memory_space<vmem>>, %arg9: memref<1x32xf32, #tpu.memory_space<vmem>>, %arg10: memref<1x32xf32, #tpu.memory_space<vmem>>, %arg11: memref<2x32x96xbf16, #tpu.memory_space<vmem>>, %arg12: memref<2x1x96xf32, #tpu.memory_space<vmem>>, %arg13: memref<2x32x32xbf16, #tpu.memory_space<vmem>>, %arg14: memref<2x1x32xf32, #tpu.memory_space<vmem>>, %arg15: memref<2x1x32xf32, #tpu.memory_space<vmem>>, %arg16: memref<2x1x32xf32, #tpu.memory_space<vmem>>, %arg17: memref<2x32x64xbf16, #tpu.memory_space<vmem>>, %arg18: memref<2x1x64xf32, #tpu.memory_space<vmem>>, %arg19: memref<2x64x32xbf16, #tpu.memory_space<vmem>>, %arg20: memref<2x1x32xf32, #tpu.memory_space<vmem>>, %arg21: memref<2x1x32xf32, #tpu.memory_space<vmem>>, %arg22: memref<2x1x32xf32, #tpu.memory_space<vmem>>, %arg23: memref<12x27xbf16, #tpu.memory_space<vmem>>, %arg24: memref<12x1xf32, #tpu.memory_space<vmem>>, %arg25: memref<32x1xbf16, #tpu.memory_space<vmem>>, %arg26: memref<1x1xf32, #tpu.memory_space<vmem>>, %arg27: memref<1x12x1xf32, #tpu.memory_space<vmem>>) attributes {dimension_semantics = [#tpu.dimension_semantics<parallel>], iteration_bounds = array<i64: 8>, scalar_prefetch = 0 : i64, scratch_operands = 0 : i64, tpu.core_type = #tpu.core_type<tc>, window_params = [{transform_indices = @transform_0, window_bounds = array<i64: 1, 9, 4>}, {transform_indices = @transform_1, window_bounds = array<i64: 1, 9, 3>}, {transform_indices = @transform_2, window_bounds = array<i64: 1, 9, 32>}, {transform_indices = @transform_3, window_bounds = array<i64: 1, 1, 1>}, {pipeline_mode = #tpu.pipeline_mode<synchronous>, transform_indices = @transform_4, window_bounds = array<i64: 4, 32>}, {pipeline_mode = #tpu.pipeline_mode<synchronous>, transform_indices = @transform_5, window_bounds = array<i64: 1, 32>}, {pipeline_mode = #tpu.pipeline_mode<synchronous>, transform_indices = @transform_6, window_bounds = array<i64: 3, 32>}, {pipeline_mode = #tpu.pipeline_mode<synchronous>, transform_indices = @transform_7, window_bounds = array<i64: 1, 32>}, {pipeline_mode = #tpu.pipeline_mode<synchronous>, transform_indices = @transform_8, window_bounds = array<i64: 1, 32>}, {pipeline_mode = #tpu.pipeline_mode<synchronous>, transform_indices = @transform_9, window_bounds = array<i64: 1, 32>}, {pipeline_mode = #tpu.pipeline_mode<synchronous>, transform_indices = @transform_10, window_bounds = array<i64: 2, 32, 96>}, {pipeline_mode = #tpu.pipeline_mode<synchronous>, transform_indices = @transform_11, window_bounds = array<i64: 2, 1, 96>}, {pipeline_mode = #tpu.pipeline_mode<synchronous>, transform_indices = @transform_12, window_bounds = array<i64: 2, 32, 32>}, {pipeline_mode = #tpu.pipeline_mode<synchronous>, transform_indices = @transform_13, window_bounds = array<i64: 2, 1, 32>}, {pipeline_mode = #tpu.pipeline_mode<synchronous>, transform_indices = @transform_14, window_bounds = array<i64: 2, 1, 32>}, {pipeline_mode = #tpu.pipeline_mode<synchronous>, transform_indices = @transform_15, window_bounds = array<i64: 2, 1, 32>}, {pipeline_mode = #tpu.pipeline_mode<synchronous>, transform_indices = @transform_16, window_bounds = array<i64: 2, 32, 64>}, {pipeline_mode = #tpu.pipeline_mode<synchronous>, transform_indices = @transform_17, window_bounds = array<i64: 2, 1, 64>}, {pipeline_mode = #tpu.pipeline_mode<synchronous>, transform_indices = @transform_18, window_bounds = array<i64: 2, 64, 32>}, {pipeline_mode = #tpu.pipeline_mode<synchronous>, transform_indices = @transform_19, window_bounds = array<i64: 2, 1, 32>}, {pipeline_mode = #tpu.pipeline_mode<synchronous>, transform_indices = @transform_20, window_bounds = array<i64: 2, 1, 32>}, {pipeline_mode = #tpu.pipeline_mode<synchronous>, transform_indices = @transform_21, window_bounds = array<i64: 2, 1, 32>}, {pipeline_mode = #tpu.pipeline_mode<synchronous>, transform_indices = @transform_22, window_bounds = array<i64: 12, 27>}, {pipeline_mode = #tpu.pipeline_mode<synchronous>, transform_indices = @transform_23, window_bounds = array<i64: 12, 1>}, {pipeline_mode = #tpu.pipeline_mode<synchronous>, transform_indices = @transform_24, window_bounds = array<i64: 32, 1>}, {pipeline_mode = #tpu.pipeline_mode<synchronous>, transform_indices = @transform_25, window_bounds = array<i64: 1, 1>}, {transform_indices = @transform_26, window_bounds = array<i64: 1, 12, 1>}]} {
    %c0 = arith.constant 0 : index
    %c0_0 = arith.constant 0 : index
    %c0_1 = arith.constant 0 : index
    %0 = vector.load %arg1[%c0, %c0_0, %c0_1] : memref<1x9x4xf32, #tpu.memory_space<vmem>>, vector<1x9x4xf32>
    %1 = vector.shape_cast %0 : vector<1x9x4xf32> to vector<9x4xf32>
    %2 = arith.truncf %1 : vector<9x4xf32> to vector<9x4xbf16>
    %c0_2 = arith.constant 0 : index
    %c0_3 = arith.constant 0 : index
    %c0_4 = arith.constant 0 : index
    %3 = vector.load %arg2[%c0_2, %c0_3, %c0_4] : memref<1x9x3xf32, #tpu.memory_space<vmem>>, vector<1x9x3xf32>
    %4 = vector.shape_cast %3 : vector<1x9x3xf32> to vector<9x3xf32>
    %5 = arith.truncf %4 : vector<9x3xf32> to vector<9x3xbf16>
    %c0_5 = arith.constant 0 : index
    %c0_6 = arith.constant 0 : index
    %6 = vector.load %arg5[%c0_5, %c0_6] : memref<4x32xbf16, #tpu.memory_space<vmem>>, vector<4x32xbf16>
    %cst = arith.constant dense<0.000000e+00> : vector<9x32xf32>
    %7 = tpu.matmul %2, %6, %cst {dimension_numbers = #tpu.dot_dimension_numbers<[1], [0], [0], [1], [0, 0, 1, 1], [], []>} : vector<9x4xbf16>, vector<4x32xbf16>, vector<9x32xf32> -> vector<9x32xf32>
    %c0_7 = arith.constant 0 : index
    %c0_8 = arith.constant 0 : index
    %8 = vector.load %arg6[%c0_7, %c0_8] : memref<1x32xf32, #tpu.memory_space<vmem>>, vector<1x32xf32>
    %9 = vector.broadcast %8 : vector<1x32xf32> to vector<9x32xf32>
    %10 = arith.addf %7, %9 : vector<9x32xf32>
    %c0_9 = arith.constant 0 : index
    %c0_10 = arith.constant 0 : index
    %11 = vector.load %arg7[%c0_9, %c0_10] : memref<3x32xbf16, #tpu.memory_space<vmem>>, vector<3x32xbf16>
    %cst_11 = arith.constant dense<0.000000e+00> : vector<9x32xf32>
    %12 = tpu.matmul %5, %11, %cst_11 {dimension_numbers = #tpu.dot_dimension_numbers<[1], [0], [0], [1], [0, 0, 1, 1], [], []>} : vector<9x3xbf16>, vector<3x32xbf16>, vector<9x32xf32> -> vector<9x32xf32>
    %c0_12 = arith.constant 0 : index
    %c0_13 = arith.constant 0 : index
    %13 = vector.load %arg8[%c0_12, %c0_13] : memref<1x32xf32, #tpu.memory_space<vmem>>, vector<1x32xf32>
    %14 = vector.broadcast %13 : vector<1x32xf32> to vector<9x32xf32>
    %15 = arith.addf %12, %14 : vector<9x32xf32>
    %16 = arith.addf %10, %15 : vector<9x32xf32>
    %c0_14 = arith.constant 0 : index
    %c0_15 = arith.constant 0 : index
    %c0_16 = arith.constant 0 : index
    %17 = vector.load %arg3[%c0_14, %c0_15, %c0_16] : memref<1x9x32xf32, #tpu.memory_space<vmem>>, vector<1x9x32xf32>
    %18 = vector.shape_cast %17 : vector<1x9x32xf32> to vector<9x32xf32>
    %19 = arith.addf %16, %18 : vector<9x32xf32>
    %c0_17 = arith.constant 0 : index
    %c0_18 = arith.constant 0 : index
    %20 = vector.load %arg9[%c0_17, %c0_18] : memref<1x32xf32, #tpu.memory_space<vmem>>, vector<1x32xf32>
    %c0_19 = arith.constant 0 : index
    %c0_20 = arith.constant 0 : index
    %21 = vector.load %arg10[%c0_19, %c0_20] : memref<1x32xf32, #tpu.memory_space<vmem>>, vector<1x32xf32>
    %cst_21 = arith.constant dense<0.000000e+00> : vector<9xf32>
    %22 = vector.multi_reduction <add>, %19, %cst_21 [1] : vector<9x32xf32> to vector<9xf32>
    %23 = vector.shape_cast %22 : vector<9xf32> to vector<9x1xf32>
    %cst_22 = arith.constant 3.200000e+01 : f32
    %24 = vector.broadcast %cst_22 : f32 to vector<9x1xf32>
    %25 = arith.divf %23, %24 : vector<9x1xf32>
    %26 = vector.broadcast %25 : vector<9x1xf32> to vector<9x32xf32>
    %27 = arith.subf %19, %26 : vector<9x32xf32>
    %28 = arith.mulf %27, %27 : vector<9x32xf32>
    %cst_23 = arith.constant dense<0.000000e+00> : vector<9xf32>
    %29 = vector.multi_reduction <add>, %28, %cst_23 [1] : vector<9x32xf32> to vector<9xf32>
    %30 = vector.shape_cast %29 : vector<9xf32> to vector<9x1xf32>
    %cst_24 = arith.constant 3.200000e+01 : f32
    %31 = vector.broadcast %cst_24 : f32 to vector<9x1xf32>
    %32 = arith.divf %30, %31 : vector<9x1xf32>
    %33 = vector.broadcast %25 : vector<9x1xf32> to vector<9x32xf32>
    %34 = arith.subf %19, %33 : vector<9x32xf32>
    %cst_25 = arith.constant 9.99999974E-6 : f32
    %35 = vector.broadcast %cst_25 : f32 to vector<9x1xf32>
    %36 = arith.addf %32, %35 : vector<9x1xf32>
    %37 = math.rsqrt %36 : vector<9x1xf32>
    %38 = vector.broadcast %37 : vector<9x1xf32> to vector<9x32xf32>
    %39 = arith.mulf %34, %38 : vector<9x32xf32>
    %40 = vector.broadcast %20 : vector<1x32xf32> to vector<9x32xf32>
    %41 = arith.mulf %39, %40 : vector<9x32xf32>
    %42 = vector.broadcast %21 : vector<1x32xf32> to vector<9x32xf32>
    %43 = arith.addf %41, %42 : vector<9x32xf32>
    %44 = arith.truncf %43 : vector<9x32xf32> to vector<9x32xbf16>
    %c0_26 = arith.constant 0 : index
    %c0_27 = arith.constant 0 : index
    %c0_28 = arith.constant 0 : index
    %45 = vector.load %arg11[%c0_26, %c0_27, %c0_28] : memref<2x32x96xbf16, #tpu.memory_space<vmem>>, vector<1x32x96xbf16>
    %46 = vector.shape_cast %45 : vector<1x32x96xbf16> to vector<32x96xbf16>
    %cst_29 = arith.constant dense<0.000000e+00> : vector<9x96xf32>
    %47 = tpu.matmul %44, %46, %cst_29 {dimension_numbers = #tpu.dot_dimension_numbers<[1], [0], [0], [1], [0, 0, 1, 1], [], []>} : vector<9x32xbf16>, vector<32x96xbf16>, vector<9x96xf32> -> vector<9x96xf32>
    %c0_30 = arith.constant 0 : index
    %c0_31 = arith.constant 0 : index
    %c0_32 = arith.constant 0 : index
    %48 = vector.load %arg12[%c0_30, %c0_31, %c0_32] : memref<2x1x96xf32, #tpu.memory_space<vmem>>, vector<1x1x96xf32>
    %49 = vector.shape_cast %48 : vector<1x1x96xf32> to vector<1x96xf32>
    %50 = vector.broadcast %49 : vector<1x96xf32> to vector<9x96xf32>
    %51 = arith.addf %47, %50 : vector<9x96xf32>
    %52 = vector.extract_strided_slice %51 {offsets = [0, 0], sizes = [9, 32], strides = [1, 1]} : vector<9x96xf32> to vector<9x32xf32>
    %53 = vector.extract_strided_slice %51 {offsets = [0, 32], sizes = [9, 32], strides = [1, 1]} : vector<9x96xf32> to vector<9x32xf32>
    %54 = vector.extract_strided_slice %51 {offsets = [0, 64], sizes = [9, 32], strides = [1, 1]} : vector<9x96xf32> to vector<9x32xf32>
    %55 = vector.extract_strided_slice %52 {offsets = [0, 0], sizes = [9, 8], strides = [1, 1]} : vector<9x32xf32> to vector<9x8xf32>
    %56 = vector.extract_strided_slice %53 {offsets = [0, 0], sizes = [9, 8], strides = [1, 1]} : vector<9x32xf32> to vector<9x8xf32>
    %57 = vector.extract_strided_slice %54 {offsets = [0, 0], sizes = [9, 8], strides = [1, 1]} : vector<9x32xf32> to vector<9x8xf32>
    %cst_33 = arith.constant dense<0.000000e+00> : vector<9x9xf32>
    %58 = tpu.matmul %55, %56, %cst_33 {dimension_numbers = #tpu.dot_dimension_numbers<[1], [1], [0], [0], [0, 0, 1, 0], [], []>} : vector<9x8xf32>, vector<9x8xf32>, vector<9x9xf32> -> vector<9x9xf32>
    %cst_34 = arith.constant 0.353553385 : f32
    %59 = vector.broadcast %cst_34 : f32 to vector<9x9xf32>
    %60 = arith.mulf %58, %59 : vector<9x9xf32>
    %cst_35 = arith.constant dense<0xFF800000> : vector<9xf32>
    %61 = vector.multi_reduction <maximumf>, %60, %cst_35 [1] : vector<9x9xf32> to vector<9xf32>
    %62 = vector.shape_cast %61 : vector<9xf32> to vector<9x1xf32>
    %63 = vector.broadcast %62 : vector<9x1xf32> to vector<9x9xf32>
    %64 = arith.subf %60, %63 : vector<9x9xf32>
    %65 = math.exp %64 : vector<9x9xf32>
    %cst_36 = arith.constant dense<0.000000e+00> : vector<9xf32>
    %66 = vector.multi_reduction <add>, %65, %cst_36 [1] : vector<9x9xf32> to vector<9xf32>
    %67 = vector.shape_cast %66 : vector<9xf32> to vector<9x1xf32>
    %68 = vector.broadcast %67 : vector<9x1xf32> to vector<9x9xf32>
    %69 = arith.divf %65, %68 : vector<9x9xf32>
    %cst_37 = arith.constant dense<0.000000e+00> : vector<9x8xf32>
    %70 = tpu.matmul %69, %57, %cst_37 {dimension_numbers = #tpu.dot_dimension_numbers<[1], [0], [0], [1], [0, 0, 1, 1], [], []>} : vector<9x9xf32>, vector<9x8xf32>, vector<9x8xf32> -> vector<9x8xf32>
    %71 = vector.extract_strided_slice %52 {offsets = [0, 8], sizes = [9, 8], strides = [1, 1]} : vector<9x32xf32> to vector<9x8xf32>
    %72 = vector.extract_strided_slice %53 {offsets = [0, 8], sizes = [9, 8], strides = [1, 1]} : vector<9x32xf32> to vector<9x8xf32>
    %73 = vector.extract_strided_slice %54 {offsets = [0, 8], sizes = [9, 8], strides = [1, 1]} : vector<9x32xf32> to vector<9x8xf32>
    %cst_38 = arith.constant dense<0.000000e+00> : vector<9x9xf32>
    %74 = tpu.matmul %71, %72, %cst_38 {dimension_numbers = #tpu.dot_dimension_numbers<[1], [1], [0], [0], [0, 0, 1, 0], [], []>} : vector<9x8xf32>, vector<9x8xf32>, vector<9x9xf32> -> vector<9x9xf32>
    %cst_39 = arith.constant 0.353553385 : f32
    %75 = vector.broadcast %cst_39 : f32 to vector<9x9xf32>
    %76 = arith.mulf %74, %75 : vector<9x9xf32>
    %cst_40 = arith.constant dense<0xFF800000> : vector<9xf32>
    %77 = vector.multi_reduction <maximumf>, %76, %cst_40 [1] : vector<9x9xf32> to vector<9xf32>
    %78 = vector.shape_cast %77 : vector<9xf32> to vector<9x1xf32>
    %79 = vector.broadcast %78 : vector<9x1xf32> to vector<9x9xf32>
    %80 = arith.subf %76, %79 : vector<9x9xf32>
    %81 = math.exp %80 : vector<9x9xf32>
    %cst_41 = arith.constant dense<0.000000e+00> : vector<9xf32>
    %82 = vector.multi_reduction <add>, %81, %cst_41 [1] : vector<9x9xf32> to vector<9xf32>
    %83 = vector.shape_cast %82 : vector<9xf32> to vector<9x1xf32>
    %84 = vector.broadcast %83 : vector<9x1xf32> to vector<9x9xf32>
    %85 = arith.divf %81, %84 : vector<9x9xf32>
    %cst_42 = arith.constant dense<0.000000e+00> : vector<9x8xf32>
    %86 = tpu.matmul %85, %73, %cst_42 {dimension_numbers = #tpu.dot_dimension_numbers<[1], [0], [0], [1], [0, 0, 1, 1], [], []>} : vector<9x9xf32>, vector<9x8xf32>, vector<9x8xf32> -> vector<9x8xf32>
    %87 = vector.extract_strided_slice %52 {offsets = [0, 16], sizes = [9, 8], strides = [1, 1]} : vector<9x32xf32> to vector<9x8xf32>
    %88 = vector.extract_strided_slice %53 {offsets = [0, 16], sizes = [9, 8], strides = [1, 1]} : vector<9x32xf32> to vector<9x8xf32>
    %89 = vector.extract_strided_slice %54 {offsets = [0, 16], sizes = [9, 8], strides = [1, 1]} : vector<9x32xf32> to vector<9x8xf32>
    %cst_43 = arith.constant dense<0.000000e+00> : vector<9x9xf32>
    %90 = tpu.matmul %87, %88, %cst_43 {dimension_numbers = #tpu.dot_dimension_numbers<[1], [1], [0], [0], [0, 0, 1, 0], [], []>} : vector<9x8xf32>, vector<9x8xf32>, vector<9x9xf32> -> vector<9x9xf32>
    %cst_44 = arith.constant 0.353553385 : f32
    %91 = vector.broadcast %cst_44 : f32 to vector<9x9xf32>
    %92 = arith.mulf %90, %91 : vector<9x9xf32>
    %cst_45 = arith.constant dense<0xFF800000> : vector<9xf32>
    %93 = vector.multi_reduction <maximumf>, %92, %cst_45 [1] : vector<9x9xf32> to vector<9xf32>
    %94 = vector.shape_cast %93 : vector<9xf32> to vector<9x1xf32>
    %95 = vector.broadcast %94 : vector<9x1xf32> to vector<9x9xf32>
    %96 = arith.subf %92, %95 : vector<9x9xf32>
    %97 = math.exp %96 : vector<9x9xf32>
    %cst_46 = arith.constant dense<0.000000e+00> : vector<9xf32>
    %98 = vector.multi_reduction <add>, %97, %cst_46 [1] : vector<9x9xf32> to vector<9xf32>
    %99 = vector.shape_cast %98 : vector<9xf32> to vector<9x1xf32>
    %100 = vector.broadcast %99 : vector<9x1xf32> to vector<9x9xf32>
    %101 = arith.divf %97, %100 : vector<9x9xf32>
    %cst_47 = arith.constant dense<0.000000e+00> : vector<9x8xf32>
    %102 = tpu.matmul %101, %89, %cst_47 {dimension_numbers = #tpu.dot_dimension_numbers<[1], [0], [0], [1], [0, 0, 1, 1], [], []>} : vector<9x9xf32>, vector<9x8xf32>, vector<9x8xf32> -> vector<9x8xf32>
    %103 = vector.extract_strided_slice %52 {offsets = [0, 24], sizes = [9, 8], strides = [1, 1]} : vector<9x32xf32> to vector<9x8xf32>
    %104 = vector.extract_strided_slice %53 {offsets = [0, 24], sizes = [9, 8], strides = [1, 1]} : vector<9x32xf32> to vector<9x8xf32>
    %105 = vector.extract_strided_slice %54 {offsets = [0, 24], sizes = [9, 8], strides = [1, 1]} : vector<9x32xf32> to vector<9x8xf32>
    %cst_48 = arith.constant dense<0.000000e+00> : vector<9x9xf32>
    %106 = tpu.matmul %103, %104, %cst_48 {dimension_numbers = #tpu.dot_dimension_numbers<[1], [1], [0], [0], [0, 0, 1, 0], [], []>} : vector<9x8xf32>, vector<9x8xf32>, vector<9x9xf32> -> vector<9x9xf32>
    %cst_49 = arith.constant 0.353553385 : f32
    %107 = vector.broadcast %cst_49 : f32 to vector<9x9xf32>
    %108 = arith.mulf %106, %107 : vector<9x9xf32>
    %cst_50 = arith.constant dense<0xFF800000> : vector<9xf32>
    %109 = vector.multi_reduction <maximumf>, %108, %cst_50 [1] : vector<9x9xf32> to vector<9xf32>
    %110 = vector.shape_cast %109 : vector<9xf32> to vector<9x1xf32>
    %111 = vector.broadcast %110 : vector<9x1xf32> to vector<9x9xf32>
    %112 = arith.subf %108, %111 : vector<9x9xf32>
    %113 = math.exp %112 : vector<9x9xf32>
    %cst_51 = arith.constant dense<0.000000e+00> : vector<9xf32>
    %114 = vector.multi_reduction <add>, %113, %cst_51 [1] : vector<9x9xf32> to vector<9xf32>
    %115 = vector.shape_cast %114 : vector<9xf32> to vector<9x1xf32>
    %116 = vector.broadcast %115 : vector<9x1xf32> to vector<9x9xf32>
    %117 = arith.divf %113, %116 : vector<9x9xf32>
    %cst_52 = arith.constant dense<0.000000e+00> : vector<9x8xf32>
    %118 = tpu.matmul %117, %105, %cst_52 {dimension_numbers = #tpu.dot_dimension_numbers<[1], [0], [0], [1], [0, 0, 1, 1], [], []>} : vector<9x9xf32>, vector<9x8xf32>, vector<9x8xf32> -> vector<9x8xf32>
    %119 = tpu.concatenate %70, %86, %102, %118 in 1 : vector<9x8xf32>, vector<9x8xf32>, vector<9x8xf32>, vector<9x8xf32> -> vector<9x32xf32>
    %120 = arith.truncf %119 : vector<9x32xf32> to vector<9x32xbf16>
    %c0_53 = arith.constant 0 : index
    %c0_54 = arith.constant 0 : index
    %c0_55 = arith.constant 0 : index
    %121 = vector.load %arg13[%c0_53, %c0_54, %c0_55] : memref<2x32x32xbf16, #tpu.memory_space<vmem>>, vector<1x32x32xbf16>
    %122 = vector.shape_cast %121 : vector<1x32x32xbf16> to vector<32x32xbf16>
    %cst_56 = arith.constant dense<0.000000e+00> : vector<9x32xf32>
    %123 = tpu.matmul %120, %122, %cst_56 {dimension_numbers = #tpu.dot_dimension_numbers<[1], [0], [0], [1], [0, 0, 1, 1], [], []>} : vector<9x32xbf16>, vector<32x32xbf16>, vector<9x32xf32> -> vector<9x32xf32>
    %c0_57 = arith.constant 0 : index
    %c0_58 = arith.constant 0 : index
    %c0_59 = arith.constant 0 : index
    %124 = vector.load %arg14[%c0_57, %c0_58, %c0_59] : memref<2x1x32xf32, #tpu.memory_space<vmem>>, vector<1x1x32xf32>
    %125 = vector.shape_cast %124 : vector<1x1x32xf32> to vector<1x32xf32>
    %126 = vector.broadcast %125 : vector<1x32xf32> to vector<9x32xf32>
    %127 = arith.addf %123, %126 : vector<9x32xf32>
    %128 = arith.addf %43, %127 : vector<9x32xf32>
    %c0_60 = arith.constant 0 : index
    %c0_61 = arith.constant 0 : index
    %c0_62 = arith.constant 0 : index
    %129 = vector.load %arg15[%c0_60, %c0_61, %c0_62] : memref<2x1x32xf32, #tpu.memory_space<vmem>>, vector<1x1x32xf32>
    %130 = vector.shape_cast %129 : vector<1x1x32xf32> to vector<1x32xf32>
    %c0_63 = arith.constant 0 : index
    %c0_64 = arith.constant 0 : index
    %c0_65 = arith.constant 0 : index
    %131 = vector.load %arg16[%c0_63, %c0_64, %c0_65] : memref<2x1x32xf32, #tpu.memory_space<vmem>>, vector<1x1x32xf32>
    %132 = vector.shape_cast %131 : vector<1x1x32xf32> to vector<1x32xf32>
    %cst_66 = arith.constant dense<0.000000e+00> : vector<9xf32>
    %133 = vector.multi_reduction <add>, %128, %cst_66 [1] : vector<9x32xf32> to vector<9xf32>
    %134 = vector.shape_cast %133 : vector<9xf32> to vector<9x1xf32>
    %cst_67 = arith.constant 3.200000e+01 : f32
    %135 = vector.broadcast %cst_67 : f32 to vector<9x1xf32>
    %136 = arith.divf %134, %135 : vector<9x1xf32>
    %137 = vector.broadcast %136 : vector<9x1xf32> to vector<9x32xf32>
    %138 = arith.subf %128, %137 : vector<9x32xf32>
    %139 = arith.mulf %138, %138 : vector<9x32xf32>
    %cst_68 = arith.constant dense<0.000000e+00> : vector<9xf32>
    %140 = vector.multi_reduction <add>, %139, %cst_68 [1] : vector<9x32xf32> to vector<9xf32>
    %141 = vector.shape_cast %140 : vector<9xf32> to vector<9x1xf32>
    %cst_69 = arith.constant 3.200000e+01 : f32
    %142 = vector.broadcast %cst_69 : f32 to vector<9x1xf32>
    %143 = arith.divf %141, %142 : vector<9x1xf32>
    %144 = vector.broadcast %136 : vector<9x1xf32> to vector<9x32xf32>
    %145 = arith.subf %128, %144 : vector<9x32xf32>
    %cst_70 = arith.constant 9.99999974E-6 : f32
    %146 = vector.broadcast %cst_70 : f32 to vector<9x1xf32>
    %147 = arith.addf %143, %146 : vector<9x1xf32>
    %148 = math.rsqrt %147 : vector<9x1xf32>
    %149 = vector.broadcast %148 : vector<9x1xf32> to vector<9x32xf32>
    %150 = arith.mulf %145, %149 : vector<9x32xf32>
    %151 = vector.broadcast %130 : vector<1x32xf32> to vector<9x32xf32>
    %152 = arith.mulf %150, %151 : vector<9x32xf32>
    %153 = vector.broadcast %132 : vector<1x32xf32> to vector<9x32xf32>
    %154 = arith.addf %152, %153 : vector<9x32xf32>
    %155 = arith.truncf %154 : vector<9x32xf32> to vector<9x32xbf16>
    %c0_71 = arith.constant 0 : index
    %c0_72 = arith.constant 0 : index
    %c0_73 = arith.constant 0 : index
    %156 = vector.load %arg17[%c0_71, %c0_72, %c0_73] : memref<2x32x64xbf16, #tpu.memory_space<vmem>>, vector<1x32x64xbf16>
    %157 = vector.shape_cast %156 : vector<1x32x64xbf16> to vector<32x64xbf16>
    %cst_74 = arith.constant dense<0.000000e+00> : vector<9x64xf32>
    %158 = tpu.matmul %155, %157, %cst_74 {dimension_numbers = #tpu.dot_dimension_numbers<[1], [0], [0], [1], [0, 0, 1, 1], [], []>} : vector<9x32xbf16>, vector<32x64xbf16>, vector<9x64xf32> -> vector<9x64xf32>
    %c0_75 = arith.constant 0 : index
    %c0_76 = arith.constant 0 : index
    %c0_77 = arith.constant 0 : index
    %159 = vector.load %arg18[%c0_75, %c0_76, %c0_77] : memref<2x1x64xf32, #tpu.memory_space<vmem>>, vector<1x1x64xf32>
    %160 = vector.shape_cast %159 : vector<1x1x64xf32> to vector<1x64xf32>
    %161 = vector.broadcast %160 : vector<1x64xf32> to vector<9x64xf32>
    %162 = arith.addf %158, %161 : vector<9x64xf32>
    %cst_78 = arith.constant 0.000000e+00 : f32
    %163 = vector.broadcast %cst_78 : f32 to vector<9x64xf32>
    %164 = arith.maximumf %162, %163 : vector<9x64xf32>
    %165 = arith.truncf %164 : vector<9x64xf32> to vector<9x64xbf16>
    %c0_79 = arith.constant 0 : index
    %c0_80 = arith.constant 0 : index
    %c0_81 = arith.constant 0 : index
    %166 = vector.load %arg19[%c0_79, %c0_80, %c0_81] : memref<2x64x32xbf16, #tpu.memory_space<vmem>>, vector<1x64x32xbf16>
    %167 = vector.shape_cast %166 : vector<1x64x32xbf16> to vector<64x32xbf16>
    %cst_82 = arith.constant dense<0.000000e+00> : vector<9x32xf32>
    %168 = tpu.matmul %165, %167, %cst_82 {dimension_numbers = #tpu.dot_dimension_numbers<[1], [0], [0], [1], [0, 0, 1, 1], [], []>} : vector<9x64xbf16>, vector<64x32xbf16>, vector<9x32xf32> -> vector<9x32xf32>
    %c0_83 = arith.constant 0 : index
    %c0_84 = arith.constant 0 : index
    %c0_85 = arith.constant 0 : index
    %169 = vector.load %arg20[%c0_83, %c0_84, %c0_85] : memref<2x1x32xf32, #tpu.memory_space<vmem>>, vector<1x1x32xf32>
    %170 = vector.shape_cast %169 : vector<1x1x32xf32> to vector<1x32xf32>
    %171 = vector.broadcast %170 : vector<1x32xf32> to vector<9x32xf32>
    %172 = arith.addf %168, %171 : vector<9x32xf32>
    %173 = arith.addf %154, %172 : vector<9x32xf32>
    %c0_86 = arith.constant 0 : index
    %c0_87 = arith.constant 0 : index
    %c0_88 = arith.constant 0 : index
    %174 = vector.load %arg21[%c0_86, %c0_87, %c0_88] : memref<2x1x32xf32, #tpu.memory_space<vmem>>, vector<1x1x32xf32>
    %175 = vector.shape_cast %174 : vector<1x1x32xf32> to vector<1x32xf32>
    %c0_89 = arith.constant 0 : index
    %c0_90 = arith.constant 0 : index
    %c0_91 = arith.constant 0 : index
    %176 = vector.load %arg22[%c0_89, %c0_90, %c0_91] : memref<2x1x32xf32, #tpu.memory_space<vmem>>, vector<1x1x32xf32>
    %177 = vector.shape_cast %176 : vector<1x1x32xf32> to vector<1x32xf32>
    %cst_92 = arith.constant dense<0.000000e+00> : vector<9xf32>
    %178 = vector.multi_reduction <add>, %173, %cst_92 [1] : vector<9x32xf32> to vector<9xf32>
    %179 = vector.shape_cast %178 : vector<9xf32> to vector<9x1xf32>
    %cst_93 = arith.constant 3.200000e+01 : f32
    %180 = vector.broadcast %cst_93 : f32 to vector<9x1xf32>
    %181 = arith.divf %179, %180 : vector<9x1xf32>
    %182 = vector.broadcast %181 : vector<9x1xf32> to vector<9x32xf32>
    %183 = arith.subf %173, %182 : vector<9x32xf32>
    %184 = arith.mulf %183, %183 : vector<9x32xf32>
    %cst_94 = arith.constant dense<0.000000e+00> : vector<9xf32>
    %185 = vector.multi_reduction <add>, %184, %cst_94 [1] : vector<9x32xf32> to vector<9xf32>
    %186 = vector.shape_cast %185 : vector<9xf32> to vector<9x1xf32>
    %cst_95 = arith.constant 3.200000e+01 : f32
    %187 = vector.broadcast %cst_95 : f32 to vector<9x1xf32>
    %188 = arith.divf %186, %187 : vector<9x1xf32>
    %189 = vector.broadcast %181 : vector<9x1xf32> to vector<9x32xf32>
    %190 = arith.subf %173, %189 : vector<9x32xf32>
    %cst_96 = arith.constant 9.99999974E-6 : f32
    %191 = vector.broadcast %cst_96 : f32 to vector<9x1xf32>
    %192 = arith.addf %188, %191 : vector<9x1xf32>
    %193 = math.rsqrt %192 : vector<9x1xf32>
    %194 = vector.broadcast %193 : vector<9x1xf32> to vector<9x32xf32>
    %195 = arith.mulf %190, %194 : vector<9x32xf32>
    %196 = vector.broadcast %175 : vector<1x32xf32> to vector<9x32xf32>
    %197 = arith.mulf %195, %196 : vector<9x32xf32>
    %198 = vector.broadcast %177 : vector<1x32xf32> to vector<9x32xf32>
    %199 = arith.addf %197, %198 : vector<9x32xf32>
    %200 = arith.truncf %199 : vector<9x32xf32> to vector<9x32xbf16>
    %c1 = arith.constant 1 : index
    %c0_97 = arith.constant 0 : index
    %c0_98 = arith.constant 0 : index
    %201 = vector.load %arg11[%c1, %c0_97, %c0_98] : memref<2x32x96xbf16, #tpu.memory_space<vmem>>, vector<1x32x96xbf16>
    %202 = vector.shape_cast %201 : vector<1x32x96xbf16> to vector<32x96xbf16>
    %cst_99 = arith.constant dense<0.000000e+00> : vector<9x96xf32>
    %203 = tpu.matmul %200, %202, %cst_99 {dimension_numbers = #tpu.dot_dimension_numbers<[1], [0], [0], [1], [0, 0, 1, 1], [], []>} : vector<9x32xbf16>, vector<32x96xbf16>, vector<9x96xf32> -> vector<9x96xf32>
    %c1_100 = arith.constant 1 : index
    %c0_101 = arith.constant 0 : index
    %c0_102 = arith.constant 0 : index
    %204 = vector.load %arg12[%c1_100, %c0_101, %c0_102] : memref<2x1x96xf32, #tpu.memory_space<vmem>>, vector<1x1x96xf32>
    %205 = vector.shape_cast %204 : vector<1x1x96xf32> to vector<1x96xf32>
    %206 = vector.broadcast %205 : vector<1x96xf32> to vector<9x96xf32>
    %207 = arith.addf %203, %206 : vector<9x96xf32>
    %208 = vector.extract_strided_slice %207 {offsets = [0, 0], sizes = [9, 32], strides = [1, 1]} : vector<9x96xf32> to vector<9x32xf32>
    %209 = vector.extract_strided_slice %207 {offsets = [0, 32], sizes = [9, 32], strides = [1, 1]} : vector<9x96xf32> to vector<9x32xf32>
    %210 = vector.extract_strided_slice %207 {offsets = [0, 64], sizes = [9, 32], strides = [1, 1]} : vector<9x96xf32> to vector<9x32xf32>
    %211 = vector.extract_strided_slice %208 {offsets = [0, 0], sizes = [9, 8], strides = [1, 1]} : vector<9x32xf32> to vector<9x8xf32>
    %212 = vector.extract_strided_slice %209 {offsets = [0, 0], sizes = [9, 8], strides = [1, 1]} : vector<9x32xf32> to vector<9x8xf32>
    %213 = vector.extract_strided_slice %210 {offsets = [0, 0], sizes = [9, 8], strides = [1, 1]} : vector<9x32xf32> to vector<9x8xf32>
    %cst_103 = arith.constant dense<0.000000e+00> : vector<9x9xf32>
    %214 = tpu.matmul %211, %212, %cst_103 {dimension_numbers = #tpu.dot_dimension_numbers<[1], [1], [0], [0], [0, 0, 1, 0], [], []>} : vector<9x8xf32>, vector<9x8xf32>, vector<9x9xf32> -> vector<9x9xf32>
    %cst_104 = arith.constant 0.353553385 : f32
    %215 = vector.broadcast %cst_104 : f32 to vector<9x9xf32>
    %216 = arith.mulf %214, %215 : vector<9x9xf32>
    %cst_105 = arith.constant dense<0xFF800000> : vector<9xf32>
    %217 = vector.multi_reduction <maximumf>, %216, %cst_105 [1] : vector<9x9xf32> to vector<9xf32>
    %218 = vector.shape_cast %217 : vector<9xf32> to vector<9x1xf32>
    %219 = vector.broadcast %218 : vector<9x1xf32> to vector<9x9xf32>
    %220 = arith.subf %216, %219 : vector<9x9xf32>
    %221 = math.exp %220 : vector<9x9xf32>
    %cst_106 = arith.constant dense<0.000000e+00> : vector<9xf32>
    %222 = vector.multi_reduction <add>, %221, %cst_106 [1] : vector<9x9xf32> to vector<9xf32>
    %223 = vector.shape_cast %222 : vector<9xf32> to vector<9x1xf32>
    %224 = vector.broadcast %223 : vector<9x1xf32> to vector<9x9xf32>
    %225 = arith.divf %221, %224 : vector<9x9xf32>
    %cst_107 = arith.constant dense<0.000000e+00> : vector<9x8xf32>
    %226 = tpu.matmul %225, %213, %cst_107 {dimension_numbers = #tpu.dot_dimension_numbers<[1], [0], [0], [1], [0, 0, 1, 1], [], []>} : vector<9x9xf32>, vector<9x8xf32>, vector<9x8xf32> -> vector<9x8xf32>
    %227 = vector.extract_strided_slice %208 {offsets = [0, 8], sizes = [9, 8], strides = [1, 1]} : vector<9x32xf32> to vector<9x8xf32>
    %228 = vector.extract_strided_slice %209 {offsets = [0, 8], sizes = [9, 8], strides = [1, 1]} : vector<9x32xf32> to vector<9x8xf32>
    %229 = vector.extract_strided_slice %210 {offsets = [0, 8], sizes = [9, 8], strides = [1, 1]} : vector<9x32xf32> to vector<9x8xf32>
    %cst_108 = arith.constant dense<0.000000e+00> : vector<9x9xf32>
    %230 = tpu.matmul %227, %228, %cst_108 {dimension_numbers = #tpu.dot_dimension_numbers<[1], [1], [0], [0], [0, 0, 1, 0], [], []>} : vector<9x8xf32>, vector<9x8xf32>, vector<9x9xf32> -> vector<9x9xf32>
    %cst_109 = arith.constant 0.353553385 : f32
    %231 = vector.broadcast %cst_109 : f32 to vector<9x9xf32>
    %232 = arith.mulf %230, %231 : vector<9x9xf32>
    %cst_110 = arith.constant dense<0xFF800000> : vector<9xf32>
    %233 = vector.multi_reduction <maximumf>, %232, %cst_110 [1] : vector<9x9xf32> to vector<9xf32>
    %234 = vector.shape_cast %233 : vector<9xf32> to vector<9x1xf32>
    %235 = vector.broadcast %234 : vector<9x1xf32> to vector<9x9xf32>
    %236 = arith.subf %232, %235 : vector<9x9xf32>
    %237 = math.exp %236 : vector<9x9xf32>
    %cst_111 = arith.constant dense<0.000000e+00> : vector<9xf32>
    %238 = vector.multi_reduction <add>, %237, %cst_111 [1] : vector<9x9xf32> to vector<9xf32>
    %239 = vector.shape_cast %238 : vector<9xf32> to vector<9x1xf32>
    %240 = vector.broadcast %239 : vector<9x1xf32> to vector<9x9xf32>
    %241 = arith.divf %237, %240 : vector<9x9xf32>
    %cst_112 = arith.constant dense<0.000000e+00> : vector<9x8xf32>
    %242 = tpu.matmul %241, %229, %cst_112 {dimension_numbers = #tpu.dot_dimension_numbers<[1], [0], [0], [1], [0, 0, 1, 1], [], []>} : vector<9x9xf32>, vector<9x8xf32>, vector<9x8xf32> -> vector<9x8xf32>
    %243 = vector.extract_strided_slice %208 {offsets = [0, 16], sizes = [9, 8], strides = [1, 1]} : vector<9x32xf32> to vector<9x8xf32>
    %244 = vector.extract_strided_slice %209 {offsets = [0, 16], sizes = [9, 8], strides = [1, 1]} : vector<9x32xf32> to vector<9x8xf32>
    %245 = vector.extract_strided_slice %210 {offsets = [0, 16], sizes = [9, 8], strides = [1, 1]} : vector<9x32xf32> to vector<9x8xf32>
    %cst_113 = arith.constant dense<0.000000e+00> : vector<9x9xf32>
    %246 = tpu.matmul %243, %244, %cst_113 {dimension_numbers = #tpu.dot_dimension_numbers<[1], [1], [0], [0], [0, 0, 1, 0], [], []>} : vector<9x8xf32>, vector<9x8xf32>, vector<9x9xf32> -> vector<9x9xf32>
    %cst_114 = arith.constant 0.353553385 : f32
    %247 = vector.broadcast %cst_114 : f32 to vector<9x9xf32>
    %248 = arith.mulf %246, %247 : vector<9x9xf32>
    %cst_115 = arith.constant dense<0xFF800000> : vector<9xf32>
    %249 = vector.multi_reduction <maximumf>, %248, %cst_115 [1] : vector<9x9xf32> to vector<9xf32>
    %250 = vector.shape_cast %249 : vector<9xf32> to vector<9x1xf32>
    %251 = vector.broadcast %250 : vector<9x1xf32> to vector<9x9xf32>
    %252 = arith.subf %248, %251 : vector<9x9xf32>
    %253 = math.exp %252 : vector<9x9xf32>
    %cst_116 = arith.constant dense<0.000000e+00> : vector<9xf32>
    %254 = vector.multi_reduction <add>, %253, %cst_116 [1] : vector<9x9xf32> to vector<9xf32>
    %255 = vector.shape_cast %254 : vector<9xf32> to vector<9x1xf32>
    %256 = vector.broadcast %255 : vector<9x1xf32> to vector<9x9xf32>
    %257 = arith.divf %253, %256 : vector<9x9xf32>
    %cst_117 = arith.constant dense<0.000000e+00> : vector<9x8xf32>
    %258 = tpu.matmul %257, %245, %cst_117 {dimension_numbers = #tpu.dot_dimension_numbers<[1], [0], [0], [1], [0, 0, 1, 1], [], []>} : vector<9x9xf32>, vector<9x8xf32>, vector<9x8xf32> -> vector<9x8xf32>
    %259 = vector.extract_strided_slice %208 {offsets = [0, 24], sizes = [9, 8], strides = [1, 1]} : vector<9x32xf32> to vector<9x8xf32>
    %260 = vector.extract_strided_slice %209 {offsets = [0, 24], sizes = [9, 8], strides = [1, 1]} : vector<9x32xf32> to vector<9x8xf32>
    %261 = vector.extract_strided_slice %210 {offsets = [0, 24], sizes = [9, 8], strides = [1, 1]} : vector<9x32xf32> to vector<9x8xf32>
    %cst_118 = arith.constant dense<0.000000e+00> : vector<9x9xf32>
    %262 = tpu.matmul %259, %260, %cst_118 {dimension_numbers = #tpu.dot_dimension_numbers<[1], [1], [0], [0], [0, 0, 1, 0], [], []>} : vector<9x8xf32>, vector<9x8xf32>, vector<9x9xf32> -> vector<9x9xf32>
    %cst_119 = arith.constant 0.353553385 : f32
    %263 = vector.broadcast %cst_119 : f32 to vector<9x9xf32>
    %264 = arith.mulf %262, %263 : vector<9x9xf32>
    %cst_120 = arith.constant dense<0xFF800000> : vector<9xf32>
    %265 = vector.multi_reduction <maximumf>, %264, %cst_120 [1] : vector<9x9xf32> to vector<9xf32>
    %266 = vector.shape_cast %265 : vector<9xf32> to vector<9x1xf32>
    %267 = vector.broadcast %266 : vector<9x1xf32> to vector<9x9xf32>
    %268 = arith.subf %264, %267 : vector<9x9xf32>
    %269 = math.exp %268 : vector<9x9xf32>
    %cst_121 = arith.constant dense<0.000000e+00> : vector<9xf32>
    %270 = vector.multi_reduction <add>, %269, %cst_121 [1] : vector<9x9xf32> to vector<9xf32>
    %271 = vector.shape_cast %270 : vector<9xf32> to vector<9x1xf32>
    %272 = vector.broadcast %271 : vector<9x1xf32> to vector<9x9xf32>
    %273 = arith.divf %269, %272 : vector<9x9xf32>
    %cst_122 = arith.constant dense<0.000000e+00> : vector<9x8xf32>
    %274 = tpu.matmul %273, %261, %cst_122 {dimension_numbers = #tpu.dot_dimension_numbers<[1], [0], [0], [1], [0, 0, 1, 1], [], []>} : vector<9x9xf32>, vector<9x8xf32>, vector<9x8xf32> -> vector<9x8xf32>
    %275 = tpu.concatenate %226, %242, %258, %274 in 1 : vector<9x8xf32>, vector<9x8xf32>, vector<9x8xf32>, vector<9x8xf32> -> vector<9x32xf32>
    %276 = arith.truncf %275 : vector<9x32xf32> to vector<9x32xbf16>
    %c1_123 = arith.constant 1 : index
    %c0_124 = arith.constant 0 : index
    %c0_125 = arith.constant 0 : index
    %277 = vector.load %arg13[%c1_123, %c0_124, %c0_125] : memref<2x32x32xbf16, #tpu.memory_space<vmem>>, vector<1x32x32xbf16>
    %278 = vector.shape_cast %277 : vector<1x32x32xbf16> to vector<32x32xbf16>
    %cst_126 = arith.constant dense<0.000000e+00> : vector<9x32xf32>
    %279 = tpu.matmul %276, %278, %cst_126 {dimension_numbers = #tpu.dot_dimension_numbers<[1], [0], [0], [1], [0, 0, 1, 1], [], []>} : vector<9x32xbf16>, vector<32x32xbf16>, vector<9x32xf32> -> vector<9x32xf32>
    %c1_127 = arith.constant 1 : index
    %c0_128 = arith.constant 0 : index
    %c0_129 = arith.constant 0 : index
    %280 = vector.load %arg14[%c1_127, %c0_128, %c0_129] : memref<2x1x32xf32, #tpu.memory_space<vmem>>, vector<1x1x32xf32>
    %281 = vector.shape_cast %280 : vector<1x1x32xf32> to vector<1x32xf32>
    %282 = vector.broadcast %281 : vector<1x32xf32> to vector<9x32xf32>
    %283 = arith.addf %279, %282 : vector<9x32xf32>
    %284 = arith.addf %199, %283 : vector<9x32xf32>
    %c1_130 = arith.constant 1 : index
    %c0_131 = arith.constant 0 : index
    %c0_132 = arith.constant 0 : index
    %285 = vector.load %arg15[%c1_130, %c0_131, %c0_132] : memref<2x1x32xf32, #tpu.memory_space<vmem>>, vector<1x1x32xf32>
    %286 = vector.shape_cast %285 : vector<1x1x32xf32> to vector<1x32xf32>
    %c1_133 = arith.constant 1 : index
    %c0_134 = arith.constant 0 : index
    %c0_135 = arith.constant 0 : index
    %287 = vector.load %arg16[%c1_133, %c0_134, %c0_135] : memref<2x1x32xf32, #tpu.memory_space<vmem>>, vector<1x1x32xf32>
    %288 = vector.shape_cast %287 : vector<1x1x32xf32> to vector<1x32xf32>
    %cst_136 = arith.constant dense<0.000000e+00> : vector<9xf32>
    %289 = vector.multi_reduction <add>, %284, %cst_136 [1] : vector<9x32xf32> to vector<9xf32>
    %290 = vector.shape_cast %289 : vector<9xf32> to vector<9x1xf32>
    %cst_137 = arith.constant 3.200000e+01 : f32
    %291 = vector.broadcast %cst_137 : f32 to vector<9x1xf32>
    %292 = arith.divf %290, %291 : vector<9x1xf32>
    %293 = vector.broadcast %292 : vector<9x1xf32> to vector<9x32xf32>
    %294 = arith.subf %284, %293 : vector<9x32xf32>
    %295 = arith.mulf %294, %294 : vector<9x32xf32>
    %cst_138 = arith.constant dense<0.000000e+00> : vector<9xf32>
    %296 = vector.multi_reduction <add>, %295, %cst_138 [1] : vector<9x32xf32> to vector<9xf32>
    %297 = vector.shape_cast %296 : vector<9xf32> to vector<9x1xf32>
    %cst_139 = arith.constant 3.200000e+01 : f32
    %298 = vector.broadcast %cst_139 : f32 to vector<9x1xf32>
    %299 = arith.divf %297, %298 : vector<9x1xf32>
    %300 = vector.broadcast %292 : vector<9x1xf32> to vector<9x32xf32>
    %301 = arith.subf %284, %300 : vector<9x32xf32>
    %cst_140 = arith.constant 9.99999974E-6 : f32
    %302 = vector.broadcast %cst_140 : f32 to vector<9x1xf32>
    %303 = arith.addf %299, %302 : vector<9x1xf32>
    %304 = math.rsqrt %303 : vector<9x1xf32>
    %305 = vector.broadcast %304 : vector<9x1xf32> to vector<9x32xf32>
    %306 = arith.mulf %301, %305 : vector<9x32xf32>
    %307 = vector.broadcast %286 : vector<1x32xf32> to vector<9x32xf32>
    %308 = arith.mulf %306, %307 : vector<9x32xf32>
    %309 = vector.broadcast %288 : vector<1x32xf32> to vector<9x32xf32>
    %310 = arith.addf %308, %309 : vector<9x32xf32>
    %311 = arith.truncf %310 : vector<9x32xf32> to vector<9x32xbf16>
    %c1_141 = arith.constant 1 : index
    %c0_142 = arith.constant 0 : index
    %c0_143 = arith.constant 0 : index
    %312 = vector.load %arg17[%c1_141, %c0_142, %c0_143] : memref<2x32x64xbf16, #tpu.memory_space<vmem>>, vector<1x32x64xbf16>
    %313 = vector.shape_cast %312 : vector<1x32x64xbf16> to vector<32x64xbf16>
    %cst_144 = arith.constant dense<0.000000e+00> : vector<9x64xf32>
    %314 = tpu.matmul %311, %313, %cst_144 {dimension_numbers = #tpu.dot_dimension_numbers<[1], [0], [0], [1], [0, 0, 1, 1], [], []>} : vector<9x32xbf16>, vector<32x64xbf16>, vector<9x64xf32> -> vector<9x64xf32>
    %c1_145 = arith.constant 1 : index
    %c0_146 = arith.constant 0 : index
    %c0_147 = arith.constant 0 : index
    %315 = vector.load %arg18[%c1_145, %c0_146, %c0_147] : memref<2x1x64xf32, #tpu.memory_space<vmem>>, vector<1x1x64xf32>
    %316 = vector.shape_cast %315 : vector<1x1x64xf32> to vector<1x64xf32>
    %317 = vector.broadcast %316 : vector<1x64xf32> to vector<9x64xf32>
    %318 = arith.addf %314, %317 : vector<9x64xf32>
    %cst_148 = arith.constant 0.000000e+00 : f32
    %319 = vector.broadcast %cst_148 : f32 to vector<9x64xf32>
    %320 = arith.maximumf %318, %319 : vector<9x64xf32>
    %321 = arith.truncf %320 : vector<9x64xf32> to vector<9x64xbf16>
    %c1_149 = arith.constant 1 : index
    %c0_150 = arith.constant 0 : index
    %c0_151 = arith.constant 0 : index
    %322 = vector.load %arg19[%c1_149, %c0_150, %c0_151] : memref<2x64x32xbf16, #tpu.memory_space<vmem>>, vector<1x64x32xbf16>
    %323 = vector.shape_cast %322 : vector<1x64x32xbf16> to vector<64x32xbf16>
    %cst_152 = arith.constant dense<0.000000e+00> : vector<9x32xf32>
    %324 = tpu.matmul %321, %323, %cst_152 {dimension_numbers = #tpu.dot_dimension_numbers<[1], [0], [0], [1], [0, 0, 1, 1], [], []>} : vector<9x64xbf16>, vector<64x32xbf16>, vector<9x32xf32> -> vector<9x32xf32>
    %c1_153 = arith.constant 1 : index
    %c0_154 = arith.constant 0 : index
    %c0_155 = arith.constant 0 : index
    %325 = vector.load %arg20[%c1_153, %c0_154, %c0_155] : memref<2x1x32xf32, #tpu.memory_space<vmem>>, vector<1x1x32xf32>
    %326 = vector.shape_cast %325 : vector<1x1x32xf32> to vector<1x32xf32>
    %327 = vector.broadcast %326 : vector<1x32xf32> to vector<9x32xf32>
    %328 = arith.addf %324, %327 : vector<9x32xf32>
    %329 = arith.addf %310, %328 : vector<9x32xf32>
    %c1_156 = arith.constant 1 : index
    %c0_157 = arith.constant 0 : index
    %c0_158 = arith.constant 0 : index
    %330 = vector.load %arg21[%c1_156, %c0_157, %c0_158] : memref<2x1x32xf32, #tpu.memory_space<vmem>>, vector<1x1x32xf32>
    %331 = vector.shape_cast %330 : vector<1x1x32xf32> to vector<1x32xf32>
    %c1_159 = arith.constant 1 : index
    %c0_160 = arith.constant 0 : index
    %c0_161 = arith.constant 0 : index
    %332 = vector.load %arg22[%c1_159, %c0_160, %c0_161] : memref<2x1x32xf32, #tpu.memory_space<vmem>>, vector<1x1x32xf32>
    %333 = vector.shape_cast %332 : vector<1x1x32xf32> to vector<1x32xf32>
    %cst_162 = arith.constant dense<0.000000e+00> : vector<9xf32>
    %334 = vector.multi_reduction <add>, %329, %cst_162 [1] : vector<9x32xf32> to vector<9xf32>
    %335 = vector.shape_cast %334 : vector<9xf32> to vector<9x1xf32>
    %cst_163 = arith.constant 3.200000e+01 : f32
    %336 = vector.broadcast %cst_163 : f32 to vector<9x1xf32>
    %337 = arith.divf %335, %336 : vector<9x1xf32>
    %338 = vector.broadcast %337 : vector<9x1xf32> to vector<9x32xf32>
    %339 = arith.subf %329, %338 : vector<9x32xf32>
    %340 = arith.mulf %339, %339 : vector<9x32xf32>
    %cst_164 = arith.constant dense<0.000000e+00> : vector<9xf32>
    %341 = vector.multi_reduction <add>, %340, %cst_164 [1] : vector<9x32xf32> to vector<9xf32>
    %342 = vector.shape_cast %341 : vector<9xf32> to vector<9x1xf32>
    %cst_165 = arith.constant 3.200000e+01 : f32
    %343 = vector.broadcast %cst_165 : f32 to vector<9x1xf32>
    %344 = arith.divf %342, %343 : vector<9x1xf32>
    %345 = vector.broadcast %337 : vector<9x1xf32> to vector<9x32xf32>
    %346 = arith.subf %329, %345 : vector<9x32xf32>
    %cst_166 = arith.constant 9.99999974E-6 : f32
    %347 = vector.broadcast %cst_166 : f32 to vector<9x1xf32>
    %348 = arith.addf %344, %347 : vector<9x1xf32>
    %349 = math.rsqrt %348 : vector<9x1xf32>
    %350 = vector.broadcast %349 : vector<9x1xf32> to vector<9x32xf32>
    %351 = arith.mulf %346, %350 : vector<9x32xf32>
    %352 = vector.broadcast %331 : vector<1x32xf32> to vector<9x32xf32>
    %353 = arith.mulf %351, %352 : vector<9x32xf32>
    %354 = vector.broadcast %333 : vector<1x32xf32> to vector<9x32xf32>
    %355 = arith.addf %353, %354 : vector<9x32xf32>
    %356 = tpu.concatenate %43, %199, %355 in 0 : vector<9x32xf32>, vector<9x32xf32>, vector<9x32xf32> -> vector<27x32xf32>
    %357 = arith.truncf %356 : vector<27x32xf32> to vector<27x32xbf16>
    %c0_167 = arith.constant 0 : index
    %c0_168 = arith.constant 0 : index
    %358 = vector.load %arg23[%c0_167, %c0_168] : memref<12x27xbf16, #tpu.memory_space<vmem>>, vector<12x27xbf16>
    %cst_169 = arith.constant dense<0.000000e+00> : vector<12x32xf32>
    %359 = tpu.matmul %358, %357, %cst_169 {dimension_numbers = #tpu.dot_dimension_numbers<[1], [0], [0], [1], [0, 0, 1, 1], [], []>} : vector<12x27xbf16>, vector<27x32xbf16>, vector<12x32xf32> -> vector<12x32xf32>
    %c0_170 = arith.constant 0 : index
    %c0_171 = arith.constant 0 : index
    %360 = vector.load %arg24[%c0_170, %c0_171] : memref<12x1xf32, #tpu.memory_space<vmem>>, vector<12x1xf32>
    %361 = vector.broadcast %360 : vector<12x1xf32> to vector<12x32xf32>
    %362 = arith.addf %359, %361 : vector<12x32xf32>
    %363 = arith.truncf %362 : vector<12x32xf32> to vector<12x32xbf16>
    %c0_172 = arith.constant 0 : index
    %c0_173 = arith.constant 0 : index
    %364 = vector.load %arg25[%c0_172, %c0_173] : memref<32x1xbf16, #tpu.memory_space<vmem>>, vector<32x1xbf16>
    %cst_174 = arith.constant dense<0.000000e+00> : vector<12x1xf32>
    %365 = tpu.matmul %363, %364, %cst_174 {dimension_numbers = #tpu.dot_dimension_numbers<[1], [0], [0], [1], [0, 0, 1, 1], [], []>} : vector<12x32xbf16>, vector<32x1xbf16>, vector<12x1xf32> -> vector<12x1xf32>
    %c0_175 = arith.constant 0 : index
    %c0_176 = arith.constant 0 : index
    %366 = vector.load %arg26[%c0_175, %c0_176] : memref<1x1xf32, #tpu.memory_space<vmem>>, vector<1x1xf32>
    %367 = vector.broadcast %366 : vector<1x1xf32> to vector<12x1xf32>
    %368 = arith.addf %365, %367 : vector<12x1xf32>
    %c0_177 = arith.constant 0 : index
    %c0_178 = arith.constant 0 : index
    %c0_179 = arith.constant 0 : index
    %369 = vector.load %arg4[%c0_177, %c0_178, %c0_179] : memref<1x1x1xf32, #tpu.memory_space<vmem>>, vector<1x1x1xf32>
    %370 = vector.shape_cast %369 : vector<1x1x1xf32> to vector<1x1xf32>
    %371 = vector.broadcast %370 : vector<1x1xf32> to vector<12x1xf32>
    %372 = arith.addf %368, %371 : vector<12x1xf32>
    %c0_180 = arith.constant 0 : index
    %c0_181 = arith.constant 0 : index
    %c0_182 = arith.constant 0 : index
    %373 = vector.load %arg27[%c0_180, %c0_181, %c0_182] : memref<1x12x1xf32, #tpu.memory_space<vmem>>, vector<1x12x1xf32>
    %374 = vector.shape_cast %373 : vector<1x12x1xf32> to vector<12x1xf32>
    %375 = vector.shape_cast %372 : vector<12x1xf32> to vector<1x12x1xf32>
    tpu.vector_store %arg27[%c0_180, %c0_181, %c0_182], %375 {strides = array<i32>} : memref<1x12x1xf32, #tpu.memory_space<vmem>>, vector<1x12x1xf32>,
    return
  }
  func.func @transform_0(%arg0: i32) -> (i32, i32, i32) {
    %c0_i32 = arith.constant 0 : i32
    %c0_i32_0 = arith.constant 0 : i32
    %c0_i32_1 = arith.constant 0 : i32
    return %arg0, %c0_i32, %c0_i32_0 : i32, i32, i32
  }
  func.func @transform_1(%arg0: i32) -> (i32, i32, i32) {
    %c0_i32 = arith.constant 0 : i32
    %c0_i32_0 = arith.constant 0 : i32
    %c0_i32_1 = arith.constant 0 : i32
    return %arg0, %c0_i32, %c0_i32_0 : i32, i32, i32
  }
  func.func @transform_2(%arg0: i32) -> (i32, i32, i32) {
    %c0_i32 = arith.constant 0 : i32
    %c0_i32_0 = arith.constant 0 : i32
    %c0_i32_1 = arith.constant 0 : i32
    return %arg0, %c0_i32, %c0_i32_0 : i32, i32, i32
  }
  func.func @transform_3(%arg0: i32) -> (i32, i32, i32) {
    %c0_i32 = arith.constant 0 : i32
    %c0_i32_0 = arith.constant 0 : i32
    %c0_i32_1 = arith.constant 0 : i32
    return %arg0, %c0_i32, %c0_i32_0 : i32, i32, i32
  }
  func.func @transform_4(%arg0: i32) -> (i32, i32) {
    %c0_i32 = arith.constant 0 : i32
    %c0_i32_0 = arith.constant 0 : i32
    %c0_i32_1 = arith.constant 0 : i32
    return %c0_i32, %c0_i32_0 : i32, i32
  }
  func.func @transform_5(%arg0: i32) -> (i32, i32) {
    %c0_i32 = arith.constant 0 : i32
    %c0_i32_0 = arith.constant 0 : i32
    %c0_i32_1 = arith.constant 0 : i32
    return %c0_i32, %c0_i32_0 : i32, i32
  }
  func.func @transform_6(%arg0: i32) -> (i32, i32) {
    %c0_i32 = arith.constant 0 : i32
    %c0_i32_0 = arith.constant 0 : i32
    %c0_i32_1 = arith.constant 0 : i32
    return %c0_i32, %c0_i32_0 : i32, i32
  }
  func.func @transform_7(%arg0: i32) -> (i32, i32) {
    %c0_i32 = arith.constant 0 : i32
    %c0_i32_0 = arith.constant 0 : i32
    %c0_i32_1 = arith.constant 0 : i32
    return %c0_i32, %c0_i32_0 : i32, i32
  }
  func.func @transform_8(%arg0: i32) -> (i32, i32) {
    %c0_i32 = arith.constant 0 : i32
    %c0_i32_0 = arith.constant 0 : i32
    %c0_i32_1 = arith.constant 0 : i32
    return %c0_i32, %c0_i32_0 : i32, i32
  }
  func.func @transform_9(%arg0: i32) -> (i32, i32) {
    %c0_i32 = arith.constant 0 : i32
    %c0_i32_0 = arith.constant 0 : i32
    %c0_i32_1 = arith.constant 0 : i32
    return %c0_i32, %c0_i32_0 : i32, i32
  }
  func.func @transform_10(%arg0: i32) -> (i32, i32, i32) {
    %c0_i32 = arith.constant 0 : i32
    %c0_i32_0 = arith.constant 0 : i32
    %c0_i32_1 = arith.constant 0 : i32
    %c0_i32_2 = arith.constant 0 : i32
    return %c0_i32, %c0_i32_0, %c0_i32_1 : i32, i32, i32
  }
  func.func @transform_11(%arg0: i32) -> (i32, i32, i32) {
    %c0_i32 = arith.constant 0 : i32
    %c0_i32_0 = arith.constant 0 : i32
    %c0_i32_1 = arith.constant 0 : i32
    %c0_i32_2 = arith.constant 0 : i32
    return %c0_i32, %c0_i32_0, %c0_i32_1 : i32, i32, i32
  }
  func.func @transform_12(%arg0: i32) -> (i32, i32, i32) {
    %c0_i32 = arith.constant 0 : i32
    %c0_i32_0 = arith.constant 0 : i32
    %c0_i32_1 = arith.constant 0 : i32
    %c0_i32_2 = arith.constant 0 : i32
    return %c0_i32, %c0_i32_0, %c0_i32_1 : i32, i32, i32
  }
  func.func @transform_13(%arg0: i32) -> (i32, i32, i32) {
    %c0_i32 = arith.constant 0 : i32
    %c0_i32_0 = arith.constant 0 : i32
    %c0_i32_1 = arith.constant 0 : i32
    %c0_i32_2 = arith.constant 0 : i32
    return %c0_i32, %c0_i32_0, %c0_i32_1 : i32, i32, i32
  }
  func.func @transform_14(%arg0: i32) -> (i32, i32, i32) {
    %c0_i32 = arith.constant 0 : i32
    %c0_i32_0 = arith.constant 0 : i32
    %c0_i32_1 = arith.constant 0 : i32
    %c0_i32_2 = arith.constant 0 : i32
    return %c0_i32, %c0_i32_0, %c0_i32_1 : i32, i32, i32
  }
  func.func @transform_15(%arg0: i32) -> (i32, i32, i32) {
    %c0_i32 = arith.constant 0 : i32
    %c0_i32_0 = arith.constant 0 : i32
    %c0_i32_1 = arith.constant 0 : i32
    %c0_i32_2 = arith.constant 0 : i32
    return %c0_i32, %c0_i32_0, %c0_i32_1 : i32, i32, i32
  }
  func.func @transform_16(%arg0: i32) -> (i32, i32, i32) {
    %c0_i32 = arith.constant 0 : i32
    %c0_i32_0 = arith.constant 0 : i32
    %c0_i32_1 = arith.constant 0 : i32
    %c0_i32_2 = arith.constant 0 : i32
    return %c0_i32, %c0_i32_0, %c0_i32_1 : i32, i32, i32
  }
  func.func @transform_17(%arg0: i32) -> (i32, i32, i32) {
    %c0_i32 = arith.constant 0 : i32
    %c0_i32_0 = arith.constant 0 : i32
    %c0_i32_1 = arith.constant 0 : i32
    %c0_i32_2 = arith.constant 0 : i32
    return %c0_i32, %c0_i32_0, %c0_i32_1 : i32, i32, i32
  }
  func.func @transform_18(%arg0: i32) -> (i32, i32, i32) {
    %c0_i32 = arith.constant 0 : i32
    %c0_i32_0 = arith.constant 0 : i32
    %c0_i32_1 = arith.constant 0 : i32
    %c0_i32_2 = arith.constant 0 : i32
    return %c0_i32, %c0_i32_0, %c0_i32_1 : i32, i32, i32
  }
  func.func @transform_19(%arg0: i32) -> (i32, i32, i32) {
    %c0_i32 = arith.constant 0 : i32
    %c0_i32_0 = arith.constant 0 : i32
    %c0_i32_1 = arith.constant 0 : i32
    %c0_i32_2 = arith.constant 0 : i32
    return %c0_i32, %c0_i32_0, %c0_i32_1 : i32, i32, i32
  }
  func.func @transform_20(%arg0: i32) -> (i32, i32, i32) {
    %c0_i32 = arith.constant 0 : i32
    %c0_i32_0 = arith.constant 0 : i32
    %c0_i32_1 = arith.constant 0 : i32
    %c0_i32_2 = arith.constant 0 : i32
    return %c0_i32, %c0_i32_0, %c0_i32_1 : i32, i32, i32
  }
  func.func @transform_21(%arg0: i32) -> (i32, i32, i32) {
    %c0_i32 = arith.constant 0 : i32
    %c0_i32_0 = arith.constant 0 : i32
    %c0_i32_1 = arith.constant 0 : i32
    %c0_i32_2 = arith.constant 0 : i32
    return %c0_i32, %c0_i32_0, %c0_i32_1 : i32, i32, i32
  }
  func.func @transform_22(%arg0: i32) -> (i32, i32) {
    %c0_i32 = arith.constant 0 : i32
    %c0_i32_0 = arith.constant 0 : i32
    %c0_i32_1 = arith.constant 0 : i32
    return %c0_i32, %c0_i32_0 : i32, i32
  }
  func.func @transform_23(%arg0: i32) -> (i32, i32) {
    %c0_i32 = arith.constant 0 : i32
    %c0_i32_0 = arith.constant 0 : i32
    %c0_i32_1 = arith.constant 0 : i32
    return %c0_i32, %c0_i32_0 : i32, i32
  }
  func.func @transform_24(%arg0: i32) -> (i32, i32) {
    %c0_i32 = arith.constant 0 : i32
    %c0_i32_0 = arith.constant 0 : i32
    %c0_i32_1 = arith.constant 0 : i32
    return %c0_i32, %c0_i32_0 : i32, i32
  }
  func.func @transform_25(%arg0: i32) -> (i32, i32) {
    %c0_i32 = arith.constant 0 : i32
    %c0_i32_0 = arith.constant 0 : i32
    %c0_i32_1 = arith.constant 0 : i32
    return %c0_i32, %c0_i32_0 : i32, i32
  }
  func.func @transform_26(%arg0: i32) -> (i32, i32, i32) {
    %c0_i32 = arith.constant 0 : i32
    %c0_i32_0 = arith.constant 0 : i32
    %c0_i32_1 = arith.constant 0 : i32
    return %arg0, %c0_i32, %c0_i32_0 : i32, i32, i32
  }
}

</mosaic_0001>

<llo_original>
// kernel: _lambda_.1
$region0: #{_lambda_.1}
  #allocation0 [shape = 'u32[]', space=smem, size = 0x4, offset = 0x4, fixed_abs, tag = 'smem constant byte address 0x4 - core index']
  #allocation1 [shape = 'u32[144,128]{1,0:T(1,128)}', space=vmem, size = 0x12000, scoped, tag = 'internal scratch']
  #allocation2 [shape = 'f32[1,1]{1,0:T(1,128)S(1)}', space=vmem, size = 0x200, scoped, tag = 'scoped memory for _lambda_.1']
  %s0 = inlined_call_operand.vmem [shape: f32[8,9,4], index: 0, kind: input, shape index: {}]
  %s1 = inlined_call_operand.vmem [shape: f32[8,9,3], index: 1, kind: input, shape index: {}]
  %s2 = inlined_call_operand.vmem [shape: f32[8,9,32], index: 2, kind: input, shape index: {}]
  %s3 = inlined_call_operand.vmem [shape: f32[8,1,1], index: 3, kind: input, shape index: {}]
  %s4 = inlined_call_operand.vmem [shape: bf16[4,32], index: 4, kind: input, shape index: {}]
  %s5 = inlined_call_operand.vmem [shape: f32[1,32], index: 5, kind: input, shape index: {}]
  %s6 = inlined_call_operand.vmem [shape: bf16[3,32], index: 6, kind: input, shape index: {}]
  %s7 = inlined_call_operand.vmem [shape: f32[1,32], index: 7, kind: input, shape index: {}]
  %s8 = inlined_call_operand.vmem [shape: f32[1,32], index: 8, kind: input, shape index: {}]
  %s9 = inlined_call_operand.vmem [shape: f32[1,32], index: 9, kind: input, shape index: {}]
  %s10 = inlined_call_operand.vmem [shape: bf16[2,32,96], index: 10, kind: input, shape index: {}]
  %s11 = inlined_call_operand.vmem [shape: f32[2,1,96], index: 11, kind: input, shape index: {}]
  %s12 = inlined_call_operand.vmem [shape: bf16[2,32,32], index: 12, kind: input, shape index: {}]
  %s13 = inlined_call_operand.vmem [shape: f32[2,1,32], index: 13, kind: input, shape index: {}]
  %s14 = inlined_call_operand.vmem [shape: f32[2,1,32], index: 14, kind: input, shape index: {}]
  %s15 = inlined_call_operand.vmem [shape: f32[2,1,32], index: 15, kind: input, shape index: {}]
  %s16 = inlined_call_operand.vmem [shape: bf16[2,32,64], index: 16, kind: input, shape index: {}]
  %s17 = inlined_call_operand.vmem [shape: f32[2,1,64], index: 17, kind: input, shape index: {}]
  %s18 = inlined_call_operand.vmem [shape: bf16[2,64,32], index: 18, kind: input, shape index: {}]
  %s19 = inlined_call_operand.vmem [shape: f32[2,1,32], index: 19, kind: input, shape index: {}]
  %s20 = inlined_call_operand.vmem [shape: f32[2,1,32], index: 20, kind: input, shape index: {}]
  %s21 = inlined_call_operand.vmem [shape: f32[2,1,32], index: 21, kind: input, shape index: {}]
  %s22 = inlined_call_operand.vmem [shape: bf16[12,27], index: 22, kind: input, shape index: {}]
  %s23 = inlined_call_operand.vmem [shape: f32[12,1], index: 23, kind: input, shape index: {}]
  %s24 = inlined_call_operand.vmem [shape: bf16[32,1], index: 24, kind: input, shape index: {}]
  %s25 = inlined_call_operand.<no memory space> [shape: f32[1,1], index: 25, kind: input, shape index: {}]
  %s26 = inlined_call_operand.vmem [shape: f32[8,12,1], index: 26, kind: output, shape index: {}]
  %s27 = sld [smem:[#allocation0]]
  $region137: #{_lambda_.1} parent=0
    _
  %s29 = ssub.s32 1, %s27
  %s30 = scalar_select 0, %s29, %s27
  %v31 = vstv %s25
  %32 = vst [vmem:[#allocation2] sm:$0x1] %v31
  loop: start=0, step=1, limit=10
  $region2: #{_lambda_.1} parent=0 // loop_pre_header
    _
  $region3: #{_lambda_.1} parent=0 // loop_header
    %s34 = sphi 0, %s38
    %p35 = scmp.ge.s32.totalorder %s34, 10
    %s44 = sphi 0, %s46
    %s47 = sphi 0, %s44
    %s48 = sphi 0, %s47
    %s64 = sphi 0, %s48
    %s70 = sphi 0, %s72
    %s73 = sphi 0, %s70
    %s74 = sphi 0, %s73
    %s90 = sphi 0, %s74
    %s96 = sphi 0, %s98
    %s99 = sphi 0, %s96
    %s100 = sphi 0, %s99
    %s116 = sphi 0, %s100
    %s122 = sphi 0, %s124
    %s125 = sphi 0, %s122
    %s126 = sphi 0, %s125
    %s142 = sphi 0, %s126
    %s146 = sphi 0, %s146
    %s148 = sphi 0, %s146
    %s149 = sphi 0, %s148
    %s163 = sphi 0, %s149
    %s167 = sphi 0, %s167
    %s169 = sphi 0, %s167
    %s170 = sphi 0, %s169
    %s184 = sphi 0, %s170
    %s188 = sphi 0, %s188
    %s190 = sphi 0, %s188
    %s191 = sphi 0, %s190
    %s205 = sphi 0, %s191
    %s209 = sphi 0, %s209
    %s211 = sphi 0, %s209
    %s212 = sphi 0, %s211
    %s226 = sphi 0, %s212
    %s230 = sphi 0, %s230
    %s232 = sphi 0, %s230
    %s233 = sphi 0, %s232
    %s247 = sphi 0, %s233
    %s251 = sphi 0, %s251
    %s253 = sphi 0, %s251
    %s254 = sphi 0, %s253
    %s268 = sphi 0, %s254
    %s272 = sphi 0, %s272
    %s274 = sphi 0, %s272
    %s275 = sphi 0, %s274
    %s289 = sphi 0, %s275
    %s293 = sphi 0, %s293
    %s295 = sphi 0, %s293
    %s296 = sphi 0, %s295
    %s310 = sphi 0, %s296
    %s314 = sphi 0, %s314
    %s316 = sphi 0, %s314
    %s317 = sphi 0, %s316
    %s331 = sphi 0, %s317
    %s335 = sphi 0, %s335
    %s337 = sphi 0, %s335
    %s338 = sphi 0, %s337
    %s352 = sphi 0, %s338
    %s356 = sphi 0, %s356
    %s358 = sphi 0, %s356
    %s359 = sphi 0, %s358
    %s373 = sphi 0, %s359
    %s377 = sphi 0, %s377
    %s379 = sphi 0, %s377
    %s380 = sphi 0, %s379
    %s394 = sphi 0, %s380
    %s398 = sphi 0, %s398
    %s400 = sphi 0, %s398
    %s401 = sphi 0, %s400
    %s415 = sphi 0, %s401
    %s419 = sphi 0, %s419
    %s421 = sphi 0, %s419
    %s422 = sphi 0, %s421
    %s436 = sphi 0, %s422
    %s440 = sphi 0, %s440
    %s442 = sphi 0, %s440
    %s443 = sphi 0, %s442
    %s457 = sphi 0, %s443
    %s461 = sphi 0, %s461
    %s463 = sphi 0, %s461
    %s464 = sphi 0, %s463
    %s478 = sphi 0, %s464
    %s482 = sphi 0, %s482
    %s484 = sphi 0, %s482
    %s485 = sphi 0, %s484
    %s499 = sphi 0, %s485
    %s503 = sphi 0, %s503
    %s505 = sphi 0, %s503
    %s506 = sphi 0, %s505
    %s520 = sphi 0, %s506
    %s524 = sphi 0, %s524
    %s526 = sphi 0, %s524
    %s527 = sphi 0, %s526
    %s541 = sphi 0, %s527
    %s545 = sphi 0, %s545
    %s547 = sphi 0, %s545
    %s548 = sphi 0, %s547
    %s562 = sphi 0, %s548
    %s566 = sphi 0, %s566
    %s568 = sphi 0, %s566
    %s569 = sphi 0, %s568
    %s583 = sphi 0, %s569
    %s587 = sphi 0, %s587
    %s589 = sphi 0, %s587
    %s590 = sphi 0, %s589
    %s604 = sphi 0, %s590
    %s610 = sphi 0, %s612
    %s613 = sphi 0, %s610
    %s614 = sphi 0, %s613
    %s630 = sphi 0, %s614
  $region4: #{_lambda_.1} parent=0 // loop_header_branch
    %37 = sbr.rel (%p35) target = $region8
  $region5: #{_lambda_.1} parent=0 // loop_body
    %s39 = ssub.s32 %s34, 1
    %s40 = ssub.s32 %s34, 2
    %s41 = sadd.s32 %s34, 1
    %s42 = ssub.s32 %s34, %s41
    %p43 = scmp.eq.s32.totalorder %s42, 0
    %s45 = sadd.s32 %s44, 1
    %s46 = scalar_select %p43, %s44, %s45
    %p49 = pneg %p43
    %p50 = scmp.eq.s32.totalorder %s34, 7
    %p51 = por %p49, %p50
    %p52 = scmp.ne.s32.totalorder %s44, %s47
    %p53 = scmp.eq.s32.totalorder %s34, 0
    %p54 = por %p52, %p53
    %p55 = scmp.ne.s32.totalorder %s44, %s47
    %p56 = scmp.eq.s32.totalorder %s39, 7
    %p57 = por %p55, %p56
    %p58 = scmp.ne.s32.totalorder %s47, %s48
    %p59 = scmp.eq.s32.totalorder %s39, 0
    %p60 = por %p58, %p59
    %p61 = scmp.ne.s32.totalorder %s47, %s48
    %p62 = scmp.eq.s32.totalorder %s40, 7
    %p63 = por %p61, %p62
    %p65 = scmp.ne.s32.totalorder %s48, %s64
    %p66 = scmp.eq.s32.totalorder %s40, 0
    %p67 = por %p65, %p66
    %s68 = ssub.s32 %s34, %s41
    %p69 = scmp.eq.s32.totalorder %s68, 0
    %s71 = sadd.s32 %s70, 1
    %s72 = scalar_select %p69, %s70, %s71
    %p75 = pneg %p69
    %p76 = scmp.eq.s32.totalorder %s34, 7
    %p77 = por %p75, %p76
    %p78 = scmp.ne.s32.totalorder %s70, %s73
    %p79 = scmp.eq.s32.totalorder %s34, 0
    %p80 = por %p78, %p79
    %p81 = scmp.ne.s32.totalorder %s70, %s73
    %p82 = scmp.eq.s32.totalorder %s39, 7
    %p83 = por %p81, %p82
    %p84 = scmp.ne.s32.totalorder %s73, %s74
    %p85 = scmp.eq.s32.totalorder %s39, 0
    %p86 = por %p84, %p85
    %p87 = scmp.ne.s32.totalorder %s73, %s74
    %p88 = scmp.eq.s32.totalorder %s40, 7
    %p89 = por %p87, %p88
    %p91 = scmp.ne.s32.totalorder %s74, %s90
    %p92 = scmp.eq.s32.totalorder %s40, 0
    %p93 = por %p91, %p92
    %s94 = ssub.s32 %s34, %s41
    %p95 = scmp.eq.s32.totalorder %s94, 0
    %s97 = sadd.s32 %s96, 1
    %s98 = scalar_select %p95, %s96, %s97
    %p101 = pneg %p95
    %p102 = scmp.eq.s32.totalorder %s34, 7
    %p103 = por %p101, %p102
    %p104 = scmp.ne.s32.totalorder %s96, %s99
    %p105 = scmp.eq.s32.totalorder %s34, 0
    %p106 = por %p104, %p105
    %p107 = scmp.ne.s32.totalorder %s96, %s99
    %p108 = scmp.eq.s32.totalorder %s39, 7
    %p109 = por %p107, %p108
    %p110 = scmp.ne.s32.totalorder %s99, %s100
    %p111 = scmp.eq.s32.totalorder %s39, 0
    %p112 = por %p110, %p111
    %p113 = scmp.ne.s32.totalorder %s99, %s100
    %p114 = scmp.eq.s32.totalorder %s40, 7
    %p115 = por %p113, %p114
    %p117 = scmp.ne.s32.totalorder %s100, %s116
    %p118 = scmp.eq.s32.totalorder %s40, 0
    %p119 = por %p117, %p118
    %s120 = ssub.s32 %s34, %s41
    %p121 = scmp.eq.s32.totalorder %s120, 0
    %s123 = sadd.s32 %s122, 1
    %s124 = scalar_select %p121, %s122, %s123
    %p127 = pneg %p121
    %p128 = scmp.eq.s32.totalorder %s34, 7
    %p129 = por %p127, %p128
    %p130 = scmp.ne.s32.totalorder %s122, %s125
    %p131 = scmp.eq.s32.totalorder %s34, 0
    %p132 = por %p130, %p131
    %p133 = scmp.ne.s32.totalorder %s122, %s125
    %p134 = scmp.eq.s32.totalorder %s39, 7
    %p135 = por %p133, %p134
    %p136 = scmp.ne.s32.totalorder %s125, %s126
    %p137 = scmp.eq.s32.totalorder %s39, 0
    %p138 = por %p136, %p137
    %p139 = scmp.ne.s32.totalorder %s125, %s126
    %p140 = scmp.eq.s32.totalorder %s40, 7
    %p141 = por %p139, %p140
    %p143 = scmp.ne.s32.totalorder %s126, %s142
    %p144 = scmp.eq.s32.totalorder %s40, 0
    %p145 = por %p143, %p144
    %s147 = sadd.s32 %s146, 1
    %p150 = scmp.eq.s32.totalorder %s34, 7
    %p151 = scmp.ne.s32.totalorder %s146, %s148
    %p152 = scmp.eq.s32.totalorder %s34, 0
    %p153 = por %p151, %p152
    %p154 = scmp.ne.s32.totalorder %s146, %s148
    %p155 = scmp.eq.s32.totalorder %s39, 7
    %p156 = por %p154, %p155
    %p157 = scmp.ne.s32.totalorder %s148, %s149
    %p158 = scmp.eq.s32.totalorder %s39, 0
    %p159 = por %p157, %p158
    %p160 = scmp.ne.s32.totalorder %s148, %s149
    %p161 = scmp.eq.s32.totalorder %s40, 7
    %p162 = por %p160, %p161
    %p164 = scmp.ne.s32.totalorder %s149, %s163
    %p165 = scmp.eq.s32.totalorder %s40, 0
    %p166 = por %p164, %p165
    %s168 = sadd.s32 %s167, 1
    %p171 = scmp.eq.s32.totalorder %s34, 7
    %p172 = scmp.ne.s32.totalorder %s167, %s169
    %p173 = scmp.eq.s32.totalorder %s34, 0
    %p174 = por %p172, %p173
    %p175 = scmp.ne.s32.totalorder %s167, %s169
    %p176 = scmp.eq.s32.totalorder %s39, 7
    %p177 = por %p175, %p176
    %p178 = scmp.ne.s32.totalorder %s169, %s170
    %p179 = scmp.eq.s32.totalorder %s39, 0
    %p180 = por %p178, %p179
    %p181 = scmp.ne.s32.totalorder %s169, %s170
    %p182 = scmp.eq.s32.totalorder %s40, 7
    %p183 = por %p181, %p182
    %p185 = scmp.ne.s32.totalorder %s170, %s184
    %p186 = scmp.eq.s32.totalorder %s40, 0
    %p187 = por %p185, %p186
    %s189 = sadd.s32 %s188, 1
    %p192 = scmp.eq.s32.totalorder %s34, 7
    %p193 = scmp.ne.s32.totalorder %s188, %s190
    %p194 = scmp.eq.s32.totalorder %s34, 0
    %p195 = por %p193, %p194
    %p196 = scmp.ne.s32.totalorder %s188, %s190
    %p197 = scmp.eq.s32.totalorder %s39, 7
    %p198 = por %p196, %p197
    %p199 = scmp.ne.s32.totalorder %s190, %s191
    %p200 = scmp.eq.s32.totalorder %s39, 0
    %p201 = por %p199, %p200
    %p202 = scmp.ne.s32.totalorder %s190, %s191
    %p203 = scmp.eq.s32.totalorder %s40, 7
    %p204 = por %p202, %p203
    %p206 = scmp.ne.s32.totalorder %s191, %s205
    %p207 = scmp.eq.s32.totalorder %s40, 0
    %p208 = por %p206, %p207
    %s210 = sadd.s32 %s209, 1
    %p213 = scmp.eq.s32.totalorder %s34, 7
    %p214 = scmp.ne.s32.totalorder %s209, %s211
    %p215 = scmp.eq.s32.totalorder %s34, 0
    %p216 = por %p214, %p215
    %p217 = scmp.ne.s32.totalorder %s209, %s211
    %p218 = scmp.eq.s32.totalorder %s39, 7
    %p219 = por %p217, %p218
    %p220 = scmp.ne.s32.totalorder %s211, %s212
    %p221 = scmp.eq.s32.totalorder %s39, 0
    %p222 = por %p220, %p221
    %p223 = scmp.ne.s32.totalorder %s211, %s212
    %p224 = scmp.eq.s32.totalorder %s40, 7
    %p225 = por %p223, %p224
    %p227 = scmp.ne.s32.totalorder %s212, %s226
    %p228 = scmp.eq.s32.totalorder %s40, 0
    %p229 = por %p227, %p228
    %s231 = sadd.s32 %s230, 1
    %p234 = scmp.eq.s32.totalorder %s34, 7
    %p235 = scmp.ne.s32.totalorder %s230, %s232
    %p236 = scmp.eq.s32.totalorder %s34, 0
    %p237 = por %p235, %p236
    %p238 = scmp.ne.s32.totalorder %s230, %s232
    %p239 = scmp.eq.s32.totalorder %s39, 7
    %p240 = por %p238, %p239
    %p241 = scmp.ne.s32.totalorder %s232, %s233
    %p242 = scmp.eq.s32.totalorder %s39, 0
    %p243 = por %p241, %p242
    %p244 = scmp.ne.s32.totalorder %s232, %s233
    %p245 = scmp.eq.s32.totalorder %s40, 7
    %p246 = por %p244, %p245
    %p248 = scmp.ne.s32.totalorder %s233, %s247
    %p249 = scmp.eq.s32.totalorder %s40, 0
    %p250 = por %p248, %p249
    %s252 = sadd.s32 %s251, 1
    %p255 = scmp.eq.s32.totalorder %s34, 7
    %p256 = scmp.ne.s32.totalorder %s251, %s253
    %p257 = scmp.eq.s32.totalorder %s34, 0
    %p258 = por %p256, %p257
    %p259 = scmp.ne.s32.totalorder %s251, %s253
    %p260 = scmp.eq.s32.totalorder %s39, 7
    %p261 = por %p259, %p260
    %p262 = scmp.ne.s32.totalorder %s253, %s254
    %p263 = scmp.eq.s32.totalorder %s39, 0
    %p264 = por %p262, %p263
    %p265 = scmp.ne.s32.totalorder %s253, %s254
    %p266 = scmp.eq.s32.totalorder %s40, 7
    %p267 = por %p265, %p266
    %p269 = scmp.ne.s32.totalorder %s254, %s268
    %p270 = scmp.eq.s32.totalorder %s40, 0
    %p271 = por %p269, %p270
    %s273 = sadd.s32 %s272, 1
    %p276 = scmp.eq.s32.totalorder %s34, 7
    %p277 = scmp.ne.s32.totalorder %s272, %s274
    %p278 = scmp.eq.s32.totalorder %s34, 0
    %p279 = por %p277, %p278
    %p280 = scmp.ne.s32.totalorder %s272, %s274
    %p281 = scmp.eq.s32.totalorder %s39, 7
    %p282 = por %p280, %p281
    %p283 = scmp.ne.s32.totalorder %s274, %s275
    %p284 = scmp.eq.s32.totalorder %s39, 0
    %p285 = por %p283, %p284
    %p286 = scmp.ne.s32.totalorder %s274, %s275
    %p287 = scmp.eq.s32.totalorder %s40, 7
    %p288 = por %p286, %p287
    %p290 = scmp.ne.s32.totalorder %s275, %s289
    %p291 = scmp.eq.s32.totalorder %s40, 0
    %p292 = por %p290, %p291
    %s294 = sadd.s32 %s293, 1
    %p297 = scmp.eq.s32.totalorder %s34, 7
    %p298 = scmp.ne.s32.totalorder %s293, %s295
    %p299 = scmp.eq.s32.totalorder %s34, 0
    %p300 = por %p298, %p299
    %p301 = scmp.ne.s32.totalorder %s293, %s295
    %p302 = scmp.eq.s32.totalorder %s39, 7
    %p303 = por %p301, %p302
    %p304 = scmp.ne.s32.totalorder %s295, %s296
    %p305 = scmp.eq.s32.totalorder %s39, 0
    %p306 = por %p304, %p305
    %p307 = scmp.ne.s32.totalorder %s295, %s296
    %p308 = scmp.eq.s32.totalorder %s40, 7
    %p309 = por %p307, %p308
    %p311 = scmp.ne.s32.totalorder %s296, %s310
    %p312 = scmp.eq.s32.totalorder %s40, 0
    %p313 = por %p311, %p312
    %s315 = sadd.s32 %s314, 1
    %p318 = scmp.eq.s32.totalorder %s34, 7
    %p319 = scmp.ne.s32.totalorder %s314, %s316
    %p320 = scmp.eq.s32.totalorder %s34, 0
    %p321 = por %p319, %p320
    %p322 = scmp.ne.s32.totalorder %s314, %s316
    %p323 = scmp.eq.s32.totalorder %s39, 7
    %p324 = por %p322, %p323
    %p325 = scmp.ne.s32.totalorder %s316, %s317
    %p326 = scmp.eq.s32.totalorder %s39, 0
    %p327 = por %p325, %p326
    %p328 = scmp.ne.s32.totalorder %s316, %s317
    %p329 = scmp.eq.s32.totalorder %s40, 7
    %p330 = por %p328, %p329
    %p332 = scmp.ne.s32.totalorder %s317, %s331
    %p333 = scmp.eq.s32.totalorder %s40, 0
    %p334 = por %p332, %p333
    %s336 = sadd.s32 %s335, 1
    %p339 = scmp.eq.s32.totalorder %s34, 7
    %p340 = scmp.ne.s32.totalorder %s335, %s337
    %p341 = scmp.eq.s32.totalorder %s34, 0
    %p342 = por %p340, %p341
    %p343 = scmp.ne.s32.totalorder %s335, %s337
    %p344 = scmp.eq.s32.totalorder %s39, 7
    %p345 = por %p343, %p344
    %p346 = scmp.ne.s32.totalorder %s337, %s338
    %p347 = scmp.eq.s32.totalorder %s39, 0
    %p348 = por %p346, %p347
    %p349 = scmp.ne.s32.totalorder %s337, %s338
    %p350 = scmp.eq.s32.totalorder %s40, 7
    %p351 = por %p349, %p350
    %p353 = scmp.ne.s32.totalorder %s338, %s352
    %p354 = scmp.eq.s32.totalorder %s40, 0
    %p355 = por %p353, %p354
    %s357 = sadd.s32 %s356, 1
    %p360 = scmp.eq.s32.totalorder %s34, 7
    %p361 = scmp.ne.s32.totalorder %s356, %s358
    %p362 = scmp.eq.s32.totalorder %s34, 0
    %p363 = por %p361, %p362
    %p364 = scmp.ne.s32.totalorder %s356, %s358
    %p365 = scmp.eq.s32.totalorder %s39, 7
    %p366 = por %p364, %p365
    %p367 = scmp.ne.s32.totalorder %s358, %s359
    %p368 = scmp.eq.s32.totalorder %s39, 0
    %p369 = por %p367, %p368
    %p370 = scmp.ne.s32.totalorder %s358, %s359
    %p371 = scmp.eq.s32.totalorder %s40, 7
    %p372 = por %p370, %p371
    %p374 = scmp.ne.s32.totalorder %s359, %s373
    %p375 = scmp.eq.s32.totalorder %s40, 0
    %p376 = por %p374, %p375
    %s378 = sadd.s32 %s377, 1
    %p381 = scmp.eq.s32.totalorder %s34, 7
    %p382 = scmp.ne.s32.totalorder %s377, %s379
    %p383 = scmp.eq.s32.totalorder %s34, 0
    %p384 = por %p382, %p383
    %p385 = scmp.ne.s32.totalorder %s377, %s379
    %p386 = scmp.eq.s32.totalorder %s39, 7
    %p387 = por %p385, %p386
    %p388 = scmp.ne.s32.totalorder %s379, %s380
    %p389 = scmp.eq.s32.totalorder %s39, 0
    %p390 = por %p388, %p389
    %p391 = scmp.ne.s32.totalorder %s379, %s380
    %p392 = scmp.eq.s32.totalorder %s40, 7
    %p393 = por %p391, %p392
    %p395 = scmp.ne.s32.totalorder %s380, %s394
    %p396 = scmp.eq.s32.totalorder %s40, 0
    %p397 = por %p395, %p396
    %s399 = sadd.s32 %s398, 1
    %p402 = scmp.eq.s32.totalorder %s34, 7
    %p403 = scmp.ne.s32.totalorder %s398, %s400
    %p404 = scmp.eq.s32.totalorder %s34, 0
    %p405 = por %p403, %p404
    %p406 = scmp.ne.s32.totalorder %s398, %s400
    %p407 = scmp.eq.s32.totalorder %s39, 7
    %p408 = por %p406, %p407
    %p409 = scmp.ne.s32.totalorder %s400, %s401
    %p410 = scmp.eq.s32.totalorder %s39, 0
    %p411 = por %p409, %p410
    %p412 = scmp.ne.s32.totalorder %s400, %s401
    %p413 = scmp.eq.s32.totalorder %s40, 7
    %p414 = por %p412, %p413
    %p416 = scmp.ne.s32.totalorder %s401, %s415
    %p417 = scmp.eq.s32.totalorder %s40, 0
    %p418 = por %p416, %p417
    %s420 = sadd.s32 %s419, 1
    %p423 = scmp.eq.s32.totalorder %s34, 7
    %p424 = scmp.ne.s32.totalorder %s419, %s421
    %p425 = scmp.eq.s32.totalorder %s34, 0
    %p426 = por %p424, %p425
    %p427 = scmp.ne.s32.totalorder %s419, %s421
    %p428 = scmp.eq.s32.totalorder %s39, 7
    %p429 = por %p427, %p428
    %p430 = scmp.ne.s32.totalorder %s421, %s422
    %p431 = scmp.eq.s32.totalorder %s39, 0
    %p432 = por %p430, %p431
    %p433 = scmp.ne.s32.totalorder %s421, %s422
    %p434 = scmp.eq.s32.totalorder %s40, 7
    %p435 = por %p433, %p434
    %p437 = scmp.ne.s32.totalorder %s422, %s436
    %p438 = scmp.eq.s32.totalorder %s40, 0
    %p439 = por %p437, %p438
    %s441 = sadd.s32 %s440, 1
    %p444 = scmp.eq.s32.totalorder %s34, 7
    %p445 = scmp.ne.s32.totalorder %s440, %s442
    %p446 = scmp.eq.s32.totalorder %s34, 0
    %p447 = por %p445, %p446
    %p448 = scmp.ne.s32.totalorder %s440, %s442
    %p449 = scmp.eq.s32.totalorder %s39, 7
    %p450 = por %p448, %p449
    %p451 = scmp.ne.s32.totalorder %s442, %s443
    %p452 = scmp.eq.s32.totalorder %s39, 0
    %p453 = por %p451, %p452
    %p454 = scmp.ne.s32.totalorder %s442, %s443
    %p455 = scmp.eq.s32.totalorder %s40, 7
    %p456 = por %p454, %p455
    %p458 = scmp.ne.s32.totalorder %s443, %s457
    %p459 = scmp.eq.s32.totalorder %s40, 0
    %p460 = por %p458, %p459
    %s462 = sadd.s32 %s461, 1
    %p465 = scmp.eq.s32.totalorder %s34, 7
    %p466 = scmp.ne.s32.totalorder %s461, %s463
    %p467 = scmp.eq.s32.totalorder %s34, 0
    %p468 = por %p466, %p467
    %p469 = scmp.ne.s32.totalorder %s461, %s463
    %p470 = scmp.eq.s32.totalorder %s39, 7
    %p471 = por %p469, %p470
    %p472 = scmp.ne.s32.totalorder %s463, %s464
    %p473 = scmp.eq.s32.totalorder %s39, 0
    %p474 = por %p472, %p473
    %p475 = scmp.ne.s32.totalorder %s463, %s464
    %p476 = scmp.eq.s32.totalorder %s40, 7
    %p477 = por %p475, %p476
    %p479 = scmp.ne.s32.totalorder %s464, %s478
    %p480 = scmp.eq.s32.totalorder %s40, 0
    %p481 = por %p479, %p480
    %s483 = sadd.s32 %s482, 1
    %p486 = scmp.eq.s32.totalorder %s34, 7
    %p487 = scmp.ne.s32.totalorder %s482, %s484
    %p488 = scmp.eq.s32.totalorder %s34, 0
    %p489 = por %p487, %p488
    %p490 = scmp.ne.s32.totalorder %s482, %s484
    %p491 = scmp.eq.s32.totalorder %s39, 7
    %p492 = por %p490, %p491
    %p493 = scmp.ne.s32.totalorder %s484, %s485
    %p494 = scmp.eq.s32.totalorder %s39, 0
    %p495 = por %p493, %p494
    %p496 = scmp.ne.s32.totalorder %s484, %s485
    %p497 = scmp.eq.s32.totalorder %s40, 7
    %p498 = por %p496, %p497
    %p500 = scmp.ne.s32.totalorder %s485, %s499
    %p501 = scmp.eq.s32.totalorder %s40, 0
    %p502 = por %p500, %p501
    %s504 = sadd.s32 %s503, 1
    %p507 = scmp.eq.s32.totalorder %s34, 7
    %p508 = scmp.ne.s32.totalorder %s503, %s505
    %p509 = scmp.eq.s32.totalorder %s34, 0
    %p510 = por %p508, %p509
    %p511 = scmp.ne.s32.totalorder %s503, %s505
    %p512 = scmp.eq.s32.totalorder %s39, 7
    %p513 = por %p511, %p512
    %p514 = scmp.ne.s32.totalorder %s505, %s506
    %p515 = scmp.eq.s32.totalorder %s39, 0
    %p516 = por %p514, %p515
    %p517 = scmp.ne.s32.totalorder %s505, %s506
    %p518 = scmp.eq.s32.totalorder %s40, 7
    %p519 = por %p517, %p518
    %p521 = scmp.ne.s32.totalorder %s506, %s520
    %p522 = scmp.eq.s32.totalorder %s40, 0
    %p523 = por %p521, %p522
    %s525 = sadd.s32 %s524, 1
    %p528 = scmp.eq.s32.totalorder %s34, 7
    %p529 = scmp.ne.s32.totalorder %s524, %s526
    %p530 = scmp.eq.s32.totalorder %s34, 0
    %p531 = por %p529, %p530
    %p532 = scmp.ne.s32.totalorder %s524, %s526
    %p533 = scmp.eq.s32.totalorder %s39, 7
    %p534 = por %p532, %p533
    %p535 = scmp.ne.s32.totalorder %s526, %s527
    %p536 = scmp.eq.s32.totalorder %s39, 0
    %p537 = por %p535, %p536
    %p538 = scmp.ne.s32.totalorder %s526, %s527
    %p539 = scmp.eq.s32.totalorder %s40, 7
    %p540 = por %p538, %p539
    %p542 = scmp.ne.s32.totalorder %s527, %s541
    %p543 = scmp.eq.s32.totalorder %s40, 0
    %p544 = por %p542, %p543
    %s546 = sadd.s32 %s545, 1
    %p549 = scmp.eq.s32.totalorder %s34, 7
    %p550 = scmp.ne.s32.totalorder %s545, %s547
    %p551 = scmp.eq.s32.totalorder %s34, 0
    %p552 = por %p550, %p551
    %p553 = scmp.ne.s32.totalorder %s545, %s547
    %p554 = scmp.eq.s32.totalorder %s39, 7
    %p555 = por %p553, %p554
    %p556 = scmp.ne.s32.totalorder %s547, %s548
    %p557 = scmp.eq.s32.totalorder %s39, 0
    %p558 = por %p556, %p557
    %p559 = scmp.ne.s32.totalorder %s547, %s548
    %p560 = scmp.eq.s32.totalorder %s40, 7
    %p561 = por %p559, %p560
    %p563 = scmp.ne.s32.totalorder %s548, %s562
    %p564 = scmp.eq.s32.totalorder %s40, 0
    %p565 = por %p563, %p564
    %s567 = sadd.s32 %s566, 1
    %p570 = scmp.eq.s32.totalorder %s34, 7
    %p571 = scmp.ne.s32.totalorder %s566, %s568
    %p572 = scmp.eq.s32.totalorder %s34, 0
    %p573 = por %p571, %p572
    %p574 = scmp.ne.s32.totalorder %s566, %s568
    %p575 = scmp.eq.s32.totalorder %s39, 7
    %p576 = por %p574, %p575
    %p577 = scmp.ne.s32.totalorder %s568, %s569
    %p578 = scmp.eq.s32.totalorder %s39, 0
    %p579 = por %p577, %p578
    %p580 = scmp.ne.s32.totalorder %s568, %s569
    %p581 = scmp.eq.s32.totalorder %s40, 7
    %p582 = por %p580, %p581
    %p584 = scmp.ne.s32.totalorder %s569, %s583
    %p585 = scmp.eq.s32.totalorder %s40, 0
    %p586 = por %p584, %p585
    %s588 = sadd.s32 %s587, 1
    %p591 = scmp.eq.s32.totalorder %s34, 7
    %p592 = scmp.ne.s32.totalorder %s587, %s589
    %p593 = scmp.eq.s32.totalorder %s34, 0
    %p594 = por %p592, %p593
    %p595 = scmp.ne.s32.totalorder %s587, %s589
    %p596 = scmp.eq.s32.totalorder %s39, 7
    %p597 = por %p595, %p596
    %p598 = scmp.ne.s32.totalorder %s589, %s590
    %p599 = scmp.eq.s32.totalorder %s39, 0
    %p600 = por %p598, %p599
    %p601 = scmp.ne.s32.totalorder %s589, %s590
    %p602 = scmp.eq.s32.totalorder %s40, 7
    %p603 = por %p601, %p602
    %p605 = scmp.ne.s32.totalorder %s590, %s604
    %p606 = scmp.eq.s32.totalorder %s40, 0
    %p607 = por %p605, %p606
    %s608 = ssub.s32 %s34, %s41
    %p609 = scmp.eq.s32.totalorder %s608, 0
    %s611 = sadd.s32 %s610, 1
    %s612 = scalar_select %p609, %s610, %s611
    %p615 = pneg %p609
    %p616 = scmp.eq.s32.totalorder %s34, 7
    %p617 = por %p615, %p616
    %p618 = scmp.ne.s32.totalorder %s610, %s613
    %p619 = scmp.eq.s32.totalorder %s34, 0
    %p620 = por %p618, %p619
    %p621 = scmp.ne.s32.totalorder %s610, %s613
    %p622 = scmp.eq.s32.totalorder %s39, 7
    %p623 = por %p621, %p622
    %p624 = scmp.ne.s32.totalorder %s613, %s614
    %p625 = scmp.eq.s32.totalorder %s39, 0
    %p626 = por %p624, %p625
    %p627 = scmp.ne.s32.totalorder %s613, %s614
    %p628 = scmp.eq.s32.totalorder %s40, 7
    %p629 = por %p627, %p628
    %p631 = scmp.ne.s32.totalorder %s614, %s630
    %p632 = scmp.eq.s32.totalorder %s40, 0
    %p633 = por %p631, %p632
    %p634 = scmp.le.s32.totalorder 1, %s34
    %p635 = scmp.lt.s32.totalorder %s34, 9
    %p636 = pnand %p634, %p635
    %p637 = pneg %p636
    // Predicated region
    $region9: #{_lambda_.1} parent=5 // pred_check
      _
    $region10: #{_lambda_.1} parent=5 // pred_check_branch
      %639 = sbr.rel (%p636) target = $region12
    $region11: #{_lambda_.1} parent=5 // pred_region
      %s640 = ssub.s32 %s34, 1
      // Predicated region
      $region13: #{_lambda_.1} parent=11 // pred_check
        %p641 = pneg %p159
      $region14: #{_lambda_.1} parent=11 // pred_check_branch
        %643 = sbr.rel (%p641) target = $region16
      $region15: #{_lambda_.1} parent=11 // pred_region
        _
      $region16: #{_lambda_.1} parent=11 // pred_fallthru
        _
      // Predicated region
      $region17: #{_lambda_.1} parent=11 // pred_check
        %p644 = pneg %p180
      $region18: #{_lambda_.1} parent=11 // pred_check_branch
        %646 = sbr.rel (%p644) target = $region20
      $region19: #{_lambda_.1} parent=11 // pred_region
        _
      $region20: #{_lambda_.1} parent=11 // pred_fallthru
        _
      // Predicated region
      $region21: #{_lambda_.1} parent=11 // pred_check
        %p647 = pneg %p201
      $region22: #{_lambda_.1} parent=11 // pred_check_branch
        %649 = sbr.rel (%p647) target = $region24
      $region23: #{_lambda_.1} parent=11 // pred_region
        _
      $region24: #{_lambda_.1} parent=11 // pred_fallthru
        _
      // Predicated region
      $region25: #{_lambda_.1} parent=11 // pred_check
        %p650 = pneg %p222
      $region26: #{_lambda_.1} parent=11 // pred_check_branch
        %652 = sbr.rel (%p650) target = $region28
      $region27: #{_lambda_.1} parent=11 // pred_region
        _
      $region28: #{_lambda_.1} parent=11 // pred_fallthru
        _
      // Predicated region
      $region29: #{_lambda_.1} parent=11 // pred_check
        %p653 = pneg %p243
      $region30: #{_lambda_.1} parent=11 // pred_check_branch
        %655 = sbr.rel (%p653) target = $region32
      $region31: #{_lambda_.1} parent=11 // pred_region
        _
      $region32: #{_lambda_.1} parent=11 // pred_fallthru
        _
      // Predicated region
      $region33: #{_lambda_.1} parent=11 // pred_check
        %p656 = pneg %p264
      $region34: #{_lambda_.1} parent=11 // pred_check_branch
        %658 = sbr.rel (%p656) target = $region36
      $region35: #{_lambda_.1} parent=11 // pred_region
        _
      $region36: #{_lambda_.1} parent=11 // pred_fallthru
        _
      // Predicated region
      $region37: #{_lambda_.1} parent=11 // pred_check
        %p659 = pneg %p285
      $region38: #{_lambda_.1} parent=11 // pred_check_branch
        %661 = sbr.rel (%p659) target = $region40
      $region39: #{_lambda_.1} parent=11 // pred_region
        _
      $region40: #{_lambda_.1} parent=11 // pred_fallthru
        _
      // Predicated region
      $region41: #{_lambda_.1} parent=11 // pred_check
        %p662 = pneg %p306
      $region42: #{_lambda_.1} parent=11 // pred_check_branch
        %664 = sbr.rel (%p662) target = $region44
      $region43: #{_lambda_.1} parent=11 // pred_region
        _
      $region44: #{_lambda_.1} parent=11 // pred_fallthru
        _
      // Predicated region
      $region45: #{_lambda_.1} parent=11 // pred_check
        %p665 = pneg %p327
      $region46: #{_lambda_.1} parent=11 // pred_check_branch
        %667 = sbr.rel (%p665) target = $region48
      $region47: #{_lambda_.1} parent=11 // pred_region
        _
      $region48: #{_lambda_.1} parent=11 // pred_fallthru
        _
      // Predicated region
      $region49: #{_lambda_.1} parent=11 // pred_check
        %p668 = pneg %p348
      $region50: #{_lambda_.1} parent=11 // pred_check_branch
        %670 = sbr.rel (%p668) target = $region52
      $region51: #{_lambda_.1} parent=11 // pred_region
        _
      $region52: #{_lambda_.1} parent=11 // pred_fallthru
        _
      // Predicated region
      $region53: #{_lambda_.1} parent=11 // pred_check
        %p671 = pneg %p369
      $region54: #{_lambda_.1} parent=11 // pred_check_branch
        %673 = sbr.rel (%p671) target = $region56
      $region55: #{_lambda_.1} parent=11 // pred_region
        _
      $region56: #{_lambda_.1} parent=11 // pred_fallthru
        _
      // Predicated region
      $region57: #{_lambda_.1} parent=11 // pred_check
        %p674 = pneg %p390
      $region58: #{_lambda_.1} parent=11 // pred_check_branch
        %676 = sbr.rel (%p674) target = $region60
      $region59: #{_lambda_.1} parent=11 // pred_region
        _
      $region60: #{_lambda_.1} parent=11 // pred_fallthru
        _
      // Predicated region
      $region61: #{_lambda_.1} parent=11 // pred_check
        %p677 = pneg %p411
      $region62: #{_lambda_.1} parent=11 // pred_check_branch
        %679 = sbr.rel (%p677) target = $region64
      $region63: #{_lambda_.1} parent=11 // pred_region
        _
      $region64: #{_lambda_.1} parent=11 // pred_fallthru
        _
      // Predicated region
      $region65: #{_lambda_.1} parent=11 // pred_check
        %p680 = pneg %p432
      $region66: #{_lambda_.1} parent=11 // pred_check_branch
        %682 = sbr.rel (%p680) target = $region68
      $region67: #{_lambda_.1} parent=11 // pred_region
        _
      $region68: #{_lambda_.1} parent=11 // pred_fallthru
        _
      // Predicated region
      $region69: #{_lambda_.1} parent=11 // pred_check
        %p683 = pneg %p453
      $region70: #{_lambda_.1} parent=11 // pred_check_branch
        %685 = sbr.rel (%p683) target = $region72
      $region71: #{_lambda_.1} parent=11 // pred_region
        _
      $region72: #{_lambda_.1} parent=11 // pred_fallthru
        _
      // Predicated region
      $region73: #{_lambda_.1} parent=11 // pred_check
        %p686 = pneg %p474
      $region74: #{_lambda_.1} parent=11 // pred_check_branch
        %688 = sbr.rel (%p686) target = $region76
      $region75: #{_lambda_.1} parent=11 // pred_region
        _
      $region76: #{_lambda_.1} parent=11 // pred_fallthru
        _
      // Predicated region
      $region77: #{_lambda_.1} parent=11 // pred_check
        %p689 = pneg %p495
      $region78: #{_lambda_.1} parent=11 // pred_check_branch
        %691 = sbr.rel (%p689) target = $region80
      $region79: #{_lambda_.1} parent=11 // pred_region
        _
      $region80: #{_lambda_.1} parent=11 // pred_fallthru
        _
      // Predicated region
      $region81: #{_lambda_.1} parent=11 // pred_check
        %p692 = pneg %p516
      $region82: #{_lambda_.1} parent=11 // pred_check_branch
        %694 = sbr.rel (%p692) target = $region84
      $region83: #{_lambda_.1} parent=11 // pred_region
        _
      $region84: #{_lambda_.1} parent=11 // pred_fallthru
        _
      // Predicated region
      $region85: #{_lambda_.1} parent=11 // pred_check
        %p695 = pneg %p537
      $region86: #{_lambda_.1} parent=11 // pred_check_branch
        %697 = sbr.rel (%p695) target = $region88
      $region87: #{_lambda_.1} parent=11 // pred_region
        _
      $region88: #{_lambda_.1} parent=11 // pred_fallthru
        _
      // Predicated region
      $region89: #{_lambda_.1} parent=11 // pred_check
        %p698 = pneg %p558
      $region90: #{_lambda_.1} parent=11 // pred_check_branch
        %700 = sbr.rel (%p698) target = $region92
      $region91: #{_lambda_.1} parent=11 // pred_region
        _
      $region92: #{_lambda_.1} parent=11 // pred_fallthru
        _
      // Predicated region
      $region93: #{_lambda_.1} parent=11 // pred_check
        %p701 = pneg %p579
      $region94: #{_lambda_.1} parent=11 // pred_check_branch
        %703 = sbr.rel (%p701) target = $region96
      $region95: #{_lambda_.1} parent=11 // pred_region
        _
      $region96: #{_lambda_.1} parent=11 // pred_fallthru
        _
      // Predicated region
      $region97: #{_lambda_.1} parent=11 // pred_check
        %p704 = pneg %p600
      $region98: #{_lambda_.1} parent=11 // pred_check_branch
        %706 = sbr.rel (%p704) target = $region100
      $region99: #{_lambda_.1} parent=11 // pred_region
        _
      $region100: #{_lambda_.1} parent=11 // pred_fallthru
        _
    $region12: #{_lambda_.1} parent=5 // pred_fallthru
      _
    %p707 = scmp.lt.s32.totalorder %s34, 8
    // Predicated region
    $region101: #{_lambda_.1} parent=5 // pred_check
      %p708 = pneg %p707
    $region102: #{_lambda_.1} parent=5 // pred_check_branch
      %710 = sbr.rel (%p708) target = $region104
    $region103: #{_lambda_.1} parent=5 // pred_region
      // Predicated region
      $region105: #{_lambda_.1} parent=103 // pred_check
        %p711 = pneg %p54
      $region106: #{_lambda_.1} parent=103 // pred_check_branch
        %713 = sbr.rel (%p711) target = $region108
      $region107: #{_lambda_.1} parent=103 // pred_region
        %p714 = scmp.lt.s32.totalorder %s34, 7
        %s715 = scalar_select %p714, %s34, 7
        %s716 = smul.addr %s715, 2
        %s717 = smul.addr %s716, 8
        %s718 = scalar_lea.vmem %s0, %s717
      $region108: #{_lambda_.1} parent=103 // pred_fallthru
        _
      // Predicated region
      $region109: #{_lambda_.1} parent=103 // pred_check
        %p719 = pneg %p80
      $region110: #{_lambda_.1} parent=103 // pred_check_branch
        %721 = sbr.rel (%p719) target = $region112
      $region111: #{_lambda_.1} parent=103 // pred_region
        %p722 = scmp.lt.s32.totalorder %s34, 7
        %s723 = scalar_select %p722, %s34, 7
        %s724 = smul.addr %s723, 2
        %s725 = smul.addr %s724, 8
        %s726 = scalar_lea.vmem %s1, %s725
      $region112: #{_lambda_.1} parent=103 // pred_fallthru
        _
      // Predicated region
      $region113: #{_lambda_.1} parent=103 // pred_check
        %p727 = pneg %p106
      $region114: #{_lambda_.1} parent=103 // pred_check_branch
        %729 = sbr.rel (%p727) target = $region116
      $region115: #{_lambda_.1} parent=103 // pred_region
        %p730 = scmp.lt.s32.totalorder %s34, 7
        %s731 = scalar_select %p730, %s34, 7
        %s732 = smul.addr %s731, 2
        %s733 = smul.addr %s732, 8
        %s734 = scalar_lea.vmem %s2, %s733
      $region116: #{_lambda_.1} parent=103 // pred_fallthru
        _
      // Predicated region
      $region117: #{_lambda_.1} parent=103 // pred_check
        %p735 = pneg %p132
      $region118: #{_lambda_.1} parent=103 // pred_check_branch
        %737 = sbr.rel (%p735) target = $region120
      $region119: #{_lambda_.1} parent=103 // pred_region
        %p738 = scmp.lt.s32.totalorder %s34, 7
        %s739 = scalar_select %p738, %s34, 7
        %s740 = scalar_lea.vmem %s3, %s739
      $region120: #{_lambda_.1} parent=103 // pred_fallthru
        _
    $region104: #{_lambda_.1} parent=5 // pred_fallthru
      _
    %p741 = scmp.le.s32.totalorder 1, %s34
    %p742 = scmp.lt.s32.totalorder %s34, 9
    %p743 = pnand %p741, %p742
    %p744 = pneg %p743
    // Predicated region
    $region121: #{_lambda_.1} parent=5 // pred_check
      _
    $region122: #{_lambda_.1} parent=5 // pred_check_branch
      %746 = sbr.rel (%p743) target = $region124
    $region123: #{_lambda_.1} parent=5 // pred_region
      %s747 = ssub.s32 %s34, 1
      %p748 = scmp.lt.s32.totalorder %s39, 7
      %s749 = scalar_select %p748, %s39, 7
      %s750 = smul.addr %s749, 2
      %s751 = smul.addr %s750, 8
      %s752 = scalar_lea.vmem %s0, %s751
      %p753 = pneg %p60
      %p754 = pneg %p57
      %p755 = scmp.lt.s32.totalorder %s39, 7
      %s756 = scalar_select %p755, %s39, 7
      %s757 = smul.addr %s756, 2
      %s758 = smul.addr %s757, 8
      %s759 = scalar_lea.vmem %s1, %s758
      %p760 = pneg %p86
      %p761 = pneg %p83
      %p762 = scmp.lt.s32.totalorder %s39, 7
      %s763 = scalar_select %p762, %s39, 7
      %s764 = smul.addr %s763, 2
      %s765 = smul.addr %s764, 8
      %s766 = scalar_lea.vmem %s2, %s765
      %p767 = pneg %p112
      %p768 = pneg %p109
      %p769 = scmp.lt.s32.totalorder %s39, 7
      %s770 = scalar_select %p769, %s39, 7
      %s771 = scalar_lea.vmem %s3, %s770
      %p772 = pneg %p138
      %p773 = pneg %p135
      %p774 = pneg %p159
      %p775 = pneg %p156
      %p776 = pneg %p180
      %p777 = pneg %p177
      %p778 = pneg %p201
      %p779 = pneg %p198
      %p780 = pneg %p222
      %p781 = pneg %p219
      %p782 = pneg %p243
      %p783 = pneg %p240
      %p784 = pneg %p264
      %p785 = pneg %p261
      %p786 = pneg %p285
      %p787 = pneg %p282
      %p788 = pneg %p306
      %p789 = pneg %p303
      %p790 = pneg %p327
      %p791 = pneg %p324
      %p792 = pneg %p348
      %p793 = pneg %p345
      %p794 = pneg %p369
      %p795 = pneg %p366
      %p796 = pneg %p390
      %p797 = pneg %p387
      %p798 = pneg %p411
      %p799 = pneg %p408
      %p800 = pneg %p432
      %p801 = pneg %p429
      %p802 = pneg %p453
      %p803 = pneg %p450
      %p804 = pneg %p474
      %p805 = pneg %p471
      %p806 = pneg %p495
      %p807 = pneg %p492
      %p808 = pneg %p516
      %p809 = pneg %p513
      %p810 = pneg %p537
      %p811 = pneg %p534
      %p812 = pneg %p558
      %p813 = pneg %p555
      %p814 = pneg %p579
      %p815 = pneg %p576
      %p816 = pneg %p600
      %p817 = pneg %p597
      %p818 = pneg %p626
      %p819 = pneg %p623
      %p820 = scmp.lt.s32.totalorder %s39, 7
      %s821 = scalar_select %p820, %s39, 7
      %s822 = smul.addr %s821, 2
      %s823 = smul.addr %s822, 8
      %s824 = scalar_lea.vmem %s26, %s823
      %p825 = scmp.lt.s32.totalorder %s39, 7
      %s826 = scalar_select %p825, %s39, 7
      %s827 = smul.addr %s826, 2
      %s828 = smul.addr %s827, 8
      %s829 = scalar_lea.vmem %s0, %s828
      %p830 = scmp.lt.s32.totalorder %s39, 7
      %s831 = scalar_select %p830, %s39, 7
      %s832 = smul.addr %s831, 2
      %s833 = smul.addr %s832, 8
      %s834 = scalar_lea.vmem %s1, %s833
      %p835 = scmp.lt.s32.totalorder %s39, 7
      %s836 = scalar_select %p835, %s39, 7
      %s837 = smul.addr %s836, 2
      %s838 = smul.addr %s837, 8
      %s839 = scalar_lea.vmem %s2, %s838
      %p840 = scmp.lt.s32.totalorder %s39, 7
      %s841 = scalar_select %p840, %s39, 7
      %s842 = scalar_lea.vmem %s3, %s841
      %p843 = scmp.lt.s32.totalorder %s39, 7
      %s844 = scalar_select %p843, %s39, 7
      %s845 = smul.addr %s844, 2
      %s846 = smul.addr %s845, 8
      %s847 = scalar_lea.vmem %s26, %s846
      %v849 = vld [vmem:[%s829] sm:$0xff]
      %v850 = vld [vmem:[%s829 + $0x8] sm:$0x1]
      %v851 = vpack.c.bf16 %v850, %v849
      %v852 = vld [vmem:[%s834] sm:$0xff]
      %v853 = vld [vmem:[%s834 + $0x8] sm:$0x1]
      %v854 = vpack.c.bf16 %v853, %v852
      %v855 = vld [vmem:[%s4] sm:$0x3]
      %v856 = vld [vmem:[%s5] sm:$0x1]
      %v858 = vlaneseq
      %v859 = vshrl.u32 %v858, 7
      %v860 = vsub.s32 0, %v859
      %v861 = vrot.slane %v856, %v860
      %vm863 = vcmask 31744
      %v865 = vsel %vm863, %v851, 0
      %vm867 = vcmask 1041408
      %v869 = vsel %vm867, %v855, 0
      %871 = vmatprep.subr.bf16.mxu0 0
      %872 = vmatpush1.bf16.msra.mxu0 %v869
      %873 = vmatprep.subr.bf16.mxu0 0
      %874 = vmatpush1.bf16.msra.mxu0 0
      %875 = vmatprep.subr.bf16.mxu0 0
      %876 = vmatpush1.bf16.msra.mxu0 0
      %877 = vmatprep.subr.bf16.mxu0 0
      %878 = vmatpush1.bf16.msra.mxu0 0
      %879 = vmatprep.subr.bf16.mxu0 0
      %880 = vmatpush1.bf16.msra.mxu0 0
      %881 = vmatprep.subr.bf16.mxu0 0
      %882 = vmatpush1.bf16.msra.mxu0 0
      %883 = vmatprep.subr.bf16.mxu0 0
      %884 = vmatpush1.bf16.msra.mxu0 0
      %885 = vmatprep.subr.bf16.mxu0 0
      %886 = vmatpush1.bf16.msra.mxu0 0
      %887 = vmatprep.subr.bf16.mxu0 0
      %888 = vmatpush1.bf16.msra.mxu0 0
      %889 = vmatprep.subr.bf16.mxu0 0
      %890 = vmatpush1.bf16.msra.mxu0 0
      %891 = vmatprep.subr.bf16.mxu0 0
      %892 = vmatpush1.bf16.msra.mxu0 0
      %893 = vmatprep.subr.bf16.mxu0 0
      %894 = vmatpush1.bf16.msra.mxu0 0
      %895 = vmatprep.subr.bf16.mxu0 0
      %896 = vmatpush1.bf16.msra.mxu0 0
      %897 = vmatprep.subr.bf16.mxu0 0
      %898 = vmatpush1.bf16.msra.mxu0 0
      %899 = vmatprep.subr.bf16.mxu0 0
      %900 = vmatpush1.bf16.msra.mxu0 0
      %901 = vmatprep.subr.bf16.mxu0 0
      %902 = vmatpush1.bf16.msra.mxu0 0
      %903 = vmatprep.mubr.bf16.mxu0 0
      %904 = vmatmul.mubr.bf16.gmra.mrb[0].mxu0 %v865
      %v905 = vpop.f32.mrb[0].mxu0
      %v906 = vadd.f32 %v861, %v905
      %v907 = vpop.f32.mrb[0].mxu0
      %v908 = vpop.f32.mrb[0].mxu0
      %v909 = vadd.f32 %v861, %v908
      %v910 = vpop.f32.mrb[0].mxu0
      %911 = vdwg.mxu0
      %v912 = vld [vmem:[%s6] sm:$0x3]
      %v913 = vld [vmem:[%s7] sm:$0x1]
      %v915 = vlaneseq
      %v916 = vshrl.u32 %v915, 7
      %v917 = vsub.s32 0, %v916
      %v918 = vrot.slane %v913, %v917
      %vm920 = vcmask 23552
      %v922 = vsel %vm920, %v854, 0
      %vm924 = vcmask 1040384
      %v925 = vsel %vm924, 4294967295, 65535
      %v926 = vsel %vm867, %v925, 0
      %v928 = vand.u32 %v912, %v926
      %930 = vmatprep.subr.bf16.mxu0 0
      %931 = vmatpush1.bf16.msra.mxu0 %v928
      %932 = vmatprep.subr.bf16.mxu0 0
      %933 = vmatpush1.bf16.msra.mxu0 0
      %934 = vmatprep.subr.bf16.mxu0 0
      %935 = vmatpush1.bf16.msra.mxu0 0
      %936 = vmatprep.subr.bf16.mxu0 0
      %937 = vmatpush1.bf16.msra.mxu0 0
      %938 = vmatprep.subr.bf16.mxu0 0
      %939 = vmatpush1.bf16.msra.mxu0 0
      %940 = vmatprep.subr.bf16.mxu0 0
      %941 = vmatpush1.bf16.msra.mxu0 0
      %942 = vmatprep.subr.bf16.mxu0 0
      %943 = vmatpush1.bf16.msra.mxu0 0
      %944 = vmatprep.subr.bf16.mxu0 0
      %945 = vmatpush1.bf16.msra.mxu0 0
      %946 = vmatprep.subr.bf16.mxu0 0
      %947 = vmatpush1.bf16.msra.mxu0 0
      %948 = vmatprep.subr.bf16.mxu0 0
      %949 = vmatpush1.bf16.msra.mxu0 0
      %950 = vmatprep.subr.bf16.mxu0 0
      %951 = vmatpush1.bf16.msra.mxu0 0
      %952 = vmatprep.subr.bf16.mxu0 0
      %953 = vmatpush1.bf16.msra.mxu0 0
      %954 = vmatprep.subr.bf16.mxu0 0
      %955 = vmatpush1.bf16.msra.mxu0 0
      %956 = vmatprep.subr.bf16.mxu0 0
      %957 = vmatpush1.bf16.msra.mxu0 0
      %958 = vmatprep.subr.bf16.mxu0 0
      %959 = vmatpush1.bf16.msra.mxu0 0
      %960 = vmatprep.subr.bf16.mxu0 0
      %961 = vmatpush1.bf16.msra.mxu0 0
      %962 = vmatprep.mubr.bf16.mxu0 0
      %963 = vmatmul.mubr.bf16.gmra.mrb[0].mxu0 %v922
      %v964 = vpop.f32.mrb[0].mxu0
      %v965 = vadd.f32 %v918, %v964
      %v966 = vpop.f32.mrb[0].mxu0
      %v967 = vpop.f32.mrb[0].mxu0
      %v968 = vadd.f32 %v918, %v967
      %v969 = vpop.f32.mrb[0].mxu0
      %970 = vdwg.mxu0
      %v971 = vadd.f32 %v906, %v965
      %v972 = vadd.f32 %v909, %v968
      %v973 = vld [vmem:[%s839] sm:$0xff]
      %v974 = vld [vmem:[%s839 + $0x8] sm:$0x1]
      %v975 = vadd.f32 %v971, %v973
      %v976 = vadd.f32 %v972, %v974
      %v977 = vld [vmem:[%s8] sm:$0x1]
      %v978 = vld [vmem:[%s9] sm:$0x1]
      %vm979 = vcmask 261120
      %v980 = vsel %vm979, %v975, 0.0
      %981 = vadd.xlane.f32.xlu0 %v980
      %v982 = vpop.xlane.xlu0 %981
      %vm983 = vcmask 253952
      %v984 = vsel %vm983, %v976, 0.0
      %985 = vadd.xlane.f32.xlu0 %v984
      %v986 = vpop.xlane.xlu0 %985
      %v987 = vrcp.pop 32.0
      %v988 = vmul.f32 %v982, %v987
      %v989 = vmul.f32 %v986, %v987
      %v990 = vsub.f32 %v975, %v988
      %v991 = vsub.f32 %v976, %v989
      %v992 = vmul.f32 %v990, %v990
      %v993 = vmul.f32 %v991, %v991
      %v994 = vsel %vm979, %v992, 0.0
      %995 = vadd.xlane.f32.xlu0 %v994
      %v996 = vpop.xlane.xlu0 %995
      %v997 = vsel %vm983, %v993, 0.0
      %998 = vadd.xlane.f32.xlu0 %v997
      %v999 = vpop.xlane.xlu0 %998
      %v1000 = vmul.f32 %v996, %v987
      %v1001 = vmul.f32 %v999, %v987
      %v1002 = vadd.f32 %v1000, 1e-05
      %v1003 = vadd.f32 %v1001, 1e-05
      %v1004 = vrsqrt.pop %v1002
      %v1005 = vrsqrt.pop %v1003
      %v1006 = vmul.f32 %v990, %v1004
      %v1007 = vmul.f32 %v991, %v1005
      %v1009 = vlaneseq
      %v1010 = vshrl.u32 %v1009, 7
      %v1011 = vsub.s32 0, %v1010
      %v1012 = vrot.slane %v977, %v1011
      %v1014 = vmul.f32 %v1006, %v1012
      %v1015 = vmul.f32 %v1007, %v1012
      %v1017 = vlaneseq
      %v1018 = vshrl.u32 %v1017, 7
      %v1019 = vsub.s32 0, %v1018
      %v1020 = vrot.slane %v978, %v1019
      %v1022 = vadd.f32 %v1014, %v1020
      %v1023 = vadd.f32 %v1015, %v1020
      %v1024 = vpack.c.bf16 %v1023, %v1022
      %v1025 = vld [vmem:[%s10] sm:$0xf]
      %v1026 = vld [vmem:[%s10 + $0x4] sm:$0xf]
      %v1027 = vld [vmem:[%s10 + $0x8] sm:$0xf]
      %v1028 = vld [vmem:[%s10 + $0xc] sm:$0xf]
      %v1029 = vld [vmem:[%s11] sm:$0x1]
      %v1031 = vlaneseq
      %v1032 = vshrl.u32 %v1031, 7
      %v1033 = vsub.s32 0, %v1032
      %v1034 = vrot.slane %v1029, %v1033
      %v1040 = vunpack.c.l.b16 %v1025
      %v1041 = vunpack.c.l.b16 %v1026
      %v1042 = vunpack.c.l.b16 %v1027
      %v1043 = vunpack.c.l.b16 %v1028
      %v1044 = vpack.c.b16 %v1041, %v1040
      %v1045 = vpack.c.b16 %v1043, %v1042
      %v1049 = vsel %vm979, %v1024, 0
      %1051 = vmatprep.subr.bf16.mxu0 0
      %1052 = vmatpush1.bf16.msra.mxu0 %v1044
      %1053 = vmatprep.subr.bf16.mxu0 0
      %1054 = vmatpush1.bf16.msra.mxu0 %v1045
      %1055 = vmatprep.subr.bf16.mxu0 0
      %1056 = vmatpush1.bf16.msra.mxu0 0
      %1057 = vmatprep.subr.bf16.mxu0 0
      %1058 = vmatpush1.bf16.msra.mxu0 0
      %1059 = vmatprep.subr.bf16.mxu0 0
      %1060 = vmatpush1.bf16.msra.mxu0 0
      %1061 = vmatprep.subr.bf16.mxu0 0
      %1062 = vmatpush1.bf16.msra.mxu0 0
      %1063 = vmatprep.subr.bf16.mxu0 0
      %1064 = vmatpush1.bf16.msra.mxu0 0
      %1065 = vmatprep.subr.bf16.mxu0 0
      %1066 = vmatpush1.bf16.msra.mxu0 0
      %1067 = vmatprep.subr.bf16.mxu0 0
      %1068 = vmatpush1.bf16.msra.mxu0 0
      %1069 = vmatprep.subr.bf16.mxu0 0
      %1070 = vmatpush1.bf16.msra.mxu0 0
      %1071 = vmatprep.subr.bf16.mxu0 0
      %1072 = vmatpush1.bf16.msra.mxu0 0
      %1073 = vmatprep.subr.bf16.mxu0 0
      %1074 = vmatpush1.bf16.msra.mxu0 0
      %1075 = vmatprep.subr.bf16.mxu0 0
      %1076 = vmatpush1.bf16.msra.mxu0 0
      %1077 = vmatprep.subr.bf16.mxu0 0
      %1078 = vmatpush1.bf16.msra.mxu0 0
      %1079 = vmatprep.subr.bf16.mxu0 0
      %1080 = vmatpush1.bf16.msra.mxu0 0
      %1081 = vmatprep.subr.bf16.mxu0 0
      %1082 = vmatpush1.bf16.msra.mxu0 0
      %1083 = vmatprep.mubr.bf16.mxu0 0
      %1084 = vmatmul.mubr.bf16.gmra.mrb[0].mxu0 %v1049
      %v1085 = vpop.f32.mrb[0].mxu0
      %v1086 = vadd.f32 %v1034, %v1085
      %v1087 = vpop.f32.mrb[0].mxu0
      %v1088 = vpop.f32.mrb[0].mxu0
      %v1089 = vadd.f32 %v1034, %v1088
      %v1090 = vpop.f32.mrb[0].mxu0
      %1091 = vdwg.mxu0
      %1094 = vrot.lane.b32.xlu0 %v1086, 96
      %v1095 = vpop.permute.xlu0 %1094
      %1096 = vrot.lane.b32.xlu0 %v1089, 96
      %v1097 = vpop.permute.xlu0 %1096
      %vm1098 = vcmask 64512
      %v1099 = vsel %vm1098, %v1086, 0
      %v1101 = vsel %vm1098, %v1089, 0
      %v1103 = vsel %vm1098, %v1095, 0
      %v1105 = vsel %vm1098, %v1097, 0
      %1107 = vmatprep.subr.mxu0 0.0
      %1108 = vmatpush1.xpose.msra.mxu0 %v1103
      %1109 = vmatprep.subr.mxu0 0.0
      %1110 = vmatpush1.xpose.msra.mxu0 %v1105
      %1111 = vmatprep.subr.mxu0 0.0
      %1112 = vmatpush1.xpose.msra.mxu0 0.0
      %1113 = vmatprep.subr.mxu0 0.0
      %1114 = vmatpush1.xpose.msra.mxu0 0.0
      %1115 = vmatprep.subr.mxu0 0.0
      %1116 = vmatpush1.xpose.msra.mxu0 0.0
      %1117 = vmatprep.subr.mxu0 0.0
      %1118 = vmatpush1.xpose.msra.mxu0 0.0
      %1119 = vmatprep.subr.mxu0 0.0
      %1120 = vmatpush1.xpose.msra.mxu0 0.0
      %1121 = vmatprep.subr.mxu0 0.0
      %1122 = vmatpush1.xpose.msra.mxu0 0.0
      %1123 = vmatprep.subr.mxu0 0.0
      %1124 = vmatpush1.xpose.msra.mxu0 0.0
      %1125 = vmatprep.subr.mxu0 0.0
      %1126 = vmatpush1.xpose.msra.mxu0 0.0
      %1127 = vmatprep.subr.mxu0 0.0
      %1128 = vmatpush1.xpose.msra.mxu0 0.0
      %1129 = vmatprep.subr.mxu0 0.0
      %1130 = vmatpush1.xpose.msra.mxu0 0.0
      %1131 = vmatprep.subr.mxu0 0.0
      %1132 = vmatpush1.xpose.msra.mxu0 0.0
      %1133 = vmatprep.subr.mxu0 0.0
      %1134 = vmatpush1.xpose.msra.mxu0 0.0
      %1135 = vmatprep.subr.mxu0 0.0
      %1136 = vmatpush1.xpose.msra.mxu0 0.0
      %1137 = vmatprep.subr.mxu0 0.0
      %1138 = vmatpush1.xpose.msra.mxu0 0.0
      %1139 = vmatprep.subr.mxu0 0.0
      %1140 = vmatpush1.xpose.msra.mxu0 0.0
      %1141 = vmatprep.subr.mxu0 0.0
      %1142 = vmatpush1.xpose.msra.mxu0 0.0
      %1143 = vmatprep.subr.mxu0 0.0
      %1144 = vmatpush1.xpose.msra.mxu0 0.0
      %1145 = vmatprep.subr.mxu0 0.0
      %1146 = vmatpush1.xpose.msra.mxu0 0.0
      %1147 = vmatprep.subr.mxu0 0.0
      %1148 = vmatpush1.xpose.msra.mxu0 0.0
      %1149 = vmatprep.subr.mxu0 0.0
      %1150 = vmatpush1.xpose.msra.mxu0 0.0
      %1151 = vmatprep.subr.mxu0 0.0
      %1152 = vmatpush1.xpose.msra.mxu0 0.0
      %1153 = vmatprep.subr.mxu0 0.0
      %1154 = vmatpush1.xpose.msra.mxu0 0.0
      %1155 = vmatprep.subr.mxu0 0.0
      %1156 = vmatpush1.xpose.msra.mxu0 0.0
      %1157 = vmatprep.subr.mxu0 0.0
      %1158 = vmatpush1.xpose.msra.mxu0 0.0
      %1159 = vmatprep.subr.mxu0 0.0
      %1160 = vmatpush1.xpose.msra.mxu0 0.0
      %1161 = vmatprep.subr.mxu0 0.0
      %1162 = vmatpush1.xpose.msra.mxu0 0.0
      %1163 = vmatprep.subr.mxu0 0.0
      %1164 = vmatpush1.xpose.msra.mxu0 0.0
      %1165 = vmatprep.subr.mxu0 0.0
      %1166 = vmatpush1.xpose.msra.mxu0 0.0
      %1167 = vmatprep.subr.mxu0 0.0
      %1168 = vmatpush1.xpose.msra.mxu0 0.0
      %1169 = vmatprep.subr.mxu0 0.0
      %1170 = vmatpush1.xpose.msra.mxu0 0.0
      %1171 = vmatprep.mubr.f32.mxu0 0.0
      %1172 = vmatmul.mubr.f32.gmra.mrb[0].mxu0 %v1099
      %v1173 = vpop.f32.mrb[0].mxu0
      %v1174 = vadd.f32 0.0, %v1173
      %v1175 = vpop.f32.mrb[0].mxu0
      %1176 = vmatprep.mubr.f32.mxu0 0.0
      %1177 = vmatmul.mubr.f32.gmra.mrb[0].mxu0 %v1101
      %v1178 = vpop.f32.mrb[0].mxu0
      %v1179 = vadd.f32 0.0, %v1178
      %v1180 = vpop.f32.mrb[0].mxu0
      %1181 = vdwg.mxu0
      %v1182 = vmul.f32 %v1174, 0.35355338
      %v1183 = vmul.f32 %v1179, 0.35355338
      %vm1184 = vcmask 72704
      %v1185 = vsel %vm1184, %v1182, -inf
      %1186 = vmax.xlane.f32.xlu0 %v1185
      %v1187 = vpop.xlane.xlu0 %1186
      %vm1188 = vcmask 65536
      %v1189 = vsel %vm1188, %v1183, -inf
      %1190 = vmax.xlane.f32.xlu0 %v1189
      %v1191 = vpop.xlane.xlu0 %1190
      %v1192 = vsub.f32 %v1182, %v1187
      %v1193 = vsub.f32 %v1183, %v1191
      %v1194 = vmul.f32 %v1192, 1.442695
      %v1195 = vpow.pop %v1194
      %v1196 = vmul.f32 %v1193, 1.442695
      %v1197 = vpow.pop %v1196
      %v1198 = vsel %vm1184, %v1195, 0.0
      %1199 = vadd.xlane.f32.xlu0 %v1198
      %v1200 = vpop.xlane.xlu0 %1199
      %v1201 = vsel %vm1188, %v1197, 0.0
      %1202 = vadd.xlane.f32.xlu0 %v1201
      %v1203 = vpop.xlane.xlu0 %1202
      %v1204 = vrcp.pop %v1200
      %v1205 = vmul.f32 %v1195, %v1204
      %v1206 = vrcp.pop %v1203
      %v1207 = vmul.f32 %v1197, %v1206
      %1208 = vrot.lane.b32.xlu0 %v1086, 64
      %v1209 = vpop.permute.xlu0 %1208
      %1210 = vrot.lane.b32.xlu0 %v1089, 64
      %v1211 = vpop.permute.xlu0 %1210
      %v1214 = vsel %vm1184, %v1205, 0
      %v1217 = vsel %vm1184, %v1207, 0
      %v1219 = vsel %vm924, %v1211, 0
      %1221 = vmatprep.subr.mxu0 0.0
      %1222 = vmatpush1.msra.mxu0 %v1209
      %1223 = vmatprep.subr.mxu0 0.0
      %1224 = vmatpush1.msra.mxu0 %v1219
      %1225 = vmatprep.subr.mxu0 0.0
      %1226 = vmatpush1.msra.mxu0 0.0
      %1227 = vmatprep.subr.mxu0 0.0
      %1228 = vmatpush1.msra.mxu0 0.0
      %1229 = vmatprep.subr.mxu0 0.0
      %1230 = vmatpush1.msra.mxu0 0.0
      %1231 = vmatprep.subr.mxu0 0.0
      %1232 = vmatpush1.msra.mxu0 0.0
      %1233 = vmatprep.subr.mxu0 0.0
      %1234 = vmatpush1.msra.mxu0 0.0
      %1235 = vmatprep.subr.mxu0 0.0
      %1236 = vmatpush1.msra.mxu0 0.0
      %1237 = vmatprep.subr.mxu0 0.0
      %1238 = vmatpush1.msra.mxu0 0.0
      %1239 = vmatprep.subr.mxu0 0.0
      %1240 = vmatpush1.msra.mxu0 0.0
      %1241 = vmatprep.subr.mxu0 0.0
      %1242 = vmatpush1.msra.mxu0 0.0
      %1243 = vmatprep.subr.mxu0 0.0
      %1244 = vmatpush1.msra.mxu0 0.0
      %1245 = vmatprep.subr.mxu0 0.0
      %1246 = vmatpush1.msra.mxu0 0.0
      %1247 = vmatprep.subr.mxu0 0.0
      %1248 = vmatpush1.msra.mxu0 0.0
      %1249 = vmatprep.subr.mxu0 0.0
      %1250 = vmatpush1.msra.mxu0 0.0
      %1251 = vmatprep.subr.mxu0 0.0
      %1252 = vmatpush1.msra.mxu0 0.0
      %1253 = vmatprep.subr.mxu0 0.0
      %1254 = vmatpush1.msra.mxu0 0.0
      %1255 = vmatprep.subr.mxu0 0.0
      %1256 = vmatpush1.msra.mxu0 0.0
      %1257 = vmatprep.subr.mxu0 0.0
      %1258 = vmatpush1.msra.mxu0 0.0
      %1259 = vmatprep.subr.mxu0 0.0
      %1260 = vmatpush1.msra.mxu0 0.0
      %1261 = vmatprep.subr.mxu0 0.0
      %1262 = vmatpush1.msra.mxu0 0.0
      %1263 = vmatprep.subr.mxu0 0.0
      %1264 = vmatpush1.msra.mxu0 0.0
      %1265 = vmatprep.subr.mxu0 0.0
      %1266 = vmatpush1.msra.mxu0 0.0
      %1267 = vmatprep.subr.mxu0 0.0
      %1268 = vmatpush1.msra.mxu0 0.0
      %1269 = vmatprep.subr.mxu0 0.0
      %1270 = vmatpush1.msra.mxu0 0.0
      %1271 = vmatprep.subr.mxu0 0.0
      %1272 = vmatpush1.msra.mxu0 0.0
      %1273 = vmatprep.subr.mxu0 0.0
      %1274 = vmatpush1.msra.mxu0 0.0
      %1275 = vmatprep.subr.mxu0 0.0
      %1276 = vmatpush1.msra.mxu0 0.0
      %1277 = vmatprep.subr.mxu0 0.0
      %1278 = vmatpush1.msra.mxu0 0.0
      %1279 = vmatprep.subr.mxu0 0.0
      %1280 = vmatpush1.msra.mxu0 0.0
      %1281 = vmatprep.subr.mxu0 0.0
      %1282 = vmatpush1.msra.mxu0 0.0
      %1283 = vmatprep.subr.mxu0 0.0
      %1284 = vmatpush1.msra.mxu0 0.0
      %1285 = vmatprep.mubr.f32.mxu0 0.0
      %1286 = vmatmul.mubr.f32.gmra.mrb[0].mxu0 %v1214
      %v1287 = vpop.f32.mrb[0].mxu0
      %v1288 = vadd.f32 0.0, %v1287
      %v1289 = vpop.f32.mrb[0].mxu0
      %1290 = vmatprep.mubr.f32.mxu0 0.0
      %1291 = vmatmul.mubr.f32.gmra.mrb[0].mxu0 %v1217
      %v1292 = vpop.f32.mrb[0].mxu0
      %v1293 = vadd.f32 0.0, %v1292
      %v1294 = vpop.f32.mrb[0].mxu0
      %1295 = vdwg.mxu0
      %1296 = vrot.lane.b32.xlu0 %v1086, 120
      %v1297 = vpop.permute.xlu0 %1296
      %1298 = vrot.lane.b32.xlu0 %v1089, 120
      %v1299 = vpop.permute.xlu0 %1298
      %1300 = vrot.lane.b32.xlu0 %v1086, 88
      %v1301 = vpop.permute.xlu0 %1300
      %1302 = vrot.lane.b32.xlu0 %v1089, 88
      %v1303 = vpop.permute.xlu0 %1302
      %v1304 = vsel %vm1098, %v1297, 0
      %v1306 = vsel %vm1098, %v1299, 0
      %v1308 = vsel %vm1098, %v1301, 0
      %v1310 = vsel %vm1098, %v1303, 0
      %1312 = vmatprep.subr.mxu0 0.0
      %1313 = vmatpush1.xpose.msra.mxu0 %v1308
      %1314 = vmatprep.subr.mxu0 0.0
      %1315 = vmatpush1.xpose.msra.mxu0 %v1310
      %1316 = vmatprep.subr.mxu0 0.0
      %1317 = vmatpush1.xpose.msra.mxu0 0.0
      %1318 = vmatprep.subr.mxu0 0.0
      %1319 = vmatpush1.xpose.msra.mxu0 0.0
      %1320 = vmatprep.subr.mxu0 0.0
      %1321 = vmatpush1.xpose.msra.mxu0 0.0
      %1322 = vmatprep.subr.mxu0 0.0
      %1323 = vmatpush1.xpose.msra.mxu0 0.0
      %1324 = vmatprep.subr.mxu0 0.0
      %1325 = vmatpush1.xpose.msra.mxu0 0.0
      %1326 = vmatprep.subr.mxu0 0.0
      %1327 = vmatpush1.xpose.msra.mxu0 0.0
      %1328 = vmatprep.subr.mxu0 0.0
      %1329 = vmatpush1.xpose.msra.mxu0 0.0
      %1330 = vmatprep.subr.mxu0 0.0
      %1331 = vmatpush1.xpose.msra.mxu0 0.0
      %1332 = vmatprep.subr.mxu0 0.0
      %1333 = vmatpush1.xpose.msra.mxu0 0.0
      %1334 = vmatprep.subr.mxu0 0.0
      %1335 = vmatpush1.xpose.msra.mxu0 0.0
      %1336 = vmatprep.subr.mxu0 0.0
      %1337 = vmatpush1.xpose.msra.mxu0 0.0
      %1338 = vmatprep.subr.mxu0 0.0
      %1339 = vmatpush1.xpose.msra.mxu0 0.0
      %1340 = vmatprep.subr.mxu0 0.0
      %1341 = vmatpush1.xpose.msra.mxu0 0.0
      %1342 = vmatprep.subr.mxu0 0.0
      %1343 = vmatpush1.xpose.msra.mxu0 0.0
      %1344 = vmatprep.subr.mxu0 0.0
      %1345 = vmatpush1.xpose.msra.mxu0 0.0
      %1346 = vmatprep.subr.mxu0 0.0
      %1347 = vmatpush1.xpose.msra.mxu0 0.0
      %1348 = vmatprep.subr.mxu0 0.0
      %1349 = vmatpush1.xpose.msra.mxu0 0.0
      %1350 = vmatprep.subr.mxu0 0.0
      %1351 = vmatpush1.xpose.msra.mxu0 0.0
      %1352 = vmatprep.subr.mxu0 0.0
      %1353 = vmatpush1.xpose.msra.mxu0 0.0
      %1354 = vmatprep.subr.mxu0 0.0
      %1355 = vmatpush1.xpose.msra.mxu0 0.0
      %1356 = vmatprep.subr.mxu0 0.0
      %1357 = vmatpush1.xpose.msra.mxu0 0.0
      %1358 = vmatprep.subr.mxu0 0.0
      %1359 = vmatpush1.xpose.msra.mxu0 0.0
      %1360 = vmatprep.subr.mxu0 0.0
      %1361 = vmatpush1.xpose.msra.mxu0 0.0
      %1362 = vmatprep.subr.mxu0 0.0
      %1363 = vmatpush1.xpose.msra.mxu0 0.0
      %1364 = vmatprep.subr.mxu0 0.0
      %1365 = vmatpush1.xpose.msra.mxu0 0.0
      %1366 = vmatprep.subr.mxu0 0.0
      %1367 = vmatpush1.xpose.msra.mxu0 0.0
      %1368 = vmatprep.subr.mxu0 0.0
      %1369 = vmatpush1.xpose.msra.mxu0 0.0
      %1370 = vmatprep.subr.mxu0 0.0
      %1371 = vmatpush1.xpose.msra.mxu0 0.0
      %1372 = vmatprep.subr.mxu0 0.0
      %1373 = vmatpush1.xpose.msra.mxu0 0.0
      %1374 = vmatprep.subr.mxu0 0.0
      %1375 = vmatpush1.xpose.msra.mxu0 0.0
      %1376 = vmatprep.mubr.f32.mxu0 0.0
      %1377 = vmatmul.mubr.f32.gmra.mrb[0].mxu0 %v1304
      %v1378 = vpop.f32.mrb[0].mxu0
      %v1379 = vadd.f32 0.0, %v1378
      %v1380 = vpop.f32.mrb[0].mxu0
      %1381 = vmatprep.mubr.f32.mxu0 0.0
      %1382 = vmatmul.mubr.f32.gmra.mrb[0].mxu0 %v1306
      %v1383 = vpop.f32.mrb[0].mxu0
      %v1384 = vadd.f32 0.0, %v1383
      %v1385 = vpop.f32.mrb[0].mxu0
      %1386 = vdwg.mxu0
      %v1387 = vmul.f32 %v1379, 0.35355338
      %v1388 = vmul.f32 %v1384, 0.35355338
      %v1389 = vsel %vm1184, %v1387, -inf
      %1390 = vmax.xlane.f32.xlu0 %v1389
      %v1391 = vpop.xlane.xlu0 %1390
      %v1392 = vsel %vm1188, %v1388, -inf
      %1393 = vmax.xlane.f32.xlu0 %v1392
      %v1394 = vpop.xlane.xlu0 %1393
      %v1395 = vsub.f32 %v1387, %v1391
      %v1396 = vsub.f32 %v1388, %v1394
      %v1397 = vmul.f32 %v1395, 1.442695
      %v1398 = vpow.pop %v1397
      %v1399 = vmul.f32 %v1396, 1.442695
      %v1400 = vpow.pop %v1399
      %v1401 = vsel %vm1184, %v1398, 0.0
      %1402 = vadd.xlane.f32.xlu0 %v1401
      %v1403 = vpop.xlane.xlu0 %1402
      %v1404 = vsel %vm1188, %v1400, 0.0
      %1405 = vadd.xlane.f32.xlu0 %v1404
      %v1406 = vpop.xlane.xlu0 %1405
      %v1407 = vrcp.pop %v1403
      %v1408 = vmul.f32 %v1398, %v1407
      %v1409 = vrcp.pop %v1406
      %v1410 = vmul.f32 %v1400, %v1409
      %1411 = vrot.lane.b32.xlu0 %v1086, 56
      %v1412 = vpop.permute.xlu0 %1411
      %1413 = vrot.lane.b32.xlu0 %v1089, 56
      %v1414 = vpop.permute.xlu0 %1413
      %v1417 = vsel %vm1184, %v1408, 0
      %v1420 = vsel %vm1184, %v1410, 0
      %v1422 = vsel %vm924, %v1414, 0
      %1424 = vmatprep.subr.mxu0 0.0
      %1425 = vmatpush1.msra.mxu0 %v1412
      %1426 = vmatprep.subr.mxu0 0.0
      %1427 = vmatpush1.msra.mxu0 %v1422
      %1428 = vmatprep.subr.mxu0 0.0
      %1429 = vmatpush1.msra.mxu0 0.0
      %1430 = vmatprep.subr.mxu0 0.0
      %1431 = vmatpush1.msra.mxu0 0.0
      %1432 = vmatprep.subr.mxu0 0.0
      %1433 = vmatpush1.msra.mxu0 0.0
      %1434 = vmatprep.subr.mxu0 0.0
      %1435 = vmatpush1.msra.mxu0 0.0
      %1436 = vmatprep.subr.mxu0 0.0
      %1437 = vmatpush1.msra.mxu0 0.0
      %1438 = vmatprep.subr.mxu0 0.0
      %1439 = vmatpush1.msra.mxu0 0.0
      %1440 = vmatprep.subr.mxu0 0.0
      %1441 = vmatpush1.msra.mxu0 0.0
      %1442 = vmatprep.subr.mxu0 0.0
      %1443 = vmatpush1.msra.mxu0 0.0
      %1444 = vmatprep.subr.mxu0 0.0
      %1445 = vmatpush1.msra.mxu0 0.0
      %1446 = vmatprep.subr.mxu0 0.0
      %1447 = vmatpush1.msra.mxu0 0.0
      %1448 = vmatprep.subr.mxu0 0.0
      %1449 = vmatpush1.msra.mxu0 0.0
      %1450 = vmatprep.subr.mxu0 0.0
      %1451 = vmatpush1.msra.mxu0 0.0
      %1452 = vmatprep.subr.mxu0 0.0
      %1453 = vmatpush1.msra.mxu0 0.0
      %1454 = vmatprep.subr.mxu0 0.0
      %1455 = vmatpush1.msra.mxu0 0.0
      %1456 = vmatprep.subr.mxu0 0.0
      %1457 = vmatpush1.msra.mxu0 0.0
      %1458 = vmatprep.subr.mxu0 0.0
      %1459 = vmatpush1.msra.mxu0 0.0
      %1460 = vmatprep.subr.mxu0 0.0
      %1461 = vmatpush1.msra.mxu0 0.0
      %1462 = vmatprep.subr.mxu0 0.0
      %1463 = vmatpush1.msra.mxu0 0.0
      %1464 = vmatprep.subr.mxu0 0.0
      %1465 = vmatpush1.msra.mxu0 0.0
      %1466 = vmatprep.subr.mxu0 0.0
      %1467 = vmatpush1.msra.mxu0 0.0
      %1468 = vmatprep.subr.mxu0 0.0
      %1469 = vmatpush1.msra.mxu0 0.0
      %1470 = vmatprep.subr.mxu0 0.0
      %1471 = vmatpush1.msra.mxu0 0.0
      %1472 = vmatprep.subr.mxu0 0.0
      %1473 = vmatpush1.msra.mxu0 0.0
      %1474 = vmatprep.subr.mxu0 0.0
      %1475 = vmatpush1.msra.mxu0 0.0
      %1476 = vmatprep.subr.mxu0 0.0
      %1477 = vmatpush1.msra.mxu0 0.0
      %1478 = vmatprep.subr.mxu0 0.0
      %1479 = vmatpush1.msra.mxu0 0.0
      %1480 = vmatprep.subr.mxu0 0.0
      %1481 = vmatpush1.msra.mxu0 0.0
      %1482 = vmatprep.subr.mxu0 0.0
      %1483 = vmatpush1.msra.mxu0 0.0
      %1484 = vmatprep.subr.mxu0 0.0
      %1485 = vmatpush1.msra.mxu0 0.0
      %1486 = vmatprep.subr.mxu0 0.0
      %1487 = vmatpush1.msra.mxu0 0.0
      %1488 = vmatprep.mubr.f32.mxu0 0.0
      %1489 = vmatmul.mubr.f32.gmra.mrb[0].mxu0 %v1417
      %v1490 = vpop.f32.mrb[0].mxu0
      %v1491 = vadd.f32 0.0, %v1490
      %v1492 = vpop.f32.mrb[0].mxu0
      %1493 = vmatprep.mubr.f32.mxu0 0.0
      %1494 = vmatmul.mubr.f32.gmra.mrb[0].mxu0 %v1420
      %v1495 = vpop.f32.mrb[0].mxu0
      %v1496 = vadd.f32 0.0, %v1495
      %v1497 = vpop.f32.mrb[0].mxu0
      %1498 = vdwg.mxu0
      %1499 = vrot.lane.b32.xlu0 %v1086, 112
      %v1500 = vpop.permute.xlu0 %1499
      %1501 = vrot.lane.b32.xlu0 %v1089, 112
      %v1502 = vpop.permute.xlu0 %1501
      %1503 = vrot.lane.b32.xlu0 %v1086, 80
      %v1504 = vpop.permute.xlu0 %1503
      %1505 = vrot.lane.b32.xlu0 %v1089, 80
      %v1506 = vpop.permute.xlu0 %1505
      %v1507 = vsel %vm1098, %v1500, 0
      %v1509 = vsel %vm1098, %v1502, 0
      %v1511 = vsel %vm1098, %v1504, 0
      %v1513 = vsel %vm1098, %v1506, 0
      %1515 = vmatprep.subr.mxu0 0.0
      %1516 = vmatpush1.xpose.msra.mxu0 %v1511
      %1517 = vmatprep.subr.mxu0 0.0
      %1518 = vmatpush1.xpose.msra.mxu0 %v1513
      %1519 = vmatprep.subr.mxu0 0.0
      %1520 = vmatpush1.xpose.msra.mxu0 0.0
      %1521 = vmatprep.subr.mxu0 0.0
      %1522 = vmatpush1.xpose.msra.mxu0 0.0
      %1523 = vmatprep.subr.mxu0 0.0
      %1524 = vmatpush1.xpose.msra.mxu0 0.0
      %1525 = vmatprep.subr.mxu0 0.0
      %1526 = vmatpush1.xpose.msra.mxu0 0.0
      %1527 = vmatprep.subr.mxu0 0.0
      %1528 = vmatpush1.xpose.msra.mxu0 0.0
      %1529 = vmatprep.subr.mxu0 0.0
      %1530 = vmatpush1.xpose.msra.mxu0 0.0
      %1531 = vmatprep.subr.mxu0 0.0
      %1532 = vmatpush1.xpose.msra.mxu0 0.0
      %1533 = vmatprep.subr.mxu0 0.0
      %1534 = vmatpush1.xpose.msra.mxu0 0.0
      %1535 = vmatprep.subr.mxu0 0.0
      %1536 = vmatpush1.xpose.msra.mxu0 0.0
      %1537 = vmatprep.subr.mxu0 0.0
      %1538 = vmatpush1.xpose.msra.mxu0 0.0
      %1539 = vmatprep.subr.mxu0 0.0
      %1540 = vmatpush1.xpose.msra.mxu0 0.0
      %1541 = vmatprep.subr.mxu0 0.0
      %1542 = vmatpush1.xpose.msra.mxu0 0.0
      %1543 = vmatprep.subr.mxu0 0.0
      %1544 = vmatpush1.xpose.msra.mxu0 0.0
      %1545 = vmatprep.subr.mxu0 0.0
      %1546 = vmatpush1.xpose.msra.mxu0 0.0
      %1547 = vmatprep.subr.mxu0 0.0
      %1548 = vmatpush1.xpose.msra.mxu0 0.0
      %1549 = vmatprep.subr.mxu0 0.0
      %1550 = vmatpush1.xpose.msra.mxu0 0.0
      %1551 = vmatprep.subr.mxu0 0.0
      %1552 = vmatpush1.xpose.msra.mxu0 0.0
      %1553 = vmatprep.subr.mxu0 0.0
      %1554 = vmatpush1.xpose.msra.mxu0 0.0
      %1555 = vmatprep.subr.mxu0 0.0
      %1556 = vmatpush1.xpose.msra.mxu0 0.0
      %1557 = vmatprep.subr.mxu0 0.0
      %1558 = vmatpush1.xpose.msra.mxu0 0.0
      %1559 = vmatprep.subr.mxu0 0.0
      %1560 = vmatpush1.xpose.msra.mxu0 0.0
      %1561 = vmatprep.subr.mxu0 0.0
      %1562 = vmatpush1.xpose.msra.mxu0 0.0
      %1563 = vmatprep.subr.mxu0 0.0
      %1564 = vmatpush1.xpose.msra.mxu0 0.0
      %1565 = vmatprep.subr.mxu0 0.0
      %1566 = vmatpush1.xpose.msra.mxu0 0.0
      %1567 = vmatprep.subr.mxu0 0.0
      %1568 = vmatpush1.xpose.msra.mxu0 0.0
      %1569 = vmatprep.subr.mxu0 0.0
      %1570 = vmatpush1.xpose.msra.mxu0 0.0
      %1571 = vmatprep.subr.mxu0 0.0
      %1572 = vmatpush1.xpose.msra.mxu0 0.0
      %1573 = vmatprep.subr.mxu0 0.0
      %1574 = vmatpush1.xpose.msra.mxu0 0.0
      %1575 = vmatprep.subr.mxu0 0.0
      %1576 = vmatpush1.xpose.msra.mxu0 0.0
      %1577 = vmatprep.subr.mxu0 0.0
      %1578 = vmatpush1.xpose.msra.mxu0 0.0
      %1579 = vmatprep.mubr.f32.mxu0 0.0
      %1580 = vmatmul.mubr.f32.gmra.mrb[0].mxu0 %v1507
      %v1581 = vpop.f32.mrb[0].mxu0
      %v1582 = vadd.f32 0.0, %v1581
      %v1583 = vpop.f32.mrb[0].mxu0
      %1584 = vmatprep.mubr.f32.mxu0 0.0
      %1585 = vmatmul.mubr.f32.gmra.mrb[0].mxu0 %v1509
      %v1586 = vpop.f32.mrb[0].mxu0
      %v1587 = vadd.f32 0.0, %v1586
      %v1588 = vpop.f32.mrb[0].mxu0
      %1589 = vdwg.mxu0
      %v1590 = vmul.f32 %v1582, 0.35355338
      %v1591 = vmul.f32 %v1587, 0.35355338
      %v1592 = vsel %vm1184, %v1590, -inf
      %1593 = vmax.xlane.f32.xlu0 %v1592
      %v1594 = vpop.xlane.xlu0 %1593
      %v1595 = vsel %vm1188, %v1591, -inf
      %1596 = vmax.xlane.f32.xlu0 %v1595
      %v1597 = vpop.xlane.xlu0 %1596
      %v1598 = vsub.f32 %v1590, %v1594
      %v1599 = vsub.f32 %v1591, %v1597
      %v1600 = vmul.f32 %v1598, 1.442695
      %v1601 = vpow.pop %v1600
      %v1602 = vmul.f32 %v1599, 1.442695
      %v1603 = vpow.pop %v1602
      %v1604 = vsel %vm1184, %v1601, 0.0
      %1605 = vadd.xlane.f32.xlu0 %v1604
      %v1606 = vpop.xlane.xlu0 %1605
      %v1607 = vsel %vm1188, %v1603, 0.0
      %1608 = vadd.xlane.f32.xlu0 %v1607
      %v1609 = vpop.xlane.xlu0 %1608
      %v1610 = vrcp.pop %v1606
      %v1611 = vmul.f32 %v1601, %v1610
      %v1612 = vrcp.pop %v1609
      %v1613 = vmul.f32 %v1603, %v1612
      %1614 = vrot.lane.b32.xlu0 %v1086, 48
      %v1615 = vpop.permute.xlu0 %1614
      %1616 = vrot.lane.b32.xlu0 %v1089, 48
      %v1617 = vpop.permute.xlu0 %1616
      %v1620 = vsel %vm1184, %v1611, 0
      %v1623 = vsel %vm1184, %v1613, 0
      %v1625 = vsel %vm924, %v1617, 0
      %1627 = vmatprep.subr.mxu0 0.0
      %1628 = vmatpush1.msra.mxu0 %v1615
      %1629 = vmatprep.subr.mxu0 0.0
      %1630 = vmatpush1.msra.mxu0 %v1625
      %1631 = vmatprep.subr.mxu0 0.0
      %1632 = vmatpush1.msra.mxu0 0.0
      %1633 = vmatprep.subr.mxu0 0.0
      %1634 = vmatpush1.msra.mxu0 0.0
      %1635 = vmatprep.subr.mxu0 0.0
      %1636 = vmatpush1.msra.mxu0 0.0
      %1637 = vmatprep.subr.mxu0 0.0
      %1638 = vmatpush1.msra.mxu0 0.0
      %1639 = vmatprep.subr.mxu0 0.0
      %1640 = vmatpush1.msra.mxu0 0.0
      %1641 = vmatprep.subr.mxu0 0.0
      %1642 = vmatpush1.msra.mxu0 0.0
      %1643 = vmatprep.subr.mxu0 0.0
      %1644 = vmatpush1.msra.mxu0 0.0
      %1645 = vmatprep.subr.mxu0 0.0
      %1646 = vmatpush1.msra.mxu0 0.0
      %1647 = vmatprep.subr.mxu0 0.0
      %1648 = vmatpush1.msra.mxu0 0.0
      %1649 = vmatprep.subr.mxu0 0.0
      %1650 = vmatpush1.msra.mxu0 0.0
      %1651 = vmatprep.subr.mxu0 0.0
      %1652 = vmatpush1.msra.mxu0 0.0
      %1653 = vmatprep.subr.mxu0 0.0
      %1654 = vmatpush1.msra.mxu0 0.0
      %1655 = vmatprep.subr.mxu0 0.0
      %1656 = vmatpush1.msra.mxu0 0.0
      %1657 = vmatprep.subr.mxu0 0.0
      %1658 = vmatpush1.msra.mxu0 0.0
      %1659 = vmatprep.subr.mxu0 0.0
      %1660 = vmatpush1.msra.mxu0 0.0
      %1661 = vmatprep.subr.mxu0 0.0
      %1662 = vmatpush1.msra.mxu0 0.0
      %1663 = vmatprep.subr.mxu0 0.0
      %1664 = vmatpush1.msra.mxu0 0.0
      %1665 = vmatprep.subr.mxu0 0.0
      %1666 = vmatpush1.msra.mxu0 0.0
      %1667 = vmatprep.subr.mxu0 0.0
      %1668 = vmatpush1.msra.mxu0 0.0
      %1669 = vmatprep.subr.mxu0 0.0
      %1670 = vmatpush1.msra.mxu0 0.0
      %1671 = vmatprep.subr.mxu0 0.0
      %1672 = vmatpush1.msra.mxu0 0.0
      %1673 = vmatprep.subr.mxu0 0.0
      %1674 = vmatpush1.msra.mxu0 0.0
      %1675 = vmatprep.subr.mxu0 0.0
      %1676 = vmatpush1.msra.mxu0 0.0
      %1677 = vmatprep.subr.mxu0 0.0
      %1678 = vmatpush1.msra.mxu0 0.0
      %1679 = vmatprep.subr.mxu0 0.0
      %1680 = vmatpush1.msra.mxu0 0.0
      %1681 = vmatprep.subr.mxu0 0.0
      %1682 = vmatpush1.msra.mxu0 0.0
      %1683 = vmatprep.subr.mxu0 0.0
      %1684 = vmatpush1.msra.mxu0 0.0
      %1685 = vmatprep.subr.mxu0 0.0
      %1686 = vmatpush1.msra.mxu0 0.0
      %1687 = vmatprep.subr.mxu0 0.0
      %1688 = vmatpush1.msra.mxu0 0.0
      %1689 = vmatprep.subr.mxu0 0.0
      %1690 = vmatpush1.msra.mxu0 0.0
      %1691 = vmatprep.mubr.f32.mxu0 0.0
      %1692 = vmatmul.mubr.f32.gmra.mrb[0].mxu0 %v1620
      %v1693 = vpop.f32.mrb[0].mxu0
      %v1694 = vadd.f32 0.0, %v1693
      %v1695 = vpop.f32.mrb[0].mxu0
      %1696 = vmatprep.mubr.f32.mxu0 0.0
      %1697 = vmatmul.mubr.f32.gmra.mrb[0].mxu0 %v1623
      %v1698 = vpop.f32.mrb[0].mxu0
      %v1699 = vadd.f32 0.0, %v1698
      %v1700 = vpop.f32.mrb[0].mxu0
      %1701 = vdwg.mxu0
      %1702 = vrot.lane.b32.xlu0 %v1086, 104
      %v1703 = vpop.permute.xlu0 %1702
      %1704 = vrot.lane.b32.xlu0 %v1089, 104
      %v1705 = vpop.permute.xlu0 %1704
      %1706 = vrot.lane.b32.xlu0 %v1086, 72
      %v1707 = vpop.permute.xlu0 %1706
      %1708 = vrot.lane.b32.xlu0 %v1089, 72
      %v1709 = vpop.permute.xlu0 %1708
      %v1710 = vsel %vm1098, %v1703, 0
      %v1712 = vsel %vm1098, %v1705, 0
      %v1714 = vsel %vm1098, %v1707, 0
      %v1716 = vsel %vm1098, %v1709, 0
      %1718 = vmatprep.subr.mxu0 0.0
      %1719 = vmatpush1.xpose.msra.mxu0 %v1714
      %1720 = vmatprep.subr.mxu0 0.0
      %1721 = vmatpush1.xpose.msra.mxu0 %v1716
      %1722 = vmatprep.subr.mxu0 0.0
      %1723 = vmatpush1.xpose.msra.mxu0 0.0
      %1724 = vmatprep.subr.mxu0 0.0
      %1725 = vmatpush1.xpose.msra.mxu0 0.0
      %1726 = vmatprep.subr.mxu0 0.0
      %1727 = vmatpush1.xpose.msra.mxu0 0.0
      %1728 = vmatprep.subr.mxu0 0.0
      %1729 = vmatpush1.xpose.msra.mxu0 0.0
      %1730 = vmatprep.subr.mxu0 0.0
      %1731 = vmatpush1.xpose.msra.mxu0 0.0
      %1732 = vmatprep.subr.mxu0 0.0
      %1733 = vmatpush1.xpose.msra.mxu0 0.0
      %1734 = vmatprep.subr.mxu0 0.0
      %1735 = vmatpush1.xpose.msra.mxu0 0.0
      %1736 = vmatprep.subr.mxu0 0.0
      %1737 = vmatpush1.xpose.msra.mxu0 0.0
      %1738 = vmatprep.subr.mxu0 0.0
      %1739 = vmatpush1.xpose.msra.mxu0 0.0
      %1740 = vmatprep.subr.mxu0 0.0
      %1741 = vmatpush1.xpose.msra.mxu0 0.0
      %1742 = vmatprep.subr.mxu0 0.0
      %1743 = vmatpush1.xpose.msra.mxu0 0.0
      %1744 = vmatprep.subr.mxu0 0.0
      %1745 = vmatpush1.xpose.msra.mxu0 0.0
      %1746 = vmatprep.subr.mxu0 0.0
      %1747 = vmatpush1.xpose.msra.mxu0 0.0
      %1748 = vmatprep.subr.mxu0 0.0
      %1749 = vmatpush1.xpose.msra.mxu0 0.0
      %1750 = vmatprep.subr.mxu0 0.0
      %1751 = vmatpush1.xpose.msra.mxu0 0.0
      %1752 = vmatprep.subr.mxu0 0.0
      %1753 = vmatpush1.xpose.msra.mxu0 0.0
      %1754 = vmatprep.subr.mxu0 0.0
      %1755 = vmatpush1.xpose.msra.mxu0 0.0
      %1756 = vmatprep.subr.mxu0 0.0
      %1757 = vmatpush1.xpose.msra.mxu0 0.0
      %1758 = vmatprep.subr.mxu0 0.0
      %1759 = vmatpush1.xpose.msra.mxu0 0.0
      %1760 = vmatprep.subr.mxu0 0.0
      %1761 = vmatpush1.xpose.msra.mxu0 0.0
      %1762 = vmatprep.subr.mxu0 0.0
      %1763 = vmatpush1.xpose.msra.mxu0 0.0
      %1764 = vmatprep.subr.mxu0 0.0
      %1765 = vmatpush1.xpose.msra.mxu0 0.0
      %1766 = vmatprep.subr.mxu0 0.0
      %1767 = vmatpush1.xpose.msra.mxu0 0.0
      %1768 = vmatprep.subr.mxu0 0.0
      %1769 = vmatpush1.xpose.msra.mxu0 0.0
      %1770 = vmatprep.subr.mxu0 0.0
      %1771 = vmatpush1.xpose.msra.mxu0 0.0
      %1772 = vmatprep.subr.mxu0 0.0
      %1773 = vmatpush1.xpose.msra.mxu0 0.0
      %1774 = vmatprep.subr.mxu0 0.0
      %1775 = vmatpush1.xpose.msra.mxu0 0.0
      %1776 = vmatprep.subr.mxu0 0.0
      %1777 = vmatpush1.xpose.msra.mxu0 0.0
      %1778 = vmatprep.subr.mxu0 0.0
      %1779 = vmatpush1.xpose.msra.mxu0 0.0
      %1780 = vmatprep.subr.mxu0 0.0
      %1781 = vmatpush1.xpose.msra.mxu0 0.0
      %1782 = vmatprep.mubr.f32.mxu0 0.0
      %1783 = vmatmul.mubr.f32.gmra.mrb[0].mxu0 %v1710
      %v1784 = vpop.f32.mrb[0].mxu0
      %v1785 = vadd.f32 0.0, %v1784
      %v1786 = vpop.f32.mrb[0].mxu0
      %1787 = vmatprep.mubr.f32.mxu0 0.0
      %1788 = vmatmul.mubr.f32.gmra.mrb[0].mxu0 %v1712
      %v1789 = vpop.f32.mrb[0].mxu0
      %v1790 = vadd.f32 0.0, %v1789
      %v1791 = vpop.f32.mrb[0].mxu0
      %1792 = vdwg.mxu0
      %v1793 = vmul.f32 %v1785, 0.35355338
      %v1794 = vmul.f32 %v1790, 0.35355338
      %v1795 = vsel %vm1184, %v1793, -inf
      %1796 = vmax.xlane.f32.xlu0 %v1795
      %v1797 = vpop.xlane.xlu0 %1796
      %v1798 = vsel %vm1188, %v1794, -inf
      %1799 = vmax.xlane.f32.xlu0 %v1798
      %v1800 = vpop.xlane.xlu0 %1799
      %v1801 = vsub.f32 %v1793, %v1797
      %v1802 = vsub.f32 %v1794, %v1800
      %v1803 = vmul.f32 %v1801, 1.442695
      %v1804 = vpow.pop %v1803
      %v1805 = vmul.f32 %v1802, 1.442695
      %v1806 = vpow.pop %v1805
      %v1807 = vsel %vm1184, %v1804, 0.0
      %1808 = vadd.xlane.f32.xlu0 %v1807
      %v1809 = vpop.xlane.xlu0 %1808
      %v1810 = vsel %vm1188, %v1806, 0.0
      %1811 = vadd.xlane.f32.xlu0 %v1810
      %v1812 = vpop.xlane.xlu0 %1811
      %v1813 = vrcp.pop %v1809
      %v1814 = vmul.f32 %v1804, %v1813
      %v1815 = vrcp.pop %v1812
      %v1816 = vmul.f32 %v1806, %v1815
      %1817 = vrot.lane.b32.xlu0 %v1086, 40
      %v1818 = vpop.permute.xlu0 %1817
      %1819 = vrot.lane.b32.xlu0 %v1089, 40
      %v1820 = vpop.permute.xlu0 %1819
      %v1823 = vsel %vm1184, %v1814, 0
      %v1826 = vsel %vm1184, %v1816, 0
      %v1828 = vsel %vm924, %v1820, 0
      %1830 = vmatprep.subr.mxu0 0.0
      %1831 = vmatpush1.msra.mxu0 %v1818
      %1832 = vmatprep.subr.mxu0 0.0
      %1833 = vmatpush1.msra.mxu0 %v1828
      %1834 = vmatprep.subr.mxu0 0.0
      %1835 = vmatpush1.msra.mxu0 0.0
      %1836 = vmatprep.subr.mxu0 0.0
      %1837 = vmatpush1.msra.mxu0 0.0
      %1838 = vmatprep.subr.mxu0 0.0
      %1839 = vmatpush1.msra.mxu0 0.0
      %1840 = vmatprep.subr.mxu0 0.0
      %1841 = vmatpush1.msra.mxu0 0.0
      %1842 = vmatprep.subr.mxu0 0.0
      %1843 = vmatpush1.msra.mxu0 0.0
      %1844 = vmatprep.subr.mxu0 0.0
      %1845 = vmatpush1.msra.mxu0 0.0
      %1846 = vmatprep.subr.mxu0 0.0
      %1847 = vmatpush1.msra.mxu0 0.0
      %1848 = vmatprep.subr.mxu0 0.0
      %1849 = vmatpush1.msra.mxu0 0.0
      %1850 = vmatprep.subr.mxu0 0.0
      %1851 = vmatpush1.msra.mxu0 0.0
      %1852 = vmatprep.subr.mxu0 0.0
      %1853 = vmatpush1.msra.mxu0 0.0
      %1854 = vmatprep.subr.mxu0 0.0
      %1855 = vmatpush1.msra.mxu0 0.0
      %1856 = vmatprep.subr.mxu0 0.0
      %1857 = vmatpush1.msra.mxu0 0.0
      %1858 = vmatprep.subr.mxu0 0.0
      %1859 = vmatpush1.msra.mxu0 0.0
      %1860 = vmatprep.subr.mxu0 0.0
      %1861 = vmatpush1.msra.mxu0 0.0
      %1862 = vmatprep.subr.mxu0 0.0
      %1863 = vmatpush1.msra.mxu0 0.0
      %1864 = vmatprep.subr.mxu0 0.0
      %1865 = vmatpush1.msra.mxu0 0.0
      %1866 = vmatprep.subr.mxu0 0.0
      %1867 = vmatpush1.msra.mxu0 0.0
      %1868 = vmatprep.subr.mxu0 0.0
      %1869 = vmatpush1.msra.mxu0 0.0
      %1870 = vmatprep.subr.mxu0 0.0
      %1871 = vmatpush1.msra.mxu0 0.0
      %1872 = vmatprep.subr.mxu0 0.0
      %1873 = vmatpush1.msra.mxu0 0.0
      %1874 = vmatprep.subr.mxu0 0.0
      %1875 = vmatpush1.msra.mxu0 0.0
      %1876 = vmatprep.subr.mxu0 0.0
      %1877 = vmatpush1.msra.mxu0 0.0
      %1878 = vmatprep.subr.mxu0 0.0
      %1879 = vmatpush1.msra.mxu0 0.0
      %1880 = vmatprep.subr.mxu0 0.0
      %1881 = vmatpush1.msra.mxu0 0.0
      %1882 = vmatprep.subr.mxu0 0.0
      %1883 = vmatpush1.msra.mxu0 0.0
      %1884 = vmatprep.subr.mxu0 0.0
      %1885 = vmatpush1.msra.mxu0 0.0
      %1886 = vmatprep.subr.mxu0 0.0
      %1887 = vmatpush1.msra.mxu0 0.0
      %1888 = vmatprep.subr.mxu0 0.0
      %1889 = vmatpush1.msra.mxu0 0.0
      %1890 = vmatprep.subr.mxu0 0.0
      %1891 = vmatpush1.msra.mxu0 0.0
      %1892 = vmatprep.subr.mxu0 0.0
      %1893 = vmatpush1.msra.mxu0 0.0
      %1894 = vmatprep.mubr.f32.mxu0 0.0
      %1895 = vmatmul.mubr.f32.gmra.mrb[0].mxu0 %v1823
      %v1896 = vpop.f32.mrb[0].mxu0
      %v1897 = vadd.f32 0.0, %v1896
      %v1898 = vpop.f32.mrb[0].mxu0
      %1899 = vmatprep.mubr.f32.mxu0 0.0
      %1900 = vmatmul.mubr.f32.gmra.mrb[0].mxu0 %v1826
      %v1901 = vpop.f32.mrb[0].mxu0
      %v1902 = vadd.f32 0.0, %v1901
      %v1903 = vpop.f32.mrb[0].mxu0
      %1904 = vdwg.mxu0
      %1907 = vrot.lane.b32.xlu0 %v1491, 8
      %v1908 = vpop.permute.xlu0 %1907
      %1909 = vrot.lane.b32.xlu0 %v1496, 8
      %v1910 = vpop.permute.xlu0 %1909
      %1915 = vrot.lane.b32.xlu0 %v1694, 16
      %v1916 = vpop.permute.xlu0 %1915
      %1917 = vrot.lane.b32.xlu0 %v1699, 16
      %v1918 = vpop.permute.xlu0 %1917
      %1923 = vrot.lane.b32.xlu0 %v1897, 24
      %v1924 = vpop.permute.xlu0 %1923
      %1925 = vrot.lane.b32.xlu0 %v1902, 24
      %v1926 = vpop.permute.xlu0 %1925
      %v1929 = vsel %vm1098, %v1288, %v1908
      %v1930 = vsel %vm1098, %v1293, %v1910
      %vm1931 = vcmask 130048
      %v1932 = vsel %vm1931, %v1929, %v1916
      %v1933 = vsel %vm1931, %v1930, %v1918
      %vm1934 = vcmask 195584
      %v1935 = vsel %vm1934, %v1932, %v1924
      %v1936 = vsel %vm1934, %v1933, %v1926
      %v1937 = vpack.c.bf16 %v1936, %v1935
      %v1938 = vld [vmem:[%s12] sm:$0xf]
      %v1939 = vld [vmem:[%s12 + $0x4] sm:$0xf]
      %v1940 = vld [vmem:[%s12 + $0x8] sm:$0xf]
      %v1941 = vld [vmem:[%s12 + $0xc] sm:$0xf]
      %v1942 = vld [vmem:[%s13] sm:$0x1]
      %v1944 = vlaneseq
      %v1945 = vshrl.u32 %v1944, 7
      %v1946 = vsub.s32 0, %v1945
      %v1947 = vrot.slane %v1942, %v1946
      %v1953 = vunpack.c.l.b16 %v1938
      %v1954 = vunpack.c.l.b16 %v1939
      %v1955 = vunpack.c.l.b16 %v1940
      %v1956 = vunpack.c.l.b16 %v1941
      %v1957 = vpack.c.b16 %v1954, %v1953
      %v1958 = vpack.c.b16 %v1956, %v1955
      %v1962 = vsel %vm979, %v1937, 0
      %1964 = vmatprep.subr.bf16.mxu0 0
      %1965 = vmatpush1.bf16.msra.mxu0 %v1957
      %1966 = vmatprep.subr.bf16.mxu0 0
      %1967 = vmatpush1.bf16.msra.mxu0 %v1958
      %1968 = vmatprep.subr.bf16.mxu0 0
      %1969 = vmatpush1.bf16.msra.mxu0 0
      %1970 = vmatprep.subr.bf16.mxu0 0
      %1971 = vmatpush1.bf16.msra.mxu0 0
      %1972 = vmatprep.subr.bf16.mxu0 0
      %1973 = vmatpush1.bf16.msra.mxu0 0
      %1974 = vmatprep.subr.bf16.mxu0 0
      %1975 = vmatpush1.bf16.msra.mxu0 0
      %1976 = vmatprep.subr.bf16.mxu0 0
      %1977 = vmatpush1.bf16.msra.mxu0 0
      %1978 = vmatprep.subr.bf16.mxu0 0
      %1979 = vmatpush1.bf16.msra.mxu0 0
      %1980 = vmatprep.subr.bf16.mxu0 0
      %1981 = vmatpush1.bf16.msra.mxu0 0
      %1982 = vmatprep.subr.bf16.mxu0 0
      %1983 = vmatpush1.bf16.msra.mxu0 0
      %1984 = vmatprep.subr.bf16.mxu0 0
      %1985 = vmatpush1.bf16.msra.mxu0 0
      %1986 = vmatprep.subr.bf16.mxu0 0
      %1987 = vmatpush1.bf16.msra.mxu0 0
      %1988 = vmatprep.subr.bf16.mxu0 0
      %1989 = vmatpush1.bf16.msra.mxu0 0
      %1990 = vmatprep.subr.bf16.mxu0 0
      %1991 = vmatpush1.bf16.msra.mxu0 0
      %1992 = vmatprep.subr.bf16.mxu0 0
      %1993 = vmatpush1.bf16.msra.mxu0 0
      %1994 = vmatprep.subr.bf16.mxu0 0
      %1995 = vmatpush1.bf16.msra.mxu0 0
      %1996 = vmatprep.mubr.bf16.mxu0 0
      %1997 = vmatmul.mubr.bf16.gmra.mrb[0].mxu0 %v1962
      %v1998 = vpop.f32.mrb[0].mxu0
      %v1999 = vadd.f32 %v1947, %v1998
      %v2000 = vpop.f32.mrb[0].mxu0
      %v2001 = vpop.f32.mrb[0].mxu0
      %v2002 = vadd.f32 %v1947, %v2001
      %v2003 = vpop.f32.mrb[0].mxu0
      %2004 = vdwg.mxu0
      %v2005 = vadd.f32 %v1022, %v1999
      %v2006 = vadd.f32 %v1023, %v2002
      %v2007 = vld [vmem:[%s14] sm:$0x1]
      %v2008 = vld [vmem:[%s15] sm:$0x1]
      %v2009 = vsel %vm979, %v2005, 0.0
      %2010 = vadd.xlane.f32.xlu0 %v2009
      %v2011 = vpop.xlane.xlu0 %2010
      %v2012 = vsel %vm983, %v2006, 0.0
      %2013 = vadd.xlane.f32.xlu0 %v2012
      %v2014 = vpop.xlane.xlu0 %2013
      %v2015 = vmul.f32 %v2011, %v987
      %v2016 = vmul.f32 %v2014, %v987
      %v2017 = vsub.f32 %v2005, %v2015
      %v2018 = vsub.f32 %v2006, %v2016
      %v2019 = vmul.f32 %v2017, %v2017
      %v2020 = vmul.f32 %v2018, %v2018
      %v2021 = vsel %vm979, %v2019, 0.0
      %2022 = vadd.xlane.f32.xlu0 %v2021
      %v2023 = vpop.xlane.xlu0 %2022
      %v2024 = vsel %vm983, %v2020, 0.0
      %2025 = vadd.xlane.f32.xlu0 %v2024
      %v2026 = vpop.xlane.xlu0 %2025
      %v2027 = vmul.f32 %v2023, %v987
      %v2028 = vmul.f32 %v2026, %v987
      %v2029 = vadd.f32 %v2027, 1e-05
      %v2030 = vadd.f32 %v2028, 1e-05
      %v2031 = vrsqrt.pop %v2029
      %v2032 = vrsqrt.pop %v2030
      %v2033 = vmul.f32 %v2017, %v2031
      %v2034 = vmul.f32 %v2018, %v2032
      %v2036 = vlaneseq
      %v2037 = vshrl.u32 %v2036, 7
      %v2038 = vsub.s32 0, %v2037
      %v2039 = vrot.slane %v2007, %v2038
      %v2041 = vmul.f32 %v2033, %v2039
      %v2042 = vmul.f32 %v2034, %v2039
      %v2044 = vlaneseq
      %v2045 = vshrl.u32 %v2044, 7
      %v2046 = vsub.s32 0, %v2045
      %v2047 = vrot.slane %v2008, %v2046
      %v2049 = vadd.f32 %v2041, %v2047
      %v2050 = vadd.f32 %v2042, %v2047
      %v2051 = vpack.c.bf16 %v2050, %v2049
      %v2052 = vld [vmem:[%s16] sm:$0xf]
      %v2053 = vld [vmem:[%s16 + $0x4] sm:$0xf]
      %v2054 = vld [vmem:[%s16 + $0x8] sm:$0xf]
      %v2055 = vld [vmem:[%s16 + $0xc] sm:$0xf]
      %v2056 = vld [vmem:[%s17] sm:$0x1]
      %v2058 = vlaneseq
      %v2059 = vshrl.u32 %v2058, 7
      %v2060 = vsub.s32 0, %v2059
      %v2061 = vrot.slane %v2056, %v2060
      %v2067 = vunpack.c.l.b16 %v2052
      %v2068 = vunpack.c.l.b16 %v2053
      %v2069 = vunpack.c.l.b16 %v2054
      %v2070 = vunpack.c.l.b16 %v2055
      %v2071 = vpack.c.b16 %v2068, %v2067
      %v2072 = vpack.c.b16 %v2070, %v2069
      %v2076 = vsel %vm979, %v2051, 0
      %2078 = vmatprep.subr.bf16.mxu0 0
      %2079 = vmatpush1.bf16.msra.mxu0 %v2071
      %2080 = vmatprep.subr.bf16.mxu0 0
      %2081 = vmatpush1.bf16.msra.mxu0 %v2072
      %2082 = vmatprep.subr.bf16.mxu0 0
      %2083 = vmatpush1.bf16.msra.mxu0 0
      %2084 = vmatprep.subr.bf16.mxu0 0
      %2085 = vmatpush1.bf16.msra.mxu0 0
      %2086 = vmatprep.subr.bf16.mxu0 0
      %2087 = vmatpush1.bf16.msra.mxu0 0
      %2088 = vmatprep.subr.bf16.mxu0 0
      %2089 = vmatpush1.bf16.msra.mxu0 0
      %2090 = vmatprep.subr.bf16.mxu0 0
      %2091 = vmatpush1.bf16.msra.mxu0 0
      %2092 = vmatprep.subr.bf16.mxu0 0
      %2093 = vmatpush1.bf16.msra.mxu0 0
      %2094 = vmatprep.subr.bf16.mxu0 0
      %2095 = vmatpush1.bf16.msra.mxu0 0
      %2096 = vmatprep.subr.bf16.mxu0 0
      %2097 = vmatpush1.bf16.msra.mxu0 0
      %2098 = vmatprep.subr.bf16.mxu0 0
      %2099 = vmatpush1.bf16.msra.mxu0 0
      %2100 = vmatprep.subr.bf16.mxu0 0
      %2101 = vmatpush1.bf16.msra.mxu0 0
      %2102 = vmatprep.subr.bf16.mxu0 0
      %2103 = vmatpush1.bf16.msra.mxu0 0
      %2104 = vmatprep.subr.bf16.mxu0 0
      %2105 = vmatpush1.bf16.msra.mxu0 0
      %2106 = vmatprep.subr.bf16.mxu0 0
      %2107 = vmatpush1.bf16.msra.mxu0 0
      %2108 = vmatprep.subr.bf16.mxu0 0
      %2109 = vmatpush1.bf16.msra.mxu0 0
      %2110 = vmatprep.mubr.bf16.mxu0 0
      %2111 = vmatmul.mubr.bf16.gmra.mrb[0].mxu0 %v2076
      %v2112 = vpop.f32.mrb[0].mxu0
      %v2113 = vadd.f32 %v2061, %v2112
      %v2114 = vpop.f32.mrb[0].mxu0
      %v2115 = vpop.f32.mrb[0].mxu0
      %v2116 = vadd.f32 %v2061, %v2115
      %v2117 = vpop.f32.mrb[0].mxu0
      %2118 = vdwg.mxu0
      %v2119 = vmax.f32 %v2113, 0.0
      %v2120 = vmax.f32 %v2116, 0.0
      %v2121 = vpack.c.bf16 %v2120, %v2119
      %v2122 = vld [vmem:[%s18] sm:$0xf]
      %v2123 = vld [vmem:[%s18 + $0x4] sm:$0xf]
      %v2124 = vld [vmem:[%s18 + $0x8] sm:$0xf]
      %v2125 = vld [vmem:[%s18 + $0xc] sm:$0xf]
      %v2126 = vld [vmem:[%s18 + $0x10] sm:$0xf]
      %v2127 = vld [vmem:[%s18 + $0x14] sm:$0xf]
      %v2128 = vld [vmem:[%s18 + $0x18] sm:$0xf]
      %v2129 = vld [vmem:[%s18 + $0x1c] sm:$0xf]
      %v2130 = vld [vmem:[%s19] sm:$0x1]
      %v2132 = vlaneseq
      %v2133 = vshrl.u32 %v2132, 7
      %v2134 = vsub.s32 0, %v2133
      %v2135 = vrot.slane %v2130, %v2134
      %v2145 = vunpack.c.l.b16 %v2122
      %v2146 = vunpack.c.l.b16 %v2123
      %v2147 = vunpack.c.l.b16 %v2124
      %v2148 = vunpack.c.l.b16 %v2125
      %v2149 = vunpack.c.l.b16 %v2126
      %v2150 = vunpack.c.l.b16 %v2127
      %v2151 = vunpack.c.l.b16 %v2128
      %v2152 = vunpack.c.l.b16 %v2129
      %v2153 = vpack.c.b16 %v2146, %v2145
      %v2154 = vpack.c.b16 %v2148, %v2147
      %v2155 = vpack.c.b16 %v2150, %v2149
      %v2156 = vpack.c.b16 %v2152, %v2151
      %vm2161 = vcmask 523264
      %v2163 = vsel %vm2161, %v2121, 0
      %2165 = vmatprep.subr.bf16.mxu0 0
      %2166 = vmatpush1.bf16.msra.mxu0 %v2153
      %2167 = vmatprep.subr.bf16.mxu0 0
      %2168 = vmatpush1.bf16.msra.mxu0 %v2154
      %2169 = vmatprep.subr.bf16.mxu0 0
      %2170 = vmatpush1.bf16.msra.mxu0 %v2155
      %2171 = vmatprep.subr.bf16.mxu0 0
      %2172 = vmatpush1.bf16.msra.mxu0 %v2156
      %2173 = vmatprep.subr.bf16.mxu0 0
      %2174 = vmatpush1.bf16.msra.mxu0 0
      %2175 = vmatprep.subr.bf16.mxu0 0
      %2176 = vmatpush1.bf16.msra.mxu0 0
      %2177 = vmatprep.subr.bf16.mxu0 0
      %2178 = vmatpush1.bf16.msra.mxu0 0
      %2179 = vmatprep.subr.bf16.mxu0 0
      %2180 = vmatpush1.bf16.msra.mxu0 0
      %2181 = vmatprep.subr.bf16.mxu0 0
      %2182 = vmatpush1.bf16.msra.mxu0 0
      %2183 = vmatprep.subr.bf16.mxu0 0
      %2184 = vmatpush1.bf16.msra.mxu0 0
      %2185 = vmatprep.subr.bf16.mxu0 0
      %2186 = vmatpush1.bf16.msra.mxu0 0
      %2187 = vmatprep.subr.bf16.mxu0 0
      %2188 = vmatpush1.bf16.msra.mxu0 0
      %2189 = vmatprep.subr.bf16.mxu0 0
      %2190 = vmatpush1.bf16.msra.mxu0 0
      %2191 = vmatprep.subr.bf16.mxu0 0
      %2192 = vmatpush1.bf16.msra.mxu0 0
      %2193 = vmatprep.subr.bf16.mxu0 0
      %2194 = vmatpush1.bf16.msra.mxu0 0
      %2195 = vmatprep.subr.bf16.mxu0 0
      %2196 = vmatpush1.bf16.msra.mxu0 0
      %2197 = vmatprep.mubr.bf16.mxu0 0
      %2198 = vmatmul.mubr.bf16.gmra.mrb[0].mxu0 %v2163
      %v2199 = vpop.f32.mrb[0].mxu0
      %v2200 = vadd.f32 %v2135, %v2199
      %v2201 = vpop.f32.mrb[0].mxu0
      %v2202 = vpop.f32.mrb[0].mxu0
      %v2203 = vadd.f32 %v2135, %v2202
      %v2204 = vpop.f32.mrb[0].mxu0
      %2205 = vdwg.mxu0
      %v2206 = vadd.f32 %v2049, %v2200
      %v2207 = vadd.f32 %v2050, %v2203
      %v2208 = vld [vmem:[%s20] sm:$0x1]
      %v2209 = vld [vmem:[%s21] sm:$0x1]
      %v2210 = vsel %vm979, %v2206, 0.0
      %2211 = vadd.xlane.f32.xlu0 %v2210
      %v2212 = vpop.xlane.xlu0 %2211
      %v2213 = vsel %vm983, %v2207, 0.0
      %2214 = vadd.xlane.f32.xlu0 %v2213
      %v2215 = vpop.xlane.xlu0 %2214
      %v2216 = vmul.f32 %v2212, %v987
      %v2217 = vmul.f32 %v2215, %v987
      %v2218 = vsub.f32 %v2206, %v2216
      %v2219 = vsub.f32 %v2207, %v2217
      %v2220 = vmul.f32 %v2218, %v2218
      %v2221 = vmul.f32 %v2219, %v2219
      %v2222 = vsel %vm979, %v2220, 0.0
      %2223 = vadd.xlane.f32.xlu0 %v2222
      %v2224 = vpop.xlane.xlu0 %2223
      %v2225 = vsel %vm983, %v2221, 0.0
      %2226 = vadd.xlane.f32.xlu0 %v2225
      %v2227 = vpop.xlane.xlu0 %2226
      %v2228 = vmul.f32 %v2224, %v987
      %v2229 = vmul.f32 %v2227, %v987
      %v2230 = vadd.f32 %v2228, 1e-05
      %v2231 = vadd.f32 %v2229, 1e-05
      %v2232 = vrsqrt.pop %v2230
      %v2233 = vrsqrt.pop %v2231
      %v2234 = vmul.f32 %v2218, %v2232
      %v2235 = vmul.f32 %v2219, %v2233
      %v2237 = vlaneseq
      %v2238 = vshrl.u32 %v2237, 7
      %v2239 = vsub.s32 0, %v2238
      %v2240 = vrot.slane %v2208, %v2239
      %v2242 = vmul.f32 %v2234, %v2240
      %v2243 = vmul.f32 %v2235, %v2240
      %v2245 = vlaneseq
      %v2246 = vshrl.u32 %v2245, 7
      %v2247 = vsub.s32 0, %v2246
      %v2248 = vrot.slane %v2209, %v2247
      %v2250 = vadd.f32 %v2242, %v2248
      %v2251 = vadd.f32 %v2243, %v2248
      %v2252 = vpack.c.bf16 %v2251, %v2250
      %s2253 = scalar_lea.vmem %s10, 16
      %v2254 = vld [vmem:[%s2253] sm:$0xf]
      %v2255 = vld [vmem:[%s2253 + $0x4] sm:$0xf]
      %v2256 = vld [vmem:[%s2253 + $0x8] sm:$0xf]
      %v2257 = vld [vmem:[%s2253 + $0xc] sm:$0xf]
      %s2258 = scalar_lea.vmem %s11, 1
      %v2259 = vld [vmem:[%s2258] sm:$0x1]
      %v2261 = vlaneseq
      %v2262 = vshrl.u32 %v2261, 7
      %v2263 = vsub.s32 0, %v2262
      %v2264 = vrot.slane %v2259, %v2263
      %v2270 = vunpack.c.l.b16 %v2254
      %v2271 = vunpack.c.l.b16 %v2255
      %v2272 = vunpack.c.l.b16 %v2256
      %v2273 = vunpack.c.l.b16 %v2257
      %v2274 = vpack.c.b16 %v2271, %v2270
      %v2275 = vpack.c.b16 %v2273, %v2272
      %v2279 = vsel %vm979, %v2252, 0
      %2281 = vmatprep.subr.bf16.mxu0 0
      %2282 = vmatpush1.bf16.msra.mxu0 %v2274
      %2283 = vmatprep.subr.bf16.mxu0 0
      %2284 = vmatpush1.bf16.msra.mxu0 %v2275
      %2285 = vmatprep.subr.bf16.mxu0 0
      %2286 = vmatpush1.bf16.msra.mxu0 0
      %2287 = vmatprep.subr.bf16.mxu0 0
      %2288 = vmatpush1.bf16.msra.mxu0 0
      %2289 = vmatprep.subr.bf16.mxu0 0
      %2290 = vmatpush1.bf16.msra.mxu0 0
      %2291 = vmatprep.subr.bf16.mxu0 0
      %2292 = vmatpush1.bf16.msra.mxu0 0
      %2293 = vmatprep.subr.bf16.mxu0 0
      %2294 = vmatpush1.bf16.msra.mxu0 0
      %2295 = vmatprep.subr.bf16.mxu0 0
      %2296 = vmatpush1.bf16.msra.mxu0 0
      %2297 = vmatprep.subr.bf16.mxu0 0
      %2298 = vmatpush1.bf16.msra.mxu0 0
      %2299 = vmatprep.subr.bf16.mxu0 0
      %2300 = vmatpush1.bf16.msra.mxu0 0
      %2301 = vmatprep.subr.bf16.mxu0 0
      %2302 = vmatpush1.bf16.msra.mxu0 0
      %2303 = vmatprep.subr.bf16.mxu0 0
      %2304 = vmatpush1.bf16.msra.mxu0 0
      %2305 = vmatprep.subr.bf16.mxu0 0
      %2306 = vmatpush1.bf16.msra.mxu0 0
      %2307 = vmatprep.subr.bf16.mxu0 0
      %2308 = vmatpush1.bf16.msra.mxu0 0
      %2309 = vmatprep.subr.bf16.mxu0 0
      %2310 = vmatpush1.bf16.msra.mxu0 0
      %2311 = vmatprep.subr.bf16.mxu0 0
      %2312 = vmatpush1.bf16.msra.mxu0 0
      %2313 = vmatprep.mubr.bf16.mxu0 0
      %2314 = vmatmul.mubr.bf16.gmra.mrb[0].mxu0 %v2279
      %v2315 = vpop.f32.mrb[0].mxu0
      %v2316 = vadd.f32 %v2264, %v2315
      %v2317 = vpop.f32.mrb[0].mxu0
      %v2318 = vpop.f32.mrb[0].mxu0
      %v2319 = vadd.f32 %v2264, %v2318
      %v2320 = vpop.f32.mrb[0].mxu0
      %2321 = vdwg.mxu0
      %2324 = vrot.lane.b32.xlu0 %v2316, 96
      %v2325 = vpop.permute.xlu0 %2324
      %2326 = vrot.lane.b32.xlu0 %v2319, 96
      %v2327 = vpop.permute.xlu0 %2326
      %v2328 = vsel %vm1098, %v2316, 0
      %v2330 = vsel %vm1098, %v2319, 0
      %v2332 = vsel %vm1098, %v2325, 0
      %v2334 = vsel %vm1098, %v2327, 0
      %2336 = vmatprep.subr.mxu0 0.0
      %2337 = vmatpush1.xpose.msra.mxu0 %v2332
      %2338 = vmatprep.subr.mxu0 0.0
      %2339 = vmatpush1.xpose.msra.mxu0 %v2334
      %2340 = vmatprep.subr.mxu0 0.0
      %2341 = vmatpush1.xpose.msra.mxu0 0.0
      %2342 = vmatprep.subr.mxu0 0.0
      %2343 = vmatpush1.xpose.msra.mxu0 0.0
      %2344 = vmatprep.subr.mxu0 0.0
      %2345 = vmatpush1.xpose.msra.mxu0 0.0
      %2346 = vmatprep.subr.mxu0 0.0
      %2347 = vmatpush1.xpose.msra.mxu0 0.0
      %2348 = vmatprep.subr.mxu0 0.0
      %2349 = vmatpush1.xpose.msra.mxu0 0.0
      %2350 = vmatprep.subr.mxu0 0.0
      %2351 = vmatpush1.xpose.msra.mxu0 0.0
      %2352 = vmatprep.subr.mxu0 0.0
      %2353 = vmatpush1.xpose.msra.mxu0 0.0
      %2354 = vmatprep.subr.mxu0 0.0
      %2355 = vmatpush1.xpose.msra.mxu0 0.0
      %2356 = vmatprep.subr.mxu0 0.0
      %2357 = vmatpush1.xpose.msra.mxu0 0.0
      %2358 = vmatprep.subr.mxu0 0.0
      %2359 = vmatpush1.xpose.msra.mxu0 0.0
      %2360 = vmatprep.subr.mxu0 0.0
      %2361 = vmatpush1.xpose.msra.mxu0 0.0
      %2362 = vmatprep.subr.mxu0 0.0
      %2363 = vmatpush1.xpose.msra.mxu0 0.0
      %2364 = vmatprep.subr.mxu0 0.0
      %2365 = vmatpush1.xpose.msra.mxu0 0.0
      %2366 = vmatprep.subr.mxu0 0.0
      %2367 = vmatpush1.xpose.msra.mxu0 0.0
      %2368 = vmatprep.subr.mxu0 0.0
      %2369 = vmatpush1.xpose.msra.mxu0 0.0
      %2370 = vmatprep.subr.mxu0 0.0
      %2371 = vmatpush1.xpose.msra.mxu0 0.0
      %2372 = vmatprep.subr.mxu0 0.0
      %2373 = vmatpush1.xpose.msra.mxu0 0.0
      %2374 = vmatprep.subr.mxu0 0.0
      %2375 = vmatpush1.xpose.msra.mxu0 0.0
      %2376 = vmatprep.subr.mxu0 0.0
      %2377 = vmatpush1.xpose.msra.mxu0 0.0
      %2378 = vmatprep.subr.mxu0 0.0
      %2379 = vmatpush1.xpose.msra.mxu0 0.0
      %2380 = vmatprep.subr.mxu0 0.0
      %2381 = vmatpush1.xpose.msra.mxu0 0.0
      %2382 = vmatprep.subr.mxu0 0.0
      %2383 = vmatpush1.xpose.msra.mxu0 0.0
      %2384 = vmatprep.subr.mxu0 0.0
      %2385 = vmatpush1.xpose.msra.mxu0 0.0
      %2386 = vmatprep.subr.mxu0 0.0
      %2387 = vmatpush1.xpose.msra.mxu0 0.0
      %2388 = vmatprep.subr.mxu0 0.0
      %2389 = vmatpush1.xpose.msra.mxu0 0.0
      %2390 = vmatprep.subr.mxu0 0.0
      %2391 = vmatpush1.xpose.msra.mxu0 0.0
      %2392 = vmatprep.subr.mxu0 0.0
      %2393 = vmatpush1.xpose.msra.mxu0 0.0
      %2394 = vmatprep.subr.mxu0 0.0
      %2395 = vmatpush1.xpose.msra.mxu0 0.0
      %2396 = vmatprep.subr.mxu0 0.0
      %2397 = vmatpush1.xpose.msra.mxu0 0.0
      %2398 = vmatprep.subr.mxu0 0.0
      %2399 = vmatpush1.xpose.msra.mxu0 0.0
      %2400 = vmatprep.mubr.f32.mxu0 0.0
      %2401 = vmatmul.mubr.f32.gmra.mrb[0].mxu0 %v2328
      %v2402 = vpop.f32.mrb[0].mxu0
      %v2403 = vadd.f32 0.0, %v2402
      %v2404 = vpop.f32.mrb[0].mxu0
      %2405 = vmatprep.mubr.f32.mxu0 0.0
      %2406 = vmatmul.mubr.f32.gmra.mrb[0].mxu0 %v2330
      %v2407 = vpop.f32.mrb[0].mxu0
      %v2408 = vadd.f32 0.0, %v2407
      %v2409 = vpop.f32.mrb[0].mxu0
      %2410 = vdwg.mxu0
      %v2411 = vmul.f32 %v2403, 0.35355338
      %v2412 = vmul.f32 %v2408, 0.35355338
      %v2413 = vsel %vm1184, %v2411, -inf
      %2414 = vmax.xlane.f32.xlu0 %v2413
      %v2415 = vpop.xlane.xlu0 %2414
      %v2416 = vsel %vm1188, %v2412, -inf
      %2417 = vmax.xlane.f32.xlu0 %v2416
      %v2418 = vpop.xlane.xlu0 %2417
      %v2419 = vsub.f32 %v2411, %v2415
      %v2420 = vsub.f32 %v2412, %v2418
      %v2421 = vmul.f32 %v2419, 1.442695
      %v2422 = vpow.pop %v2421
      %v2423 = vmul.f32 %v2420, 1.442695
      %v2424 = vpow.pop %v2423
      %v2425 = vsel %vm1184, %v2422, 0.0
      %2426 = vadd.xlane.f32.xlu0 %v2425
      %v2427 = vpop.xlane.xlu0 %2426
      %v2428 = vsel %vm1188, %v2424, 0.0
      %2429 = vadd.xlane.f32.xlu0 %v2428
      %v2430 = vpop.xlane.xlu0 %2429
      %v2431 = vrcp.pop %v2427
      %v2432 = vmul.f32 %v2422, %v2431
      %v2433 = vrcp.pop %v2430
      %v2434 = vmul.f32 %v2424, %v2433
      %2435 = vrot.lane.b32.xlu0 %v2316, 64
      %v2436 = vpop.permute.xlu0 %2435
      %2437 = vrot.lane.b32.xlu0 %v2319, 64
      %v2438 = vpop.permute.xlu0 %2437
      %v2441 = vsel %vm1184, %v2432, 0
      %v2444 = vsel %vm1184, %v2434, 0
      %v2446 = vsel %vm924, %v2438, 0
      %2448 = vmatprep.subr.mxu0 0.0
      %2449 = vmatpush1.msra.mxu0 %v2436
      %2450 = vmatprep.subr.mxu0 0.0
      %2451 = vmatpush1.msra.mxu0 %v2446
      %2452 = vmatprep.subr.mxu0 0.0
      %2453 = vmatpush1.msra.mxu0 0.0
      %2454 = vmatprep.subr.mxu0 0.0
      %2455 = vmatpush1.msra.mxu0 0.0
      %2456 = vmatprep.subr.mxu0 0.0
      %2457 = vmatpush1.msra.mxu0 0.0
      %2458 = vmatprep.subr.mxu0 0.0
      %2459 = vmatpush1.msra.mxu0 0.0
      %2460 = vmatprep.subr.mxu0 0.0
      %2461 = vmatpush1.msra.mxu0 0.0
      %2462 = vmatprep.subr.mxu0 0.0
      %2463 = vmatpush1.msra.mxu0 0.0
      %2464 = vmatprep.subr.mxu0 0.0
      %2465 = vmatpush1.msra.mxu0 0.0
      %2466 = vmatprep.subr.mxu0 0.0
      %2467 = vmatpush1.msra.mxu0 0.0
      %2468 = vmatprep.subr.mxu0 0.0
      %2469 = vmatpush1.msra.mxu0 0.0
      %2470 = vmatprep.subr.mxu0 0.0
      %2471 = vmatpush1.msra.mxu0 0.0
      %2472 = vmatprep.subr.mxu0 0.0
      %2473 = vmatpush1.msra.mxu0 0.0
      %2474 = vmatprep.subr.mxu0 0.0
      %2475 = vmatpush1.msra.mxu0 0.0
      %2476 = vmatprep.subr.mxu0 0.0
      %2477 = vmatpush1.msra.mxu0 0.0
      %2478 = vmatprep.subr.mxu0 0.0
      %2479 = vmatpush1.msra.mxu0 0.0
      %2480 = vmatprep.subr.mxu0 0.0
      %2481 = vmatpush1.msra.mxu0 0.0
      %2482 = vmatprep.subr.mxu0 0.0
      %2483 = vmatpush1.msra.mxu0 0.0
      %2484 = vmatprep.subr.mxu0 0.0
      %2485 = vmatpush1.msra.mxu0 0.0
      %2486 = vmatprep.subr.mxu0 0.0
      %2487 = vmatpush1.msra.mxu0 0.0
      %2488 = vmatprep.subr.mxu0 0.0
      %2489 = vmatpush1.msra.mxu0 0.0
      %2490 = vmatprep.subr.mxu0 0.0
      %2491 = vmatpush1.msra.mxu0 0.0
      %2492 = vmatprep.subr.mxu0 0.0
      %2493 = vmatpush1.msra.mxu0 0.0
      %2494 = vmatprep.subr.mxu0 0.0
      %2495 = vmatpush1.msra.mxu0 0.0
      %2496 = vmatprep.subr.mxu0 0.0
      %2497 = vmatpush1.msra.mxu0 0.0
      %2498 = vmatprep.subr.mxu0 0.0
      %2499 = vmatpush1.msra.mxu0 0.0
      %2500 = vmatprep.subr.mxu0 0.0
      %2501 = vmatpush1.msra.mxu0 0.0
      %2502 = vmatprep.subr.mxu0 0.0
      %2503 = vmatpush1.msra.mxu0 0.0
      %2504 = vmatprep.subr.mxu0 0.0
      %2505 = vmatpush1.msra.mxu0 0.0
      %2506 = vmatprep.subr.mxu0 0.0
      %2507 = vmatpush1.msra.mxu0 0.0
      %2508 = vmatprep.subr.mxu0 0.0
      %2509 = vmatpush1.msra.mxu0 0.0
      %2510 = vmatprep.subr.mxu0 0.0
      %2511 = vmatpush1.msra.mxu0 0.0
      %2512 = vmatprep.mubr.f32.mxu0 0.0
      %2513 = vmatmul.mubr.f32.gmra.mrb[0].mxu0 %v2441
      %v2514 = vpop.f32.mrb[0].mxu0
      %v2515 = vadd.f32 0.0, %v2514
      %v2516 = vpop.f32.mrb[0].mxu0
      %2517 = vmatprep.mubr.f32.mxu0 0.0
      %2518 = vmatmul.mubr.f32.gmra.mrb[0].mxu0 %v2444
      %v2519 = vpop.f32.mrb[0].mxu0
      %v2520 = vadd.f32 0.0, %v2519
      %v2521 = vpop.f32.mrb[0].mxu0
      %2522 = vdwg.mxu0
      %2523 = vrot.lane.b32.xlu0 %v2316, 120
      %v2524 = vpop.permute.xlu0 %2523
      %2525 = vrot.lane.b32.xlu0 %v2319, 120
      %v2526 = vpop.permute.xlu0 %2525
      %2527 = vrot.lane.b32.xlu0 %v2316, 88
      %v2528 = vpop.permute.xlu0 %2527
      %2529 = vrot.lane.b32.xlu0 %v2319, 88
      %v2530 = vpop.permute.xlu0 %2529
      %v2531 = vsel %vm1098, %v2524, 0
      %v2533 = vsel %vm1098, %v2526, 0
      %v2535 = vsel %vm1098, %v2528, 0
      %v2537 = vsel %vm1098, %v2530, 0
      %2539 = vmatprep.subr.mxu0 0.0
      %2540 = vmatpush1.xpose.msra.mxu0 %v2535
      %2541 = vmatprep.subr.mxu0 0.0
      %2542 = vmatpush1.xpose.msra.mxu0 %v2537
      %2543 = vmatprep.subr.mxu0 0.0
      %2544 = vmatpush1.xpose.msra.mxu0 0.0
      %2545 = vmatprep.subr.mxu0 0.0
      %2546 = vmatpush1.xpose.msra.mxu0 0.0
      %2547 = vmatprep.subr.mxu0 0.0
      %2548 = vmatpush1.xpose.msra.mxu0 0.0
      %2549 = vmatprep.subr.mxu0 0.0
      %2550 = vmatpush1.xpose.msra.mxu0 0.0
      %2551 = vmatprep.subr.mxu0 0.0
      %2552 = vmatpush1.xpose.msra.mxu0 0.0
      %2553 = vmatprep.subr.mxu0 0.0
      %2554 = vmatpush1.xpose.msra.mxu0 0.0
      %2555 = vmatprep.subr.mxu0 0.0
      %2556 = vmatpush1.xpose.msra.mxu0 0.0
      %2557 = vmatprep.subr.mxu0 0.0
      %2558 = vmatpush1.xpose.msra.mxu0 0.0
      %2559 = vmatprep.subr.mxu0 0.0
      %2560 = vmatpush1.xpose.msra.mxu0 0.0
      %2561 = vmatprep.subr.mxu0 0.0
      %2562 = vmatpush1.xpose.msra.mxu0 0.0
      %2563 = vmatprep.subr.mxu0 0.0
      %2564 = vmatpush1.xpose.msra.mxu0 0.0
      %2565 = vmatprep.subr.mxu0 0.0
      %2566 = vmatpush1.xpose.msra.mxu0 0.0
      %2567 = vmatprep.subr.mxu0 0.0
      %2568 = vmatpush1.xpose.msra.mxu0 0.0
      %2569 = vmatprep.subr.mxu0 0.0
      %2570 = vmatpush1.xpose.msra.mxu0 0.0
      %2571 = vmatprep.subr.mxu0 0.0
      %2572 = vmatpush1.xpose.msra.mxu0 0.0
      %2573 = vmatprep.subr.mxu0 0.0
      %2574 = vmatpush1.xpose.msra.mxu0 0.0
      %2575 = vmatprep.subr.mxu0 0.0
      %2576 = vmatpush1.xpose.msra.mxu0 0.0
      %2577 = vmatprep.subr.mxu0 0.0
      %2578 = vmatpush1.xpose.msra.mxu0 0.0
      %2579 = vmatprep.subr.mxu0 0.0
      %2580 = vmatpush1.xpose.msra.mxu0 0.0
      %2581 = vmatprep.subr.mxu0 0.0
      %2582 = vmatpush1.xpose.msra.mxu0 0.0
      %2583 = vmatprep.subr.mxu0 0.0
      %2584 = vmatpush1.xpose.msra.mxu0 0.0
      %2585 = vmatprep.subr.mxu0 0.0
      %2586 = vmatpush1.xpose.msra.mxu0 0.0
      %2587 = vmatprep.subr.mxu0 0.0
      %2588 = vmatpush1.xpose.msra.mxu0 0.0
      %2589 = vmatprep.subr.mxu0 0.0
      %2590 = vmatpush1.xpose.msra.mxu0 0.0
      %2591 = vmatprep.subr.mxu0 0.0
      %2592 = vmatpush1.xpose.msra.mxu0 0.0
      %2593 = vmatprep.subr.mxu0 0.0
      %2594 = vmatpush1.xpose.msra.mxu0 0.0
      %2595 = vmatprep.subr.mxu0 0.0
      %2596 = vmatpush1.xpose.msra.mxu0 0.0
      %2597 = vmatprep.subr.mxu0 0.0
      %2598 = vmatpush1.xpose.msra.mxu0 0.0
      %2599 = vmatprep.subr.mxu0 0.0
      %2600 = vmatpush1.xpose.msra.mxu0 0.0
      %2601 = vmatprep.subr.mxu0 0.0
      %2602 = vmatpush1.xpose.msra.mxu0 0.0
      %2603 = vmatprep.mubr.f32.mxu0 0.0
      %2604 = vmatmul.mubr.f32.gmra.mrb[0].mxu0 %v2531
      %v2605 = vpop.f32.mrb[0].mxu0
      %v2606 = vadd.f32 0.0, %v2605
      %v2607 = vpop.f32.mrb[0].mxu0
      %2608 = vmatprep.mubr.f32.mxu0 0.0
      %2609 = vmatmul.mubr.f32.gmra.mrb[0].mxu0 %v2533
      %v2610 = vpop.f32.mrb[0].mxu0
      %v2611 = vadd.f32 0.0, %v2610
      %v2612 = vpop.f32.mrb[0].mxu0
      %2613 = vdwg.mxu0
      %v2614 = vmul.f32 %v2606, 0.35355338
      %v2615 = vmul.f32 %v2611, 0.35355338
      %v2616 = vsel %vm1184, %v2614, -inf
      %2617 = vmax.xlane.f32.xlu0 %v2616
      %v2618 = vpop.xlane.xlu0 %2617
      %v2619 = vsel %vm1188, %v2615, -inf
      %2620 = vmax.xlane.f32.xlu0 %v2619
      %v2621 = vpop.xlane.xlu0 %2620
      %v2622 = vsub.f32 %v2614, %v2618
      %v2623 = vsub.f32 %v2615, %v2621
      %v2624 = vmul.f32 %v2622, 1.442695
      %v2625 = vpow.pop %v2624
      %v2626 = vmul.f32 %v2623, 1.442695
      %v2627 = vpow.pop %v2626
      %v2628 = vsel %vm1184, %v2625, 0.0
      %2629 = vadd.xlane.f32.xlu0 %v2628
      %v2630 = vpop.xlane.xlu0 %2629
      %v2631 = vsel %vm1188, %v2627, 0.0
      %2632 = vadd.xlane.f32.xlu0 %v2631
      %v2633 = vpop.xlane.xlu0 %2632
      %v2634 = vrcp.pop %v2630
      %v2635 = vmul.f32 %v2625, %v2634
      %v2636 = vrcp.pop %v2633
      %v2637 = vmul.f32 %v2627, %v2636
      %2638 = vrot.lane.b32.xlu0 %v2316, 56
      %v2639 = vpop.permute.xlu0 %2638
      %2640 = vrot.lane.b32.xlu0 %v2319, 56
      %v2641 = vpop.permute.xlu0 %2640
      %v2644 = vsel %vm1184, %v2635, 0
      %v2647 = vsel %vm1184, %v2637, 0
      %v2649 = vsel %vm924, %v2641, 0
      %2651 = vmatprep.subr.mxu0 0.0
      %2652 = vmatpush1.msra.mxu0 %v2639
      %2653 = vmatprep.subr.mxu0 0.0
      %2654 = vmatpush1.msra.mxu0 %v2649
      %2655 = vmatprep.subr.mxu0 0.0
      %2656 = vmatpush1.msra.mxu0 0.0
      %2657 = vmatprep.subr.mxu0 0.0
      %2658 = vmatpush1.msra.mxu0 0.0
      %2659 = vmatprep.subr.mxu0 0.0
      %2660 = vmatpush1.msra.mxu0 0.0
      %2661 = vmatprep.subr.mxu0 0.0
      %2662 = vmatpush1.msra.mxu0 0.0
      %2663 = vmatprep.subr.mxu0 0.0
      %2664 = vmatpush1.msra.mxu0 0.0
      %2665 = vmatprep.subr.mxu0 0.0
      %2666 = vmatpush1.msra.mxu0 0.0
      %2667 = vmatprep.subr.mxu0 0.0
      %2668 = vmatpush1.msra.mxu0 0.0
      %2669 = vmatprep.subr.mxu0 0.0
      %2670 = vmatpush1.msra.mxu0 0.0
      %2671 = vmatprep.subr.mxu0 0.0
      %2672 = vmatpush1.msra.mxu0 0.0
      %2673 = vmatprep.subr.mxu0 0.0
      %2674 = vmatpush1.msra.mxu0 0.0
      %2675 = vmatprep.subr.mxu0 0.0
      %2676 = vmatpush1.msra.mxu0 0.0
      %2677 = vmatprep.subr.mxu0 0.0
      %2678 = vmatpush1.msra.mxu0 0.0
      %2679 = vmatprep.subr.mxu0 0.0
      %2680 = vmatpush1.msra.mxu0 0.0
      %2681 = vmatprep.subr.mxu0 0.0
      %2682 = vmatpush1.msra.mxu0 0.0
      %2683 = vmatprep.subr.mxu0 0.0
      %2684 = vmatpush1.msra.mxu0 0.0
      %2685 = vmatprep.subr.mxu0 0.0
      %2686 = vmatpush1.msra.mxu0 0.0
      %2687 = vmatprep.subr.mxu0 0.0
      %2688 = vmatpush1.msra.mxu0 0.0
      %2689 = vmatprep.subr.mxu0 0.0
      %2690 = vmatpush1.msra.mxu0 0.0
      %2691 = vmatprep.subr.mxu0 0.0
      %2692 = vmatpush1.msra.mxu0 0.0
      %2693 = vmatprep.subr.mxu0 0.0
      %2694 = vmatpush1.msra.mxu0 0.0
      %2695 = vmatprep.subr.mxu0 0.0
      %2696 = vmatpush1.msra.mxu0 0.0
      %2697 = vmatprep.subr.mxu0 0.0
      %2698 = vmatpush1.msra.mxu0 0.0
      %2699 = vmatprep.subr.mxu0 0.0
      %2700 = vmatpush1.msra.mxu0 0.0
      %2701 = vmatprep.subr.mxu0 0.0
      %2702 = vmatpush1.msra.mxu0 0.0
      %2703 = vmatprep.subr.mxu0 0.0
      %2704 = vmatpush1.msra.mxu0 0.0
      %2705 = vmatprep.subr.mxu0 0.0
      %2706 = vmatpush1.msra.mxu0 0.0
      %2707 = vmatprep.subr.mxu0 0.0
      %2708 = vmatpush1.msra.mxu0 0.0
      %2709 = vmatprep.subr.mxu0 0.0
      %2710 = vmatpush1.msra.mxu0 0.0
      %2711 = vmatprep.subr.mxu0 0.0
      %2712 = vmatpush1.msra.mxu0 0.0
      %2713 = vmatprep.subr.mxu0 0.0
      %2714 = vmatpush1.msra.mxu0 0.0
      %2715 = vmatprep.mubr.f32.mxu0 0.0
      %2716 = vmatmul.mubr.f32.gmra.mrb[0].mxu0 %v2644
      %v2717 = vpop.f32.mrb[0].mxu0
      %v2718 = vadd.f32 0.0, %v2717
      %v2719 = vpop.f32.mrb[0].mxu0
      %2720 = vmatprep.mubr.f32.mxu0 0.0
      %2721 = vmatmul.mubr.f32.gmra.mrb[0].mxu0 %v2647
      %v2722 = vpop.f32.mrb[0].mxu0
      %v2723 = vadd.f32 0.0, %v2722
      %v2724 = vpop.f32.mrb[0].mxu0
      %2725 = vdwg.mxu0
      %2726 = vrot.lane.b32.xlu0 %v2316, 112
      %v2727 = vpop.permute.xlu0 %2726
      %2728 = vrot.lane.b32.xlu0 %v2319, 112
      %v2729 = vpop.permute.xlu0 %2728
      %2730 = vrot.lane.b32.xlu0 %v2316, 80
      %v2731 = vpop.permute.xlu0 %2730
      %2732 = vrot.lane.b32.xlu0 %v2319, 80
      %v2733 = vpop.permute.xlu0 %2732
      %v2734 = vsel %vm1098, %v2727, 0
      %v2736 = vsel %vm1098, %v2729, 0
      %v2738 = vsel %vm1098, %v2731, 0
      %v2740 = vsel %vm1098, %v2733, 0
      %2742 = vmatprep.subr.mxu0 0.0
      %2743 = vmatpush1.xpose.msra.mxu0 %v2738
      %2744 = vmatprep.subr.mxu0 0.0
      %2745 = vmatpush1.xpose.msra.mxu0 %v2740
      %2746 = vmatprep.subr.mxu0 0.0
      %2747 = vmatpush1.xpose.msra.mxu0 0.0
      %2748 = vmatprep.subr.mxu0 0.0
      %2749 = vmatpush1.xpose.msra.mxu0 0.0
      %2750 = vmatprep.subr.mxu0 0.0
      %2751 = vmatpush1.xpose.msra.mxu0 0.0
      %2752 = vmatprep.subr.mxu0 0.0
      %2753 = vmatpush1.xpose.msra.mxu0 0.0
      %2754 = vmatprep.subr.mxu0 0.0
      %2755 = vmatpush1.xpose.msra.mxu0 0.0
      %2756 = vmatprep.subr.mxu0 0.0
      %2757 = vmatpush1.xpose.msra.mxu0 0.0
      %2758 = vmatprep.subr.mxu0 0.0
      %2759 = vmatpush1.xpose.msra.mxu0 0.0
      %2760 = vmatprep.subr.mxu0 0.0
      %2761 = vmatpush1.xpose.msra.mxu0 0.0
      %2762 = vmatprep.subr.mxu0 0.0
      %2763 = vmatpush1.xpose.msra.mxu0 0.0
      %2764 = vmatprep.subr.mxu0 0.0
      %2765 = vmatpush1.xpose.msra.mxu0 0.0
      %2766 = vmatprep.subr.mxu0 0.0
      %2767 = vmatpush1.xpose.msra.mxu0 0.0
      %2768 = vmatprep.subr.mxu0 0.0
      %2769 = vmatpush1.xpose.msra.mxu0 0.0
      %2770 = vmatprep.subr.mxu0 0.0
      %2771 = vmatpush1.xpose.msra.mxu0 0.0
      %2772 = vmatprep.subr.mxu0 0.0
      %2773 = vmatpush1.xpose.msra.mxu0 0.0
      %2774 = vmatprep.subr.mxu0 0.0
      %2775 = vmatpush1.xpose.msra.mxu0 0.0
      %2776 = vmatprep.subr.mxu0 0.0
      %2777 = vmatpush1.xpose.msra.mxu0 0.0
      %2778 = vmatprep.subr.mxu0 0.0
      %2779 = vmatpush1.xpose.msra.mxu0 0.0
      %2780 = vmatprep.subr.mxu0 0.0
      %2781 = vmatpush1.xpose.msra.mxu0 0.0
      %2782 = vmatprep.subr.mxu0 0.0
      %2783 = vmatpush1.xpose.msra.mxu0 0.0
      %2784 = vmatprep.subr.mxu0 0.0
      %2785 = vmatpush1.xpose.msra.mxu0 0.0
      %2786 = vmatprep.subr.mxu0 0.0
      %2787 = vmatpush1.xpose.msra.mxu0 0.0
      %2788 = vmatprep.subr.mxu0 0.0
      %2789 = vmatpush1.xpose.msra.mxu0 0.0
      %2790 = vmatprep.subr.mxu0 0.0
      %2791 = vmatpush1.xpose.msra.mxu0 0.0
      %2792 = vmatprep.subr.mxu0 0.0
      %2793 = vmatpush1.xpose.msra.mxu0 0.0
      %2794 = vmatprep.subr.mxu0 0.0
      %2795 = vmatpush1.xpose.msra.mxu0 0.0
      %2796 = vmatprep.subr.mxu0 0.0
      %2797 = vmatpush1.xpose.msra.mxu0 0.0
      %2798 = vmatprep.subr.mxu0 0.0
      %2799 = vmatpush1.xpose.msra.mxu0 0.0
      %2800 = vmatprep.subr.mxu0 0.0
      %2801 = vmatpush1.xpose.msra.mxu0 0.0
      %2802 = vmatprep.subr.mxu0 0.0
      %2803 = vmatpush1.xpose.msra.mxu0 0.0
      %2804 = vmatprep.subr.mxu0 0.0
      %2805 = vmatpush1.xpose.msra.mxu0 0.0
      %2806 = vmatprep.mubr.f32.mxu0 0.0
      %2807 = vmatmul.mubr.f32.gmra.mrb[0].mxu0 %v2734
      %v2808 = vpop.f32.mrb[0].mxu0
      %v2809 = vadd.f32 0.0, %v2808
      %v2810 = vpop.f32.mrb[0].mxu0
      %2811 = vmatprep.mubr.f32.mxu0 0.0
      %2812 = vmatmul.mubr.f32.gmra.mrb[0].mxu0 %v2736
      %v2813 = vpop.f32.mrb[0].mxu0
      %v2814 = vadd.f32 0.0, %v2813
      %v2815 = vpop.f32.mrb[0].mxu0
      %2816 = vdwg.mxu0
      %v2817 = vmul.f32 %v2809, 0.35355338
      %v2818 = vmul.f32 %v2814, 0.35355338
      %v2819 = vsel %vm1184, %v2817, -inf
      %2820 = vmax.xlane.f32.xlu0 %v2819
      %v2821 = vpop.xlane.xlu0 %2820
      %v2822 = vsel %vm1188, %v2818, -inf
      %2823 = vmax.xlane.f32.xlu0 %v2822
      %v2824 = vpop.xlane.xlu0 %2823
      %v2825 = vsub.f32 %v2817, %v2821
      %v2826 = vsub.f32 %v2818, %v2824
      %v2827 = vmul.f32 %v2825, 1.442695
      %v2828 = vpow.pop %v2827
      %v2829 = vmul.f32 %v2826, 1.442695
      %v2830 = vpow.pop %v2829
      %v2831 = vsel %vm1184, %v2828, 0.0
      %2832 = vadd.xlane.f32.xlu0 %v2831
      %v2833 = vpop.xlane.xlu0 %2832
      %v2834 = vsel %vm1188, %v2830, 0.0
      %2835 = vadd.xlane.f32.xlu0 %v2834
      %v2836 = vpop.xlane.xlu0 %2835
      %v2837 = vrcp.pop %v2833
      %v2838 = vmul.f32 %v2828, %v2837
      %v2839 = vrcp.pop %v2836
      %v2840 = vmul.f32 %v2830, %v2839
      %2841 = vrot.lane.b32.xlu0 %v2316, 48
      %v2842 = vpop.permute.xlu0 %2841
      %2843 = vrot.lane.b32.xlu0 %v2319, 48
      %v2844 = vpop.permute.xlu0 %2843
      %v2847 = vsel %vm1184, %v2838, 0
      %v2850 = vsel %vm1184, %v2840, 0
      %v2852 = vsel %vm924, %v2844, 0
      %2854 = vmatprep.subr.mxu0 0.0
      %2855 = vmatpush1.msra.mxu0 %v2842
      %2856 = vmatprep.subr.mxu0 0.0
      %2857 = vmatpush1.msra.mxu0 %v2852
      %2858 = vmatprep.subr.mxu0 0.0
      %2859 = vmatpush1.msra.mxu0 0.0
      %2860 = vmatprep.subr.mxu0 0.0
      %2861 = vmatpush1.msra.mxu0 0.0
      %2862 = vmatprep.subr.mxu0 0.0
      %2863 = vmatpush1.msra.mxu0 0.0
      %2864 = vmatprep.subr.mxu0 0.0
      %2865 = vmatpush1.msra.mxu0 0.0
      %2866 = vmatprep.subr.mxu0 0.0
      %2867 = vmatpush1.msra.mxu0 0.0
      %2868 = vmatprep.subr.mxu0 0.0
      %2869 = vmatpush1.msra.mxu0 0.0
      %2870 = vmatprep.subr.mxu0 0.0
      %2871 = vmatpush1.msra.mxu0 0.0
      %2872 = vmatprep.subr.mxu0 0.0
      %2873 = vmatpush1.msra.mxu0 0.0
      %2874 = vmatprep.subr.mxu0 0.0
      %2875 = vmatpush1.msra.mxu0 0.0
      %2876 = vmatprep.subr.mxu0 0.0
      %2877 = vmatpush1.msra.mxu0 0.0
      %2878 = vmatprep.subr.mxu0 0.0
      %2879 = vmatpush1.msra.mxu0 0.0
      %2880 = vmatprep.subr.mxu0 0.0
      %2881 = vmatpush1.msra.mxu0 0.0
      %2882 = vmatprep.subr.mxu0 0.0
      %2883 = vmatpush1.msra.mxu0 0.0
      %2884 = vmatprep.subr.mxu0 0.0
      %2885 = vmatpush1.msra.mxu0 0.0
      %2886 = vmatprep.subr.mxu0 0.0
      %2887 = vmatpush1.msra.mxu0 0.0
      %2888 = vmatprep.subr.mxu0 0.0
      %2889 = vmatpush1.msra.mxu0 0.0
      %2890 = vmatprep.subr.mxu0 0.0
      %2891 = vmatpush1.msra.mxu0 0.0
      %2892 = vmatprep.subr.mxu0 0.0
      %2893 = vmatpush1.msra.mxu0 0.0
      %2894 = vmatprep.subr.mxu0 0.0
      %2895 = vmatpush1.msra.mxu0 0.0
      %2896 = vmatprep.subr.mxu0 0.0
      %2897 = vmatpush1.msra.mxu0 0.0
      %2898 = vmatprep.subr.mxu0 0.0
      %2899 = vmatpush1.msra.mxu0 0.0
      %2900 = vmatprep.subr.mxu0 0.0
      %2901 = vmatpush1.msra.mxu0 0.0
      %2902 = vmatprep.subr.mxu0 0.0
      %2903 = vmatpush1.msra.mxu0 0.0
      %2904 = vmatprep.subr.mxu0 0.0
      %2905 = vmatpush1.msra.mxu0 0.0
      %2906 = vmatprep.subr.mxu0 0.0
      %2907 = vmatpush1.msra.mxu0 0.0
      %2908 = vmatprep.subr.mxu0 0.0
      %2909 = vmatpush1.msra.mxu0 0.0
      %2910 = vmatprep.subr.mxu0 0.0
      %2911 = vmatpush1.msra.mxu0 0.0
      %2912 = vmatprep.subr.mxu0 0.0
      %2913 = vmatpush1.msra.mxu0 0.0
      %2914 = vmatprep.subr.mxu0 0.0
      %2915 = vmatpush1.msra.mxu0 0.0
      %2916 = vmatprep.subr.mxu0 0.0
      %2917 = vmatpush1.msra.mxu0 0.0
      %2918 = vmatprep.mubr.f32.mxu0 0.0
      %2919 = vmatmul.mubr.f32.gmra.mrb[0].mxu0 %v2847
      %v2920 = vpop.f32.mrb[0].mxu0
      %v2921 = vadd.f32 0.0, %v2920
      %v2922 = vpop.f32.mrb[0].mxu0
      %2923 = vmatprep.mubr.f32.mxu0 0.0
      %2924 = vmatmul.mubr.f32.gmra.mrb[0].mxu0 %v2850
      %v2925 = vpop.f32.mrb[0].mxu0
      %v2926 = vadd.f32 0.0, %v2925
      %v2927 = vpop.f32.mrb[0].mxu0
      %2928 = vdwg.mxu0
      %2929 = vrot.lane.b32.xlu0 %v2316, 104
      %v2930 = vpop.permute.xlu0 %2929
      %2931 = vrot.lane.b32.xlu0 %v2319, 104
      %v2932 = vpop.permute.xlu0 %2931
      %2933 = vrot.lane.b32.xlu0 %v2316, 72
      %v2934 = vpop.permute.xlu0 %2933
      %2935 = vrot.lane.b32.xlu0 %v2319, 72
      %v2936 = vpop.permute.xlu0 %2935
      %v2937 = vsel %vm1098, %v2930, 0
      %v2939 = vsel %vm1098, %v2932, 0
      %v2941 = vsel %vm1098, %v2934, 0
      %v2943 = vsel %vm1098, %v2936, 0
      %2945 = vmatprep.subr.mxu0 0.0
      %2946 = vmatpush1.xpose.msra.mxu0 %v2941
      %2947 = vmatprep.subr.mxu0 0.0
      %2948 = vmatpush1.xpose.msra.mxu0 %v2943
      %2949 = vmatprep.subr.mxu0 0.0
      %2950 = vmatpush1.xpose.msra.mxu0 0.0
      %2951 = vmatprep.subr.mxu0 0.0
      %2952 = vmatpush1.xpose.msra.mxu0 0.0
      %2953 = vmatprep.subr.mxu0 0.0
      %2954 = vmatpush1.xpose.msra.mxu0 0.0
      %2955 = vmatprep.subr.mxu0 0.0
      %2956 = vmatpush1.xpose.msra.mxu0 0.0
      %2957 = vmatprep.subr.mxu0 0.0
      %2958 = vmatpush1.xpose.msra.mxu0 0.0
      %2959 = vmatprep.subr.mxu0 0.0
      %2960 = vmatpush1.xpose.msra.mxu0 0.0
      %2961 = vmatprep.subr.mxu0 0.0
      %2962 = vmatpush1.xpose.msra.mxu0 0.0
      %2963 = vmatprep.subr.mxu0 0.0
      %2964 = vmatpush1.xpose.msra.mxu0 0.0
      %2965 = vmatprep.subr.mxu0 0.0
      %2966 = vmatpush1.xpose.msra.mxu0 0.0
      %2967 = vmatprep.subr.mxu0 0.0
      %2968 = vmatpush1.xpose.msra.mxu0 0.0
      %2969 = vmatprep.subr.mxu0 0.0
      %2970 = vmatpush1.xpose.msra.mxu0 0.0
      %2971 = vmatprep.subr.mxu0 0.0
      %2972 = vmatpush1.xpose.msra.mxu0 0.0
      %2973 = vmatprep.subr.mxu0 0.0
      %2974 = vmatpush1.xpose.msra.mxu0 0.0
      %2975 = vmatprep.subr.mxu0 0.0
      %2976 = vmatpush1.xpose.msra.mxu0 0.0
      %2977 = vmatprep.subr.mxu0 0.0
      %2978 = vmatpush1.xpose.msra.mxu0 0.0
      %2979 = vmatprep.subr.mxu0 0.0
      %2980 = vmatpush1.xpose.msra.mxu0 0.0
      %2981 = vmatprep.subr.mxu0 0.0
      %2982 = vmatpush1.xpose.msra.mxu0 0.0
      %2983 = vmatprep.subr.mxu0 0.0
      %2984 = vmatpush1.xpose.msra.mxu0 0.0
      %2985 = vmatprep.subr.mxu0 0.0
      %2986 = vmatpush1.xpose.msra.mxu0 0.0
      %2987 = vmatprep.subr.mxu0 0.0
      %2988 = vmatpush1.xpose.msra.mxu0 0.0
      %2989 = vmatprep.subr.mxu0 0.0
      %2990 = vmatpush1.xpose.msra.mxu0 0.0
      %2991 = vmatprep.subr.mxu0 0.0
      %2992 = vmatpush1.xpose.msra.mxu0 0.0
      %2993 = vmatprep.subr.mxu0 0.0
      %2994 = vmatpush1.xpose.msra.mxu0 0.0
      %2995 = vmatprep.subr.mxu0 0.0
      %2996 = vmatpush1.xpose.msra.mxu0 0.0
      %2997 = vmatprep.subr.mxu0 0.0
      %2998 = vmatpush1.xpose.msra.mxu0 0.0
      %2999 = vmatprep.subr.mxu0 0.0
      %3000 = vmatpush1.xpose.msra.mxu0 0.0
      %3001 = vmatprep.subr.mxu0 0.0
      %3002 = vmatpush1.xpose.msra.mxu0 0.0
      %3003 = vmatprep.subr.mxu0 0.0
      %3004 = vmatpush1.xpose.msra.mxu0 0.0
      %3005 = vmatprep.subr.mxu0 0.0
      %3006 = vmatpush1.xpose.msra.mxu0 0.0
      %3007 = vmatprep.subr.mxu0 0.0
      %3008 = vmatpush1.xpose.msra.mxu0 0.0
      %3009 = vmatprep.mubr.f32.mxu0 0.0
      %3010 = vmatmul.mubr.f32.gmra.mrb[0].mxu0 %v2937
      %v3011 = vpop.f32.mrb[0].mxu0
      %v3012 = vadd.f32 0.0, %v3011
      %v3013 = vpop.f32.mrb[0].mxu0
      %3014 = vmatprep.mubr.f32.mxu0 0.0
      %3015 = vmatmul.mubr.f32.gmra.mrb[0].mxu0 %v2939
      %v3016 = vpop.f32.mrb[0].mxu0
      %v3017 = vadd.f32 0.0, %v3016
      %v3018 = vpop.f32.mrb[0].mxu0
      %3019 = vdwg.mxu0
      %v3020 = vmul.f32 %v3012, 0.35355338
      %v3021 = vmul.f32 %v3017, 0.35355338
      %v3022 = vsel %vm1184, %v3020, -inf
      %3023 = vmax.xlane.f32.xlu0 %v3022
      %v3024 = vpop.xlane.xlu0 %3023
      %v3025 = vsel %vm1188, %v3021, -inf
      %3026 = vmax.xlane.f32.xlu0 %v3025
      %v3027 = vpop.xlane.xlu0 %3026
      %v3028 = vsub.f32 %v3020, %v3024
      %v3029 = vsub.f32 %v3021, %v3027
      %v3030 = vmul.f32 %v3028, 1.442695
      %v3031 = vpow.pop %v3030
      %v3032 = vmul.f32 %v3029, 1.442695
      %v3033 = vpow.pop %v3032
      %v3034 = vsel %vm1184, %v3031, 0.0
      %3035 = vadd.xlane.f32.xlu0 %v3034
      %v3036 = vpop.xlane.xlu0 %3035
      %v3037 = vsel %vm1188, %v3033, 0.0
      %3038 = vadd.xlane.f32.xlu0 %v3037
      %v3039 = vpop.xlane.xlu0 %3038
      %v3040 = vrcp.pop %v3036
      %v3041 = vmul.f32 %v3031, %v3040
      %v3042 = vrcp.pop %v3039
      %v3043 = vmul.f32 %v3033, %v3042
      %3044 = vrot.lane.b32.xlu0 %v2316, 40
      %v3045 = vpop.permute.xlu0 %3044
      %3046 = vrot.lane.b32.xlu0 %v2319, 40
      %v3047 = vpop.permute.xlu0 %3046
      %v3050 = vsel %vm1184, %v3041, 0
      %v3053 = vsel %vm1184, %v3043, 0
      %v3055 = vsel %vm924, %v3047, 0
      %3057 = vmatprep.subr.mxu0 0.0
      %3058 = vmatpush1.msra.mxu0 %v3045
      %3059 = vmatprep.subr.mxu0 0.0
      %3060 = vmatpush1.msra.mxu0 %v3055
      %3061 = vmatprep.subr.mxu0 0.0
      %3062 = vmatpush1.msra.mxu0 0.0
      %3063 = vmatprep.subr.mxu0 0.0
      %3064 = vmatpush1.msra.mxu0 0.0
      %3065 = vmatprep.subr.mxu0 0.0
      %3066 = vmatpush1.msra.mxu0 0.0
      %3067 = vmatprep.subr.mxu0 0.0
      %3068 = vmatpush1.msra.mxu0 0.0
      %3069 = vmatprep.subr.mxu0 0.0
      %3070 = vmatpush1.msra.mxu0 0.0
      %3071 = vmatprep.subr.mxu0 0.0
      %3072 = vmatpush1.msra.mxu0 0.0
      %3073 = vmatprep.subr.mxu0 0.0
      %3074 = vmatpush1.msra.mxu0 0.0
      %3075 = vmatprep.subr.mxu0 0.0
      %3076 = vmatpush1.msra.mxu0 0.0
      %3077 = vmatprep.subr.mxu0 0.0
      %3078 = vmatpush1.msra.mxu0 0.0
      %3079 = vmatprep.subr.mxu0 0.0
      %3080 = vmatpush1.msra.mxu0 0.0
      %3081 = vmatprep.subr.mxu0 0.0
      %3082 = vmatpush1.msra.mxu0 0.0
      %3083 = vmatprep.subr.mxu0 0.0
      %3084 = vmatpush1.msra.mxu0 0.0
      %3085 = vmatprep.subr.mxu0 0.0
      %3086 = vmatpush1.msra.mxu0 0.0
      %3087 = vmatprep.subr.mxu0 0.0
      %3088 = vmatpush1.msra.mxu0 0.0
      %3089 = vmatprep.subr.mxu0 0.0
      %3090 = vmatpush1.msra.mxu0 0.0
      %3091 = vmatprep.subr.mxu0 0.0
      %3092 = vmatpush1.msra.mxu0 0.0
      %3093 = vmatprep.subr.mxu0 0.0
      %3094 = vmatpush1.msra.mxu0 0.0
      %3095 = vmatprep.subr.mxu0 0.0
      %3096 = vmatpush1.msra.mxu0 0.0
      %3097 = vmatprep.subr.mxu0 0.0
      %3098 = vmatpush1.msra.mxu0 0.0
      %3099 = vmatprep.subr.mxu0 0.0
      %3100 = vmatpush1.msra.mxu0 0.0
      %3101 = vmatprep.subr.mxu0 0.0
      %3102 = vmatpush1.msra.mxu0 0.0
      %3103 = vmatprep.subr.mxu0 0.0
      %3104 = vmatpush1.msra.mxu0 0.0
      %3105 = vmatprep.subr.mxu0 0.0
      %3106 = vmatpush1.msra.mxu0 0.0
      %3107 = vmatprep.subr.mxu0 0.0
      %3108 = vmatpush1.msra.mxu0 0.0
      %3109 = vmatprep.subr.mxu0 0.0
      %3110 = vmatpush1.msra.mxu0 0.0
      %3111 = vmatprep.subr.mxu0 0.0
      %3112 = vmatpush1.msra.mxu0 0.0
      %3113 = vmatprep.subr.mxu0 0.0
      %3114 = vmatpush1.msra.mxu0 0.0
      %3115 = vmatprep.subr.mxu0 0.0
      %3116 = vmatpush1.msra.mxu0 0.0
      %3117 = vmatprep.subr.mxu0 0.0
      %3118 = vmatpush1.msra.mxu0 0.0
      %3119 = vmatprep.subr.mxu0 0.0
      %3120 = vmatpush1.msra.mxu0 0.0
      %3121 = vmatprep.mubr.f32.mxu0 0.0
      %3122 = vmatmul.mubr.f32.gmra.mrb[0].mxu0 %v3050
      %v3123 = vpop.f32.mrb[0].mxu0
      %v3124 = vadd.f32 0.0, %v3123
      %v3125 = vpop.f32.mrb[0].mxu0
      %3126 = vmatprep.mubr.f32.mxu0 0.0
      %3127 = vmatmul.mubr.f32.gmra.mrb[0].mxu0 %v3053
      %v3128 = vpop.f32.mrb[0].mxu0
      %v3129 = vadd.f32 0.0, %v3128
      %v3130 = vpop.f32.mrb[0].mxu0
      %3131 = vdwg.mxu0
      %3134 = vrot.lane.b32.xlu0 %v2718, 8
      %v3135 = vpop.permute.xlu0 %3134
      %3136 = vrot.lane.b32.xlu0 %v2723, 8
      %v3137 = vpop.permute.xlu0 %3136
      %3142 = vrot.lane.b32.xlu0 %v2921, 16
      %v3143 = vpop.permute.xlu0 %3142
      %3144 = vrot.lane.b32.xlu0 %v2926, 16
      %v3145 = vpop.permute.xlu0 %3144
      %3150 = vrot.lane.b32.xlu0 %v3124, 24
      %v3151 = vpop.permute.xlu0 %3150
      %3152 = vrot.lane.b32.xlu0 %v3129, 24
      %v3153 = vpop.permute.xlu0 %3152
      %v3156 = vsel %vm1098, %v2515, %v3135
      %v3157 = vsel %vm1098, %v2520, %v3137
      %v3158 = vsel %vm1931, %v3156, %v3143
      %v3159 = vsel %vm1931, %v3157, %v3145
      %v3160 = vsel %vm1934, %v3158, %v3151
      %v3161 = vsel %vm1934, %v3159, %v3153
      %v3162 = vpack.c.bf16 %v3161, %v3160
      %s3163 = scalar_lea.vmem %s12, 16
      %v3164 = vld [vmem:[%s3163] sm:$0xf]
      %v3165 = vld [vmem:[%s3163 + $0x4] sm:$0xf]
      %v3166 = vld [vmem:[%s3163 + $0x8] sm:$0xf]
      %v3167 = vld [vmem:[%s3163 + $0xc] sm:$0xf]
      %s3168 = scalar_lea.vmem %s13, 1
      %v3169 = vld [vmem:[%s3168] sm:$0x1]
      %v3171 = vlaneseq
      %v3172 = vshrl.u32 %v3171, 7
      %v3173 = vsub.s32 0, %v3172
      %v3174 = vrot.slane %v3169, %v3173
      %v3180 = vunpack.c.l.b16 %v3164
      %v3181 = vunpack.c.l.b16 %v3165
      %v3182 = vunpack.c.l.b16 %v3166
      %v3183 = vunpack.c.l.b16 %v3167
      %v3184 = vpack.c.b16 %v3181, %v3180
      %v3185 = vpack.c.b16 %v3183, %v3182
      %v3189 = vsel %vm979, %v3162, 0
      %3191 = vmatprep.subr.bf16.mxu0 0
      %3192 = vmatpush1.bf16.msra.mxu0 %v3184
      %3193 = vmatprep.subr.bf16.mxu0 0
      %3194 = vmatpush1.bf16.msra.mxu0 %v3185
      %3195 = vmatprep.subr.bf16.mxu0 0
      %3196 = vmatpush1.bf16.msra.mxu0 0
      %3197 = vmatprep.subr.bf16.mxu0 0
      %3198 = vmatpush1.bf16.msra.mxu0 0
      %3199 = vmatprep.subr.bf16.mxu0 0
      %3200 = vmatpush1.bf16.msra.mxu0 0
      %3201 = vmatprep.subr.bf16.mxu0 0
      %3202 = vmatpush1.bf16.msra.mxu0 0
      %3203 = vmatprep.subr.bf16.mxu0 0
      %3204 = vmatpush1.bf16.msra.mxu0 0
      %3205 = vmatprep.subr.bf16.mxu0 0
      %3206 = vmatpush1.bf16.msra.mxu0 0
      %3207 = vmatprep.subr.bf16.mxu0 0
      %3208 = vmatpush1.bf16.msra.mxu0 0
      %3209 = vmatprep.subr.bf16.mxu0 0
      %3210 = vmatpush1.bf16.msra.mxu0 0
      %3211 = vmatprep.subr.bf16.mxu0 0
      %3212 = vmatpush1.bf16.msra.mxu0 0
      %3213 = vmatprep.subr.bf16.mxu0 0
      %3214 = vmatpush1.bf16.msra.mxu0 0
      %3215 = vmatprep.subr.bf16.mxu0 0
      %3216 = vmatpush1.bf16.msra.mxu0 0
      %3217 = vmatprep.subr.bf16.mxu0 0
      %3218 = vmatpush1.bf16.msra.mxu0 0
      %3219 = vmatprep.subr.bf16.mxu0 0
      %3220 = vmatpush1.bf16.msra.mxu0 0
      %3221 = vmatprep.subr.bf16.mxu0 0
      %3222 = vmatpush1.bf16.msra.mxu0 0
      %3223 = vmatprep.mubr.bf16.mxu0 0
      %3224 = vmatmul.mubr.bf16.gmra.mrb[0].mxu0 %v3189
      %v3225 = vpop.f32.mrb[0].mxu0
      %v3226 = vadd.f32 %v3174, %v3225
      %v3227 = vpop.f32.mrb[0].mxu0
      %v3228 = vpop.f32.mrb[0].mxu0
      %v3229 = vadd.f32 %v3174, %v3228
      %v3230 = vpop.f32.mrb[0].mxu0
      %3231 = vdwg.mxu0
      %v3232 = vadd.f32 %v2250, %v3226
      %v3233 = vadd.f32 %v2251, %v3229
      %s3234 = scalar_lea.vmem %s14, 1
      %v3235 = vld [vmem:[%s3234] sm:$0x1]
      %s3236 = scalar_lea.vmem %s15, 1
      %v3237 = vld [vmem:[%s3236] sm:$0x1]
      %v3238 = vsel %vm979, %v3232, 0.0
      %3239 = vadd.xlane.f32.xlu0 %v3238
      %v3240 = vpop.xlane.xlu0 %3239
      %v3241 = vsel %vm983, %v3233, 0.0
      %3242 = vadd.xlane.f32.xlu0 %v3241
      %v3243 = vpop.xlane.xlu0 %3242
      %v3244 = vmul.f32 %v3240, %v987
      %v3245 = vmul.f32 %v3243, %v987
      %v3246 = vsub.f32 %v3232, %v3244
      %v3247 = vsub.f32 %v3233, %v3245
      %v3248 = vmul.f32 %v3246, %v3246
      %v3249 = vmul.f32 %v3247, %v3247
      %v3250 = vsel %vm979, %v3248, 0.0
      %3251 = vadd.xlane.f32.xlu0 %v3250
      %v3252 = vpop.xlane.xlu0 %3251
      %v3253 = vsel %vm983, %v3249, 0.0
      %3254 = vadd.xlane.f32.xlu0 %v3253
      %v3255 = vpop.xlane.xlu0 %3254
      %v3256 = vmul.f32 %v3252, %v987
      %v3257 = vmul.f32 %v3255, %v987
      %v3258 = vadd.f32 %v3256, 1e-05
      %v3259 = vadd.f32 %v3257, 1e-05
      %v3260 = vrsqrt.pop %v3258
      %v3261 = vrsqrt.pop %v3259
      %v3262 = vmul.f32 %v3246, %v3260
      %v3263 = vmul.f32 %v3247, %v3261
      %v3265 = vlaneseq
      %v3266 = vshrl.u32 %v3265, 7
      %v3267 = vsub.s32 0, %v3266
      %v3268 = vrot.slane %v3235, %v3267
      %v3270 = vmul.f32 %v3262, %v3268
      %v3271 = vmul.f32 %v3263, %v3268
      %v3273 = vlaneseq
      %v3274 = vshrl.u32 %v3273, 7
      %v3275 = vsub.s32 0, %v3274
      %v3276 = vrot.slane %v3237, %v3275
      %v3278 = vadd.f32 %v3270, %v3276
      %v3279 = vadd.f32 %v3271, %v3276
      %v3280 = vpack.c.bf16 %v3279, %v3278
      %s3281 = scalar_lea.vmem %s16, 16
      %v3282 = vld [vmem:[%s3281] sm:$0xf]
      %v3283 = vld [vmem:[%s3281 + $0x4] sm:$0xf]
      %v3284 = vld [vmem:[%s3281 + $0x8] sm:$0xf]
      %v3285 = vld [vmem:[%s3281 + $0xc] sm:$0xf]
      %s3286 = scalar_lea.vmem %s17, 1
      %v3287 = vld [vmem:[%s3286] sm:$0x1]
      %v3289 = vlaneseq
      %v3290 = vshrl.u32 %v3289, 7
      %v3291 = vsub.s32 0, %v3290
      %v3292 = vrot.slane %v3287, %v3291
      %v3298 = vunpack.c.l.b16 %v3282
      %v3299 = vunpack.c.l.b16 %v3283
      %v3300 = vunpack.c.l.b16 %v3284
      %v3301 = vunpack.c.l.b16 %v3285
      %v3302 = vpack.c.b16 %v3299, %v3298
      %v3303 = vpack.c.b16 %v3301, %v3300
      %v3307 = vsel %vm979, %v3280, 0
      %3309 = vmatprep.subr.bf16.mxu0 0
      %3310 = vmatpush1.bf16.msra.mxu0 %v3302
      %3311 = vmatprep.subr.bf16.mxu0 0
      %3312 = vmatpush1.bf16.msra.mxu0 %v3303
      %3313 = vmatprep.subr.bf16.mxu0 0
      %3314 = vmatpush1.bf16.msra.mxu0 0
      %3315 = vmatprep.subr.bf16.mxu0 0
      %3316 = vmatpush1.bf16.msra.mxu0 0
      %3317 = vmatprep.subr.bf16.mxu0 0
      %3318 = vmatpush1.bf16.msra.mxu0 0
      %3319 = vmatprep.subr.bf16.mxu0 0
      %3320 = vmatpush1.bf16.msra.mxu0 0
      %3321 = vmatprep.subr.bf16.mxu0 0
      %3322 = vmatpush1.bf16.msra.mxu0 0
      %3323 = vmatprep.subr.bf16.mxu0 0
      %3324 = vmatpush1.bf16.msra.mxu0 0
      %3325 = vmatprep.subr.bf16.mxu0 0
      %3326 = vmatpush1.bf16.msra.mxu0 0
      %3327 = vmatprep.subr.bf16.mxu0 0
      %3328 = vmatpush1.bf16.msra.mxu0 0
      %3329 = vmatprep.subr.bf16.mxu0 0
      %3330 = vmatpush1.bf16.msra.mxu0 0
      %3331 = vmatprep.subr.bf16.mxu0 0
      %3332 = vmatpush1.bf16.msra.mxu0 0
      %3333 = vmatprep.subr.bf16.mxu0 0
      %3334 = vmatpush1.bf16.msra.mxu0 0
      %3335 = vmatprep.subr.bf16.mxu0 0
      %3336 = vmatpush1.bf16.msra.mxu0 0
      %3337 = vmatprep.subr.bf16.mxu0 0
      %3338 = vmatpush1.bf16.msra.mxu0 0
      %3339 = vmatprep.subr.bf16.mxu0 0
      %3340 = vmatpush1.bf16.msra.mxu0 0
      %3341 = vmatprep.mubr.bf16.mxu0 0
      %3342 = vmatmul.mubr.bf16.gmra.mrb[0].mxu0 %v3307
      %v3343 = vpop.f32.mrb[0].mxu0
      %v3344 = vadd.f32 %v3292, %v3343
      %v3345 = vpop.f32.mrb[0].mxu0
      %v3346 = vpop.f32.mrb[0].mxu0
      %v3347 = vadd.f32 %v3292, %v3346
      %v3348 = vpop.f32.mrb[0].mxu0
      %3349 = vdwg.mxu0
      %v3350 = vmax.f32 %v3344, 0.0
      %v3351 = vmax.f32 %v3347, 0.0
      %v3352 = vpack.c.bf16 %v3351, %v3350
      %s3353 = scalar_lea.vmem %s18, 32
      %v3354 = vld [vmem:[%s3353] sm:$0xf]
      %v3355 = vld [vmem:[%s3353 + $0x4] sm:$0xf]
      %v3356 = vld [vmem:[%s3353 + $0x8] sm:$0xf]
      %v3357 = vld [vmem:[%s3353 + $0xc] sm:$0xf]
      %v3358 = vld [vmem:[%s3353 + $0x10] sm:$0xf]
      %v3359 = vld [vmem:[%s3353 + $0x14] sm:$0xf]
      %v3360 = vld [vmem:[%s3353 + $0x18] sm:$0xf]
      %v3361 = vld [vmem:[%s3353 + $0x1c] sm:$0xf]
      %s3362 = scalar_lea.vmem %s19, 1
      %v3363 = vld [vmem:[%s3362] sm:$0x1]
      %v3365 = vlaneseq
      %v3366 = vshrl.u32 %v3365, 7
      %v3367 = vsub.s32 0, %v3366
      %v3368 = vrot.slane %v3363, %v3367
      %v3378 = vunpack.c.l.b16 %v3354
      %v3379 = vunpack.c.l.b16 %v3355
      %v3380 = vunpack.c.l.b16 %v3356
      %v3381 = vunpack.c.l.b16 %v3357
      %v3382 = vunpack.c.l.b16 %v3358
      %v3383 = vunpack.c.l.b16 %v3359
      %v3384 = vunpack.c.l.b16 %v3360
      %v3385 = vunpack.c.l.b16 %v3361
      %v3386 = vpack.c.b16 %v3379, %v3378
      %v3387 = vpack.c.b16 %v3381, %v3380
      %v3388 = vpack.c.b16 %v3383, %v3382
      %v3389 = vpack.c.b16 %v3385, %v3384
      %v3395 = vsel %vm2161, %v3352, 0
      %3397 = vmatprep.subr.bf16.mxu0 0
      %3398 = vmatpush1.bf16.msra.mxu0 %v3386
      %3399 = vmatprep.subr.bf16.mxu0 0
      %3400 = vmatpush1.bf16.msra.mxu0 %v3387
      %3401 = vmatprep.subr.bf16.mxu0 0
      %3402 = vmatpush1.bf16.msra.mxu0 %v3388
      %3403 = vmatprep.subr.bf16.mxu0 0
      %3404 = vmatpush1.bf16.msra.mxu0 %v3389
      %3405 = vmatprep.subr.bf16.mxu0 0
      %3406 = vmatpush1.bf16.msra.mxu0 0
      %3407 = vmatprep.subr.bf16.mxu0 0
      %3408 = vmatpush1.bf16.msra.mxu0 0
      %3409 = vmatprep.subr.bf16.mxu0 0
      %3410 = vmatpush1.bf16.msra.mxu0 0
      %3411 = vmatprep.subr.bf16.mxu0 0
      %3412 = vmatpush1.bf16.msra.mxu0 0
      %3413 = vmatprep.subr.bf16.mxu0 0
      %3414 = vmatpush1.bf16.msra.mxu0 0
      %3415 = vmatprep.subr.bf16.mxu0 0
      %3416 = vmatpush1.bf16.msra.mxu0 0
      %3417 = vmatprep.subr.bf16.mxu0 0
      %3418 = vmatpush1.bf16.msra.mxu0 0
      %3419 = vmatprep.subr.bf16.mxu0 0
      %3420 = vmatpush1.bf16.msra.mxu0 0
      %3421 = vmatprep.subr.bf16.mxu0 0
      %3422 = vmatpush1.bf16.msra.mxu0 0
      %3423 = vmatprep.subr.bf16.mxu0 0
      %3424 = vmatpush1.bf16.msra.mxu0 0
      %3425 = vmatprep.subr.bf16.mxu0 0
      %3426 = vmatpush1.bf16.msra.mxu0 0
      %3427 = vmatprep.subr.bf16.mxu0 0
      %3428 = vmatpush1.bf16.msra.mxu0 0
      %3429 = vmatprep.mubr.bf16.mxu0 0
      %3430 = vmatmul.mubr.bf16.gmra.mrb[0].mxu0 %v3395
      %v3431 = vpop.f32.mrb[0].mxu0
      %v3432 = vadd.f32 %v3368, %v3431
      %v3433 = vpop.f32.mrb[0].mxu0
      %v3434 = vpop.f32.mrb[0].mxu0
      %v3435 = vadd.f32 %v3368, %v3434
      %v3436 = vpop.f32.mrb[0].mxu0
      %3437 = vdwg.mxu0
      %v3438 = vadd.f32 %v3278, %v3432
      %v3439 = vadd.f32 %v3279, %v3435
      %s3440 = scalar_lea.vmem %s20, 1
      %v3441 = vld [vmem:[%s3440] sm:$0x1]
      %s3442 = scalar_lea.vmem %s21, 1
      %v3443 = vld [vmem:[%s3442] sm:$0x1]
      %v3444 = vsel %vm979, %v3438, 0.0
      %3445 = vadd.xlane.f32.xlu0 %v3444
      %v3446 = vpop.xlane.xlu0 %3445
      %v3447 = vsel %vm983, %v3439, 0.0
      %3448 = vadd.xlane.f32.xlu0 %v3447
      %v3449 = vpop.xlane.xlu0 %3448
      %v3450 = vmul.f32 %v3446, %v987
      %v3451 = vmul.f32 %v3449, %v987
      %v3452 = vsub.f32 %v3438, %v3450
      %v3453 = vsub.f32 %v3439, %v3451
      %v3454 = vmul.f32 %v3452, %v3452
      %v3455 = vmul.f32 %v3453, %v3453
      %v3456 = vsel %vm979, %v3454, 0.0
      %3457 = vadd.xlane.f32.xlu0 %v3456
      %v3458 = vpop.xlane.xlu0 %3457
      %v3459 = vsel %vm983, %v3455, 0.0
      %3460 = vadd.xlane.f32.xlu0 %v3459
      %v3461 = vpop.xlane.xlu0 %3460
      %v3462 = vmul.f32 %v3458, %v987
      %v3463 = vmul.f32 %v3461, %v987
      %v3464 = vadd.f32 %v3462, 1e-05
      %v3465 = vadd.f32 %v3463, 1e-05
      %v3466 = vrsqrt.pop %v3464
      %v3467 = vrsqrt.pop %v3465
      %v3468 = vmul.f32 %v3452, %v3466
      %v3469 = vmul.f32 %v3453, %v3467
      %v3471 = vlaneseq
      %v3472 = vshrl.u32 %v3471, 7
      %v3473 = vsub.s32 0, %v3472
      %v3474 = vrot.slane %v3441, %v3473
      %v3476 = vmul.f32 %v3468, %v3474
      %v3477 = vmul.f32 %v3469, %v3474
      %v3479 = vlaneseq
      %v3480 = vshrl.u32 %v3479, 7
      %v3481 = vsub.s32 0, %v3480
      %v3482 = vrot.slane %v3443, %v3481
      %v3484 = vadd.f32 %v3476, %v3482
      %v3485 = vadd.f32 %v3477, %v3482
      %v3488 = vrot.slane %v2250, 7
      %v3489 = vrot.slane %v2251, 7
      %v3490 = vsel %vm924, %v3488, %v3489
      %v3495 = vrot.slane %v3484, 6
      %v3496 = vrot.slane %v3485, 6
      %v3497 = vsel %vm867, %v3495, %v3496
      %v3500 = vsel %vm924, %v1023, %v3488
      %v3501 = vsel %vm867, %v3490, %v3495
      %v3502 = vpack.c.bf16 %v3500, %v1022
      %v3503 = vpack.c.bf16 %v3497, %v3501
      %v3504 = vld [vmem:[%s22] sm:$0xf]
      %v3505 = vld [vmem:[%s22 + $0x4] sm:$0x3]
      %v3506 = vld [vmem:[%s23] sm:$0xff]
      %v3507 = vld [vmem:[%s23 + $0x8] sm:$0xf]
      %3509 = vset.pattern.permute.xlu0 0
      %3510 = vperm.xlu0 %3509, %v3506
      %v3511 = vpop.permute.xlu0 %3510
      %3514 = vset.pattern.permute.xlu0 0
      %3515 = vperm.xlu0 %3514, %v3507
      %v3516 = vpop.permute.xlu0 %3515
      %v3520 = vunpack.c.l.b16 %v3504
      %v3521 = vunpack.c.l.b16 %v3505
      %v3522 = vpack.c.b16 %v3521, %v3520
      %vm3523 = vcmask 220160
      %v3525 = vsel %vm3523, %v3522, 0
      %vm3527 = vcmask 1044480
      %vm3528 = vcmask 1045504
      %v3529 = vsel %vm3527, 4294967295, 65535
      %v3530 = vsel %vm3528, %v3529, 0
      %v3532 = vand.u32 %v3503, %v3530
      %3534 = vmatprep.subr.bf16.mxu0 0
      %3535 = vmatpush1.bf16.msra.mxu0 %v3502
      %3536 = vmatprep.subr.bf16.mxu0 0
      %3537 = vmatpush1.bf16.msra.mxu0 %v3532
      %3538 = vmatprep.subr.bf16.mxu0 0
      %3539 = vmatpush1.bf16.msra.mxu0 0
      %3540 = vmatprep.subr.bf16.mxu0 0
      %3541 = vmatpush1.bf16.msra.mxu0 0
      %3542 = vmatprep.subr.bf16.mxu0 0
      %3543 = vmatpush1.bf16.msra.mxu0 0
      %3544 = vmatprep.subr.bf16.mxu0 0
      %3545 = vmatpush1.bf16.msra.mxu0 0
      %3546 = vmatprep.subr.bf16.mxu0 0
      %3547 = vmatpush1.bf16.msra.mxu0 0
      %3548 = vmatprep.subr.bf16.mxu0 0
      %3549 = vmatpush1.bf16.msra.mxu0 0
      %3550 = vmatprep.subr.bf16.mxu0 0
      %3551 = vmatpush1.bf16.msra.mxu0 0
      %3552 = vmatprep.subr.bf16.mxu0 0
      %3553 = vmatpush1.bf16.msra.mxu0 0
      %3554 = vmatprep.subr.bf16.mxu0 0
      %3555 = vmatpush1.bf16.msra.mxu0 0
      %3556 = vmatprep.subr.bf16.mxu0 0
      %3557 = vmatpush1.bf16.msra.mxu0 0
      %3558 = vmatprep.subr.bf16.mxu0 0
      %3559 = vmatpush1.bf16.msra.mxu0 0
      %3560 = vmatprep.subr.bf16.mxu0 0
      %3561 = vmatpush1.bf16.msra.mxu0 0
      %3562 = vmatprep.subr.bf16.mxu0 0
      %3563 = vmatpush1.bf16.msra.mxu0 0
      %3564 = vmatprep.subr.bf16.mxu0 0
      %3565 = vmatpush1.bf16.msra.mxu0 0
      %3566 = vmatprep.mubr.bf16.mxu0 0
      %3567 = vmatmul.mubr.bf16.gmra.mrb[0].mxu0 %v3525
      %v3568 = vpop.f32.mrb[0].mxu0
      %v3569 = vadd.f32 %v3511, %v3568
      %v3570 = vpop.f32.mrb[0].mxu0
      %v3571 = vpop.f32.mrb[0].mxu0
      %v3572 = vadd.f32 %v3516, %v3571
      %v3573 = vpop.f32.mrb[0].mxu0
      %3574 = vdwg.mxu0
      %v3575 = vpack.c.bf16 %v3572, %v3569
      %v3576 = vld [vmem:[%s24] sm:$0xf]
      %v3577 = vld [vmem:[%s24 + $0x4] sm:$0xf]
      %v3578 = vld [vmem:[%s24 + $0x8] sm:$0xf]
      %v3579 = vld [vmem:[%s24 + $0xc] sm:$0xf]
      %v3580 = vld [vmem:[#allocation2] sm:$0x1]
      %v3582 = vlaneseq
      %v3583 = vshrl.u32 %v3582, 7
      %v3584 = vsub.s32 0, %v3583
      %v3585 = vrot.slane %v3580, %v3584
      %v3591 = vunpack.c.l.b16 %v3576
      %v3592 = vunpack.c.l.b16 %v3577
      %v3593 = vunpack.c.l.b16 %v3578
      %v3594 = vunpack.c.l.b16 %v3579
      %v3595 = vpack.c.b16 %v3592, %v3591
      %v3596 = vpack.c.b16 %v3594, %v3593
      %v3600 = vsel %vm979, %v3575, 0
      %3602 = vmatprep.subr.bf16.mxu0 0
      %3603 = vmatpush1.bf16.msra.mxu0 %v3595
      %3604 = vmatprep.subr.bf16.mxu0 0
      %3605 = vmatpush1.bf16.msra.mxu0 %v3596
      %3606 = vmatprep.subr.bf16.mxu0 0
      %3607 = vmatpush1.bf16.msra.mxu0 0
      %3608 = vmatprep.subr.bf16.mxu0 0
      %3609 = vmatpush1.bf16.msra.mxu0 0
      %3610 = vmatprep.subr.bf16.mxu0 0
      %3611 = vmatpush1.bf16.msra.mxu0 0
      %3612 = vmatprep.subr.bf16.mxu0 0
      %3613 = vmatpush1.bf16.msra.mxu0 0
      %3614 = vmatprep.subr.bf16.mxu0 0
      %3615 = vmatpush1.bf16.msra.mxu0 0
      %3616 = vmatprep.subr.bf16.mxu0 0
      %3617 = vmatpush1.bf16.msra.mxu0 0
      %3618 = vmatprep.subr.bf16.mxu0 0
      %3619 = vmatpush1.bf16.msra.mxu0 0
      %3620 = vmatprep.subr.bf16.mxu0 0
      %3621 = vmatpush1.bf16.msra.mxu0 0
      %3622 = vmatprep.subr.bf16.mxu0 0
      %3623 = vmatpush1.bf16.msra.mxu0 0
      %3624 = vmatprep.subr.bf16.mxu0 0
      %3625 = vmatpush1.bf16.msra.mxu0 0
      %3626 = vmatprep.subr.bf16.mxu0 0
      %3627 = vmatpush1.bf16.msra.mxu0 0
      %3628 = vmatprep.subr.bf16.mxu0 0
      %3629 = vmatpush1.bf16.msra.mxu0 0
      %3630 = vmatprep.subr.bf16.mxu0 0
      %3631 = vmatpush1.bf16.msra.mxu0 0
      %3632 = vmatprep.subr.bf16.mxu0 0
      %3633 = vmatpush1.bf16.msra.mxu0 0
      %3634 = vmatprep.mubr.bf16.mxu0 0
      %3635 = vmatmul.mubr.bf16.gmra.mrb[0].mxu0 %v3600
      %v3636 = vpop.f32.mrb[0].mxu0
      %v3637 = vadd.f32 %v3585, %v3636
      %v3638 = vpop.f32.mrb[0].mxu0
      %v3639 = vpop.f32.mrb[0].mxu0
      %v3640 = vadd.f32 %v3585, %v3639
      %v3641 = vpop.f32.mrb[0].mxu0
      %3642 = vdwg.mxu0
      %v3643 = vld [vmem:[%s842] sm:$0x1]
      %v3645 = vlaneseq
      %v3646 = vshrl.u32 %v3645, 7
      %v3647 = vsub.s32 0, %v3646
      %v3648 = vrot.slane %v3643, %v3647
      %v3650 = vadd.f32 %v3637, %v3648
      %v3651 = vadd.f32 %v3640, %v3648
      %vm3652 = vcmask 7168
      %3653 = vst.msk [vmem:[%s847] sm:$0xff] %vm3652, %v3650
      %vm3654 = vcmask 3072
      %3655 = vst.msk [vmem:[%s847 + $0x8] sm:$0xf] %vm3654, %v3651
      %p3656 = scmp.lt.s32.totalorder %s39, 7
      %s3657 = scalar_select %p3656, %s39, 7
      %s3658 = smul.addr %s3657, 2
      %s3659 = smul.addr %s3658, 8
      %s3660 = scalar_lea.vmem %s26, %s3659
      // Predicated region
      $region125: #{_lambda_.1} parent=123 // pred_check
        %p3661 = pneg %p623
      $region126: #{_lambda_.1} parent=123 // pred_check_branch
        %3663 = sbr.rel (%p3661) target = $region128
      $region127: #{_lambda_.1} parent=123 // pred_region
        _
      $region128: #{_lambda_.1} parent=123 // pred_fallthru
        _
    $region124: #{_lambda_.1} parent=5 // pred_fallthru
      _
    %p3664 = scmp.le.s32.totalorder 2, %s34
    // Predicated region
    $region129: #{_lambda_.1} parent=5 // pred_check
      %p3665 = pneg %p3664
    $region130: #{_lambda_.1} parent=5 // pred_check_branch
      %3667 = sbr.rel (%p3665) target = $region132
    $region131: #{_lambda_.1} parent=5 // pred_region
      %s3668 = ssub.s32 %s34, 2
      // Predicated region
      $region133: #{_lambda_.1} parent=131 // pred_check
        %p3669 = pneg %p629
      $region134: #{_lambda_.1} parent=131 // pred_check_branch
        %3671 = sbr.rel (%p3669) target = $region136
      $region135: #{_lambda_.1} parent=131 // pred_region
        %p3672 = scmp.lt.s32.totalorder %s40, 7
        %s3673 = scalar_select %p3672, %s40, 7
        %s3674 = smul.addr %s3673, 2
        %s3675 = smul.addr %s3674, 8
        %s3676 = scalar_lea.vmem %s26, %s3675
      $region136: #{_lambda_.1} parent=131 // pred_fallthru
        _
    $region132: #{_lambda_.1} parent=5 // pred_fallthru
      _
  $region6: #{_lambda_.1} parent=0 // loop_footer
    %s38 = sadd.s32 1, %s34
  $region7: #{_lambda_.1} parent=0 // loop_footer_branch
    %33 = sbr.rel target = $region3
  $region8: #{_lambda_.1} parent=0 // loop_exit
    _

</llo_original>
